<compile_context>
chip_gen: v5e
topology: v5e:2x2
jax: 0.10.0
libtpu: 0.0.40
codegen_flags: <defaults>
</compile_context>

<pallas_src>
import numpy as np

import jax
import jax.numpy as jnp
from jax.experimental import pallas as pl
from jax.experimental.pallas import tpu as pltpu


H = W = 16          # FPAv2 hard-codes scale_factor=16 for the global branch.
HW = H * W
BN_EPS = 1e-5


def _r8(n):
    return ((n + 7) // 8) * 8


def _r128(n):
    return ((n + 127) // 128) * 128


# ----------------------------------------------------------------------------- #
# Host-side constant spatial operators (numpy, built at trace time)
# ----------------------------------------------------------------------------- #
def _bilinear_matrix(n_in, n_out):
    # align_corners=True 1-D interpolation matrix, shape (n_out, n_in).
    if n_in == 1:
        return np.ones((n_out, 1), np.float32)
    m = np.zeros((n_out, n_in), np.float32)
    for o in range(n_out):
        src = o * (n_in - 1) / (n_out - 1)
        i0 = int(np.floor(src))
        f = src - i0
        i1 = min(i0 + 1, n_in - 1)
        m[o, i0] += 1.0 - f
        m[o, i1] += f
    return m


def _subsample_op(n):
    """(HW, HW) right-multiply operator: stride-2 subsample of an n x n map packed
    row-major in lanes [0, n*n) -> (n/2 x n/2) map packed in lanes [0, n*n/4)."""
    no = n // 2
    op = np.zeros((HW, HW), np.float32)
    for oy in range(no):
        for ox in range(no):
            op[(2 * oy) * n + 2 * ox, oy * no + ox] = 1.0
    return op


def _upsample_op(n):
    """(HW, HW) right-multiply operator: align_corners=True bilinear 2x upsample
    of an n x n packed map -> 2n x 2n packed map (Kronecker of 1-D matrices)."""
    u = _bilinear_matrix(n, 2 * n)
    k = np.kron(u, u)                                  # (4n^2, n^2)
    op = np.zeros((HW, HW), np.float32)
    op[:n * n, :4 * n * n] = k.T
    return op


# ----------------------------------------------------------------------------- #
# Parameter prep (inference-mode BN folding + packing)
# ----------------------------------------------------------------------------- #
def _fold_bn(bn):
    gamma, beta, mean, var = bn
    scale = gamma / jnp.sqrt(var + BN_EPS)
    return scale, beta - mean * scale


def _pack_conv(w, scale, cp, r):
    # torch conv weight (Cout, Cin, k, k) -> (r, k*k*cp), tap-major then channel,
    # BN scale folded in, zero-padded channels.
    co, ci, k, _ = w.shape
    wt = jnp.transpose(w, (0, 2, 3, 1)) * scale[:, None, None, None]  # (co,k,k,ci)
    wt = wt.reshape(co, k * k, ci)
    wt = jnp.pad(wt, ((0, r - co), (0, 0), (0, cp - ci)))
    return wt.reshape(r, k * k * cp)


def _pack_mat(w, cp, r):
    co, ci = w.shape
    return jnp.pad(w, ((0, r - co), (0, cp - ci)))


def _pack_col(b, r):
    return jnp.pad(b.reshape(-1, 1), ((0, r - b.shape[0]), (0, 0)))


# ----------------------------------------------------------------------------- #
# Kernel
# ----------------------------------------------------------------------------- #
def _make_kernel(cp, coutp, offs):
    (off_w21, off_w31, off_w22, off_w32,
     off_wc1, off_wg, off_b21, off_b31, off_b22, off_b32, off_bc1) = offs

    def elu(y):
        # exp(y)-1 (not expm1): see header note.
        return jnp.where(y > 0.0, y, jnp.exp(jnp.minimum(y, 0.0)) - 1.0)

    def kernel(x_ref, ops_ref, w_ref, out_ref, patch_ref):
        x = x_ref[0]                                             # (cp, HW) f32

        def conv(src, k, h, w_sp, w_off):
            """'same' k x k stride-1 conv over an (h, w_sp) map packed row-major
            in lanes [0, h*w_sp).  Patches staged in VMEM scratch via lane rolls
            + boundary masks, then ONE MXU matmul (r, k*k*cp)@(k*k*cp, HW).
            Lanes >= h*w_sp of the result are garbage and are masked/ignored by
            every downstream consumer."""
            pad = k // 2
            kk = k * k
            lane = jax.lax.broadcasted_iota(jnp.int32, (cp, HW), 1)
            xx = lane & (w_sp - 1)                     # column within packed row
            yy = lane >> (w_sp.bit_length() - 1)       # packed row index
            xm = [(xx >= -dx) & (xx < w_sp - dx) for dx in range(-pad, pad + 1)]
            ym = [(yy >= -dy) & (yy < h - dy) for dy in range(-pad, pad + 1)]
            for ky in range(k):
                for kx in range(k):
                    s = (ky - pad) * w_sp + (kx - pad)
                    shifted = src if s == 0 else jnp.roll(src, -s, axis=1)
                    t = ky * k + kx
                    patch_ref[t * cp:(t + 1) * cp, :] = jnp.where(
                        ym[ky] & xm[kx], shifted, 0.0)
            return jnp.dot(w_ref[:, w_off:w_off + kk * cp],
                           patch_ref[0:kk * cp, :],
                           preferred_element_type=jnp.float32)    # (r, HW)

        # ---- pyramid branch --------------------------------------------------
        # down2_1: 5x5 stride-2 (Cin->Cin) + BN + ELU.  Stride-2 = stride-1 conv
        # followed by a lane-dense 0/1 subsample matmul (16x16 -> packed 8x8).
        c = conv(x, 5, 16, 16, off_w21)
        c = jnp.dot(c, ops_ref[0:HW, :], preferred_element_type=jnp.float32)
        d2a = elu(c[:cp] + w_ref[:cp, off_b21:off_b21 + 1])       # 8x8 packed

        # down3_1: 3x3 stride-2 (Cin->Cin) + BN + ELU (8x8 -> packed 4x4).
        c = conv(d2a, 3, 8, 8, off_w31)
        c = jnp.dot(c, ops_ref[HW:2 * HW, :], preferred_element_type=jnp.float32)
        d3a = elu(c[:cp] + w_ref[:cp, off_b31:off_b31 + 1])       # 4x4 packed

        # down2_2: 5x5 stride-1 (Cin->Cout) + BN + ELU.
        c = conv(d2a, 5, 8, 8, off_w22)
        d2 = elu(c[:coutp] + w_ref[:coutp, off_b22:off_b22 + 1])  # 8x8 packed

        # down3_2: 3x3 stride-1 (Cin->Cout) + BN + ELU.
        c = conv(d3a, 3, 4, 4, off_w32)
        d3 = elu(c[:coutp] + w_ref[:coutp, off_b32:off_b32 + 1])  # 4x4 packed

        # bilinear 4->8 upsample (align_corners=True) + merge, then 8->16.
        d2 = d2 + jnp.dot(d3, ops_ref[2 * HW:3 * HW, :],
                          preferred_element_type=jnp.float32)
        d2 = jnp.dot(d2, ops_ref[3 * HW:4 * HW, :],
                     preferred_element_type=jnp.float32)          # (coutp, HW)

        # ---- conv1 branch: 1x1 conv + BN + ELU (lane-dense) --------------------
        xc = elu(jnp.dot(w_ref[:coutp, off_wc1:off_wc1 + cp], x,
                         preferred_element_type=jnp.float32)
                 + w_ref[:coutp, off_bc1:off_bc1 + 1])            # (coutp, HW)

        # ---- global branch: avg-pool as an MXU dot, 1x1 conv, broadcast --------
        pooled = jnp.dot(x, jnp.full((HW, 1), 1.0 / HW, jnp.float32),
                         preferred_element_type=jnp.float32)      # (cp, 1)
        x_glob = jnp.dot(w_ref[:coutp, off_wg:off_wg + cp], pooled,
                         preferred_element_type=jnp.float32)      # (coutp, 1)

        # ---- fused combine: conv1(x) * d2 + x_glob ------------------------------
        res = xc * d2 + x_glob
        out_ref[0] = res[:out_ref.shape[1], :].astype(out_ref.dtype)

    return kernel


# ----------------------------------------------------------------------------- #
# Full FPAv2 forward: one pallas_call
# ----------------------------------------------------------------------------- #
def fpav2_forward(x_nchw, params):
    B, Cin, Hh, Ww = x_nchw.shape
    assert (Hh, Ww) == (H, W), "FPAv2 global branch hard-codes 16x16 input"
    Cout = params["w_glob"].shape[0]
    Cp, CoutP = _r8(Cin), _r8(Cout)
    R = max(Cp, CoutP)

    # Fold eval-mode BN into the conv weights / biases.
    s21, b21 = _fold_bn(params["bn_d21"])
    s31, b31 = _fold_bn(params["bn_d31"])
    s22, b22 = _fold_bn(params["bn_d22"])
    s32, b32 = _fold_bn(params["bn_d32"])
    sc1, bc1 = _fold_bn(params["bn_c1"])

    w21 = _pack_conv(params["w_d21"], s21, Cp, R)      # (R, 25*Cp)
    w31 = _pack_conv(params["w_d31"], s31, Cp, R)      # (R,  9*Cp)
    w22 = _pack_conv(params["w_d22"], s22, Cp, R)      # (R, 25*Cp)
    w32 = _pack_conv(params["w_d32"], s32, Cp, R)      # (R,  9*Cp)
    wc1 = _pack_mat(params["w_c1"][:, :, 0, 0] * sc1[:, None], Cp, R)
    wg = _pack_mat(params["w_glob"][:, :, 0, 0], Cp, R)

    # Column layout of the single packed weight operand (128-aligned blocks).
    off_w21 = 0
    off_w31 = _r128(25 * Cp)
    off_w22 = off_w31 + _r128(9 * Cp)
    off_w32 = off_w22 + _r128(25 * Cp)
    off_small = off_w32 + _r128(9 * Cp)
    off_wc1 = off_small
    off_wg = off_wc1 + Cp
    off_b21 = off_wg + Cp
    off_b31, off_b22, off_b32, off_bc1 = (off_b21 + 1, off_b21 + 2,
                                          off_b21 + 3, off_b21 + 4)
    ncol = _r128(off_bc1 + 1)

    def padcols(a, width):
        return jnp.pad(a, ((0, 0), (0, width - a.shape[1])))

    small = jnp.concatenate(
        [wc1, wg, _pack_col(b21, R), _pack_col(b31, R), _pack_col(b22, R),
         _pack_col(b32, R), _pack_col(bc1, R)], axis=1)
    wpack = jnp.concatenate([
        padcols(w21, off_w31 - off_w21),
        padcols(w31, off_w22 - off_w31),
        padcols(w22, off_w32 - off_w22),
        padcols(w32, off_small - off_w32),
        padcols(small, ncol - off_small),
    ], axis=1)                                          # (R, ncol)

    # Packed spatial operators: [sub 16->8 | sub 8->4 | up 4->8 | up 8->16].
    ops = jnp.asarray(np.concatenate(
        [_subsample_op(16), _subsample_op(8), _upsample_op(4), _upsample_op(8)],
        axis=0))                                        # (4*HW, HW) = (1024, 256)

    # Channel-major, lane-dense view of x; channels zero-padded to a sublane tile.
    x_cf = jnp.pad(x_nchw.reshape(B, Cin, HW), ((0, 0), (0, Cp - Cin), (0, 0)))

    offs = (off_w21, off_w31, off_w22, off_w32,
            off_wc1, off_wg, off_b21, off_b31, off_b22, off_b32, off_bc1)
    kernel = _make_kernel(Cp, CoutP, offs)

    grid_spec = pltpu.PrefetchScalarGridSpec(
        num_scalar_prefetch=0,
        grid=(B,),
        in_specs=[
            pl.BlockSpec((1, Cp, HW), lambda b: (b, 0, 0)),
            pl.BlockSpec((4 * HW, HW), lambda b: (0, 0)),
            pl.BlockSpec((R, ncol), lambda b: (0, 0)),
        ],
        out_specs=pl.BlockSpec((1, Cout, HW), lambda b: (b, 0, 0)),
        scratch_shapes=[pltpu.VMEM((25 * Cp, HW), jnp.float32)],
    )

    out = pl.pallas_call(
        kernel,
        out_shape=jax.ShapeDtypeStruct((B, Cout, HW), jnp.float32),
        grid_spec=grid_spec,
        compiler_params=pltpu.CompilerParams(
            dimension_semantics=("parallel",),          # batch across TCs on v7x
        ),
    )(x_cf, ops, wpack)

    # Output is already NCHW-flattened; only a free reshape remains.
    return out.reshape(B, Cout, H, W)


# ----------------------------------------------------------------------------- #
# Pure-JAX (XLA) reference of the PyTorch module, for correctness checking
# ----------------------------------------------------------------------------- #
def _bn_elu_ref(y, bn):
    g, b, m, v = bn
    y = (y - m[None, :, None, None]) * (g / jnp.sqrt(v + BN_EPS))[None, :, None, None] \
        + b[None, :, None, None]
    return jnp.where(y > 0, y, jnp.expm1(jnp.minimum(y, 0.0)))


def _conv_ref(y, w, stride, pad):
    return jax.lax.conv_general_dilated(
        y, w, (stride, stride), ((pad, pad), (pad, pad)),
        dimension_numbers=("NCHW", "OIHW", "NCHW"),
        precision=jax.lax.Precision.HIGHEST)


def _up2_ref(y):
    n = y.shape[-1]
    u = jnp.asarray(_bilinear_matrix(n, 2 * n))
    return jnp.einsum("oi,pj,bcij->bcop", u, u, y,
                      precision=jax.lax.Precision.HIGHEST)


def fpav2_reference(x, params):
    B, Cin, Hh, Ww = x.shape
    Cout = params["w_glob"].shape[0]
    x_glob = jnp.mean(x, axis=(2, 3), keepdims=True)
    x_glob = _conv_ref(x_glob, params["w_glob"], 1, 0)
    x_glob = jnp.broadcast_to(x_glob, (B, Cout, Hh, Ww))
    d2 = _bn_elu_ref(_conv_ref(x, params["w_d21"], 2, 2), params["bn_d21"])
    d3 = _bn_elu_ref(_conv_ref(d2, params["w_d31"], 2, 1), params["bn_d31"])
    d2 = _bn_elu_ref(_conv_ref(d2, params["w_d22"], 1, 2), params["bn_d22"])
    d3 = _bn_elu_ref(_conv_ref(d3, params["w_d32"], 1, 1), params["bn_d32"])
    d3 = _up2_ref(d3)
    d2 = d2 + d3
    d2 = _up2_ref(d2)
    xc = _bn_elu_ref(_conv_ref(x, params["w_c1"], 1, 0), params["bn_c1"])
    return xc * d2 + x_glob


# ----------------------------------------------------------------------------- #
# Deterministic parameter init (synthetic; BN uses inference-mode running stats)
# ----------------------------------------------------------------------------- #
def init_params(key, cin, cout):
    keys = jax.random.split(key, 11)

    def conv_w(k, co, ci, kk):
        return 0.1 * jax.random.normal(k, (co, ci, kk, kk), jnp.float32)

    def bn_stats(k, c):
        k1, k2, k3, k4 = jax.random.split(k, 4)
        gamma = 1.0 + 0.1 * jax.random.normal(k1, (c,), jnp.float32)
        beta = 0.1 * jax.random.normal(k2, (c,), jnp.float32)
        rmean = 0.1 * jax.random.normal(k3, (c,), jnp.float32)
        rvar = 1.0 + 0.1 * jax.random.uniform(k4, (c,), jnp.float32)
        return (gamma, beta, rmean, rvar)

    return {
        "w_glob": conv_w(keys[0], cout, cin, 1),
        "w_d21": conv_w(keys[1], cin, cin, 5),
        "bn_d21": bn_stats(keys[2], cin),
        "w_d22": conv_w(keys[3], cout, cin, 5),
        "bn_d22": bn_stats(keys[4], cout),
        "w_d31": conv_w(keys[5], cin, cin, 3),
        "bn_d31": bn_stats(keys[6], cin),
        "w_d32": conv_w(keys[7], cout, cin, 3),
        "bn_d32": bn_stats(keys[8], cout),
        "w_c1": conv_w(keys[9], cout, cin, 1),
        "bn_c1": bn_stats(keys[10], cout),
    }


if __name__ == "__main__":
    B, Cin, Cout = 2, 4, 8
    key = jax.random.PRNGKey(0)
    kx, kp = jax.random.split(key)
    x = jax.random.normal(kx, (B, Cin, H, W), jnp.float32)
    params = init_params(kp, Cin, Cout)

    out = jax.jit(fpav2_forward)(x, params)
    jax.block_until_ready(out)
    assert out.shape == (B, Cout, H, W), out.shape
    assert bool(jnp.all(jnp.isfinite(out)))

    ref = jax.jit(fpav2_reference)(x, params)
    jax.block_until_ready(ref)
    np.testing.assert_allclose(np.asarray(out), np.asarray(ref),
                               rtol=1e-3, atol=1e-3)
    print("KERNEL_OK")
</pallas_src>

<mosaic_0001>
module attributes {stable_mosaic.version = 11 : i64} {
  func.func @kernel(%arg0: i32, %arg1: memref<1x8x256xf32, #tpu.memory_space<vmem>>, %arg2: memref<1024x256xf32, #tpu.memory_space<vmem>>, %arg3: memref<8x896xf32, #tpu.memory_space<vmem>>, %arg4: memref<1x8x256xf32, #tpu.memory_space<vmem>>, %arg5: memref<200x256xf32, #tpu.memory_space<vmem>>) attributes {dimension_semantics = [#tpu.dimension_semantics<parallel>], iteration_bounds = array<i64: 2>, scalar_prefetch = 0 : i64, scratch_operands = 1 : i64, tpu.core_type = #tpu.core_type<tc>, window_params = [{transform_indices = @transform_0, window_bounds = array<i64: 1, 8, 256>}, {pipeline_mode = #tpu.pipeline_mode<synchronous>, transform_indices = @transform_1, window_bounds = array<i64: 1024, 256>}, {pipeline_mode = #tpu.pipeline_mode<synchronous>, transform_indices = @transform_2, window_bounds = array<i64: 8, 896>}, {transform_indices = @transform_3, window_bounds = array<i64: 1, 8, 256>}]} {
    %c0 = arith.constant 0 : index
    %c0_0 = arith.constant 0 : index
    %c0_1 = arith.constant 0 : index
    %0 = vector.load %arg1[%c0, %c0_0, %c0_1] : memref<1x8x256xf32, #tpu.memory_space<vmem>>, vector<1x8x256xf32>
    %1 = vector.shape_cast %0 : vector<1x8x256xf32> to vector<8x256xf32>
    %2 = tpu.iota {dimensions = array<i32: 1>} : vector<8x256xi32>
    %c15_i32 = arith.constant 15 : i32
    %3 = vector.broadcast %c15_i32 : i32 to vector<8x256xi32>
    %4 = arith.andi %2, %3 : vector<8x256xi32>
    %c4_i32 = arith.constant 4 : i32
    %5 = vector.broadcast %c4_i32 : i32 to vector<8x256xi32>
    %6 = arith.shrsi %2, %5 : vector<8x256xi32>
    %c2_i32 = arith.constant 2 : i32
    %7 = vector.broadcast %c2_i32 : i32 to vector<8x256xi32>
    %8 = arith.cmpi sge, %4, %7 : vector<8x256xi32>
    %c18_i32 = arith.constant 18 : i32
    %9 = vector.broadcast %c18_i32 : i32 to vector<8x256xi32>
    %10 = arith.cmpi slt, %4, %9 : vector<8x256xi32>
    %11 = arith.andi %8, %10 : vector<8x256xi1>
    %c1_i32 = arith.constant 1 : i32
    %12 = vector.broadcast %c1_i32 : i32 to vector<8x256xi32>
    %13 = arith.cmpi sge, %4, %12 : vector<8x256xi32>
    %c17_i32 = arith.constant 17 : i32
    %14 = vector.broadcast %c17_i32 : i32 to vector<8x256xi32>
    %15 = arith.cmpi slt, %4, %14 : vector<8x256xi32>
    %16 = arith.andi %13, %15 : vector<8x256xi1>
    %c0_i32 = arith.constant 0 : i32
    %17 = vector.broadcast %c0_i32 : i32 to vector<8x256xi32>
    %18 = arith.cmpi sge, %4, %17 : vector<8x256xi32>
    %c16_i32 = arith.constant 16 : i32
    %19 = vector.broadcast %c16_i32 : i32 to vector<8x256xi32>
    %20 = arith.cmpi slt, %4, %19 : vector<8x256xi32>
    %21 = arith.andi %18, %20 : vector<8x256xi1>
    %c-1_i32 = arith.constant -1 : i32
    %22 = vector.broadcast %c-1_i32 : i32 to vector<8x256xi32>
    %23 = arith.cmpi sge, %4, %22 : vector<8x256xi32>
    %c15_i32_2 = arith.constant 15 : i32
    %24 = vector.broadcast %c15_i32_2 : i32 to vector<8x256xi32>
    %25 = arith.cmpi slt, %4, %24 : vector<8x256xi32>
    %26 = arith.andi %23, %25 : vector<8x256xi1>
    %c-2_i32 = arith.constant -2 : i32
    %27 = vector.broadcast %c-2_i32 : i32 to vector<8x256xi32>
    %28 = arith.cmpi sge, %4, %27 : vector<8x256xi32>
    %c14_i32 = arith.constant 14 : i32
    %29 = vector.broadcast %c14_i32 : i32 to vector<8x256xi32>
    %30 = arith.cmpi slt, %4, %29 : vector<8x256xi32>
    %31 = arith.andi %28, %30 : vector<8x256xi1>
    %c2_i32_3 = arith.constant 2 : i32
    %32 = vector.broadcast %c2_i32_3 : i32 to vector<8x256xi32>
    %33 = arith.cmpi sge, %6, %32 : vector<8x256xi32>
    %c18_i32_4 = arith.constant 18 : i32
    %34 = vector.broadcast %c18_i32_4 : i32 to vector<8x256xi32>
    %35 = arith.cmpi slt, %6, %34 : vector<8x256xi32>
    %36 = arith.andi %33, %35 : vector<8x256xi1>
    %c1_i32_5 = arith.constant 1 : i32
    %37 = vector.broadcast %c1_i32_5 : i32 to vector<8x256xi32>
    %38 = arith.cmpi sge, %6, %37 : vector<8x256xi32>
    %c17_i32_6 = arith.constant 17 : i32
    %39 = vector.broadcast %c17_i32_6 : i32 to vector<8x256xi32>
    %40 = arith.cmpi slt, %6, %39 : vector<8x256xi32>
    %41 = arith.andi %38, %40 : vector<8x256xi1>
    %c0_i32_7 = arith.constant 0 : i32
    %42 = vector.broadcast %c0_i32_7 : i32 to vector<8x256xi32>
    %43 = arith.cmpi sge, %6, %42 : vector<8x256xi32>
    %c16_i32_8 = arith.constant 16 : i32
    %44 = vector.broadcast %c16_i32_8 : i32 to vector<8x256xi32>
    %45 = arith.cmpi slt, %6, %44 : vector<8x256xi32>
    %46 = arith.andi %43, %45 : vector<8x256xi1>
    %c-1_i32_9 = arith.constant -1 : i32
    %47 = vector.broadcast %c-1_i32_9 : i32 to vector<8x256xi32>
    %48 = arith.cmpi sge, %6, %47 : vector<8x256xi32>
    %c15_i32_10 = arith.constant 15 : i32
    %49 = vector.broadcast %c15_i32_10 : i32 to vector<8x256xi32>
    %50 = arith.cmpi slt, %6, %49 : vector<8x256xi32>
    %51 = arith.andi %48, %50 : vector<8x256xi1>
    %c-2_i32_11 = arith.constant -2 : i32
    %52 = vector.broadcast %c-2_i32_11 : i32 to vector<8x256xi32>
    %53 = arith.cmpi sge, %6, %52 : vector<8x256xi32>
    %c14_i32_12 = arith.constant 14 : i32
    %54 = vector.broadcast %c14_i32_12 : i32 to vector<8x256xi32>
    %55 = arith.cmpi slt, %6, %54 : vector<8x256xi32>
    %56 = arith.andi %53, %55 : vector<8x256xi1>
    %57 = vector.extract_strided_slice %1 {offsets = [0, 222], sizes = [8, 34], strides = [1, 1]} : vector<8x256xf32> to vector<8x34xf32>
    %58 = vector.extract_strided_slice %1 {offsets = [0, 0], sizes = [8, 222], strides = [1, 1]} : vector<8x256xf32> to vector<8x222xf32>
    %59 = tpu.concatenate %57, %58 in 1 : vector<8x34xf32>, vector<8x222xf32> -> vector<8x256xf32>
    %60 = arith.andi %36, %11 : vector<8x256xi1>
    %cst = arith.constant 0.000000e+00 : f32
    %61 = vector.broadcast %cst : f32 to vector<8x256xf32>
    %62 = arith.select %60, %59, %61 : vector<8x256xi1>, vector<8x256xf32>
    %c0_13 = arith.constant 0 : index
    %c0_14 = arith.constant 0 : index
    %63 = vector.load %arg5[%c0_13, %c0_14] : memref<200x256xf32, #tpu.memory_space<vmem>>, vector<8x256xf32>
    tpu.vector_store %arg5[%c0_13, %c0_14], %62 {strides = array<i32>} : memref<200x256xf32, #tpu.memory_space<vmem>>, vector<8x256xf32>,
    %64 = vector.extract_strided_slice %1 {offsets = [0, 223], sizes = [8, 33], strides = [1, 1]} : vector<8x256xf32> to vector<8x33xf32>
    %65 = vector.extract_strided_slice %1 {offsets = [0, 0], sizes = [8, 223], strides = [1, 1]} : vector<8x256xf32> to vector<8x223xf32>
    %66 = tpu.concatenate %64, %65 in 1 : vector<8x33xf32>, vector<8x223xf32> -> vector<8x256xf32>
    %67 = arith.andi %36, %16 : vector<8x256xi1>
    %cst_15 = arith.constant 0.000000e+00 : f32
    %68 = vector.broadcast %cst_15 : f32 to vector<8x256xf32>
    %69 = arith.select %67, %66, %68 : vector<8x256xi1>, vector<8x256xf32>
    %c8 = arith.constant 8 : index
    %c0_16 = arith.constant 0 : index
    %70 = vector.load %arg5[%c8, %c0_16] : memref<200x256xf32, #tpu.memory_space<vmem>>, vector<8x256xf32>
    tpu.vector_store %arg5[%c8, %c0_16], %69 {strides = array<i32>} : memref<200x256xf32, #tpu.memory_space<vmem>>, vector<8x256xf32>,
    %71 = vector.extract_strided_slice %1 {offsets = [0, 224], sizes = [8, 32], strides = [1, 1]} : vector<8x256xf32> to vector<8x32xf32>
    %72 = vector.extract_strided_slice %1 {offsets = [0, 0], sizes = [8, 224], strides = [1, 1]} : vector<8x256xf32> to vector<8x224xf32>
    %73 = tpu.concatenate %71, %72 in 1 : vector<8x32xf32>, vector<8x224xf32> -> vector<8x256xf32>
    %74 = arith.andi %36, %21 : vector<8x256xi1>
    %cst_17 = arith.constant 0.000000e+00 : f32
    %75 = vector.broadcast %cst_17 : f32 to vector<8x256xf32>
    %76 = arith.select %74, %73, %75 : vector<8x256xi1>, vector<8x256xf32>
    %c16 = arith.constant 16 : index
    %c0_18 = arith.constant 0 : index
    %77 = vector.load %arg5[%c16, %c0_18] : memref<200x256xf32, #tpu.memory_space<vmem>>, vector<8x256xf32>
    tpu.vector_store %arg5[%c16, %c0_18], %76 {strides = array<i32>} : memref<200x256xf32, #tpu.memory_space<vmem>>, vector<8x256xf32>,
    %78 = vector.extract_strided_slice %1 {offsets = [0, 225], sizes = [8, 31], strides = [1, 1]} : vector<8x256xf32> to vector<8x31xf32>
    %79 = vector.extract_strided_slice %1 {offsets = [0, 0], sizes = [8, 225], strides = [1, 1]} : vector<8x256xf32> to vector<8x225xf32>
    %80 = tpu.concatenate %78, %79 in 1 : vector<8x31xf32>, vector<8x225xf32> -> vector<8x256xf32>
    %81 = arith.andi %36, %26 : vector<8x256xi1>
    %cst_19 = arith.constant 0.000000e+00 : f32
    %82 = vector.broadcast %cst_19 : f32 to vector<8x256xf32>
    %83 = arith.select %81, %80, %82 : vector<8x256xi1>, vector<8x256xf32>
    %c24 = arith.constant 24 : index
    %c0_20 = arith.constant 0 : index
    %84 = vector.load %arg5[%c24, %c0_20] : memref<200x256xf32, #tpu.memory_space<vmem>>, vector<8x256xf32>
    tpu.vector_store %arg5[%c24, %c0_20], %83 {strides = array<i32>} : memref<200x256xf32, #tpu.memory_space<vmem>>, vector<8x256xf32>,
    %85 = vector.extract_strided_slice %1 {offsets = [0, 226], sizes = [8, 30], strides = [1, 1]} : vector<8x256xf32> to vector<8x30xf32>
    %86 = vector.extract_strided_slice %1 {offsets = [0, 0], sizes = [8, 226], strides = [1, 1]} : vector<8x256xf32> to vector<8x226xf32>
    %87 = tpu.concatenate %85, %86 in 1 : vector<8x30xf32>, vector<8x226xf32> -> vector<8x256xf32>
    %88 = arith.andi %36, %31 : vector<8x256xi1>
    %cst_21 = arith.constant 0.000000e+00 : f32
    %89 = vector.broadcast %cst_21 : f32 to vector<8x256xf32>
    %90 = arith.select %88, %87, %89 : vector<8x256xi1>, vector<8x256xf32>
    %c32 = arith.constant 32 : index
    %c0_22 = arith.constant 0 : index
    %91 = vector.load %arg5[%c32, %c0_22] : memref<200x256xf32, #tpu.memory_space<vmem>>, vector<8x256xf32>
    tpu.vector_store %arg5[%c32, %c0_22], %90 {strides = array<i32>} : memref<200x256xf32, #tpu.memory_space<vmem>>, vector<8x256xf32>,
    %92 = vector.extract_strided_slice %1 {offsets = [0, 238], sizes = [8, 18], strides = [1, 1]} : vector<8x256xf32> to vector<8x18xf32>
    %93 = vector.extract_strided_slice %1 {offsets = [0, 0], sizes = [8, 238], strides = [1, 1]} : vector<8x256xf32> to vector<8x238xf32>
    %94 = tpu.concatenate %92, %93 in 1 : vector<8x18xf32>, vector<8x238xf32> -> vector<8x256xf32>
    %95 = arith.andi %41, %11 : vector<8x256xi1>
    %cst_23 = arith.constant 0.000000e+00 : f32
    %96 = vector.broadcast %cst_23 : f32 to vector<8x256xf32>
    %97 = arith.select %95, %94, %96 : vector<8x256xi1>, vector<8x256xf32>
    %c40 = arith.constant 40 : index
    %c0_24 = arith.constant 0 : index
    %98 = vector.load %arg5[%c40, %c0_24] : memref<200x256xf32, #tpu.memory_space<vmem>>, vector<8x256xf32>
    tpu.vector_store %arg5[%c40, %c0_24], %97 {strides = array<i32>} : memref<200x256xf32, #tpu.memory_space<vmem>>, vector<8x256xf32>,
    %99 = vector.extract_strided_slice %1 {offsets = [0, 239], sizes = [8, 17], strides = [1, 1]} : vector<8x256xf32> to vector<8x17xf32>
    %100 = vector.extract_strided_slice %1 {offsets = [0, 0], sizes = [8, 239], strides = [1, 1]} : vector<8x256xf32> to vector<8x239xf32>
    %101 = tpu.concatenate %99, %100 in 1 : vector<8x17xf32>, vector<8x239xf32> -> vector<8x256xf32>
    %102 = arith.andi %41, %16 : vector<8x256xi1>
    %cst_25 = arith.constant 0.000000e+00 : f32
    %103 = vector.broadcast %cst_25 : f32 to vector<8x256xf32>
    %104 = arith.select %102, %101, %103 : vector<8x256xi1>, vector<8x256xf32>
    %c48 = arith.constant 48 : index
    %c0_26 = arith.constant 0 : index
    %105 = vector.load %arg5[%c48, %c0_26] : memref<200x256xf32, #tpu.memory_space<vmem>>, vector<8x256xf32>
    tpu.vector_store %arg5[%c48, %c0_26], %104 {strides = array<i32>} : memref<200x256xf32, #tpu.memory_space<vmem>>, vector<8x256xf32>,
    %106 = vector.extract_strided_slice %1 {offsets = [0, 240], sizes = [8, 16], strides = [1, 1]} : vector<8x256xf32> to vector<8x16xf32>
    %107 = vector.extract_strided_slice %1 {offsets = [0, 0], sizes = [8, 240], strides = [1, 1]} : vector<8x256xf32> to vector<8x240xf32>
    %108 = tpu.concatenate %106, %107 in 1 : vector<8x16xf32>, vector<8x240xf32> -> vector<8x256xf32>
    %109 = arith.andi %41, %21 : vector<8x256xi1>
    %cst_27 = arith.constant 0.000000e+00 : f32
    %110 = vector.broadcast %cst_27 : f32 to vector<8x256xf32>
    %111 = arith.select %109, %108, %110 : vector<8x256xi1>, vector<8x256xf32>
    %c56 = arith.constant 56 : index
    %c0_28 = arith.constant 0 : index
    %112 = vector.load %arg5[%c56, %c0_28] : memref<200x256xf32, #tpu.memory_space<vmem>>, vector<8x256xf32>
    tpu.vector_store %arg5[%c56, %c0_28], %111 {strides = array<i32>} : memref<200x256xf32, #tpu.memory_space<vmem>>, vector<8x256xf32>,
    %113 = vector.extract_strided_slice %1 {offsets = [0, 241], sizes = [8, 15], strides = [1, 1]} : vector<8x256xf32> to vector<8x15xf32>
    %114 = vector.extract_strided_slice %1 {offsets = [0, 0], sizes = [8, 241], strides = [1, 1]} : vector<8x256xf32> to vector<8x241xf32>
    %115 = tpu.concatenate %113, %114 in 1 : vector<8x15xf32>, vector<8x241xf32> -> vector<8x256xf32>
    %116 = arith.andi %41, %26 : vector<8x256xi1>
    %cst_29 = arith.constant 0.000000e+00 : f32
    %117 = vector.broadcast %cst_29 : f32 to vector<8x256xf32>
    %118 = arith.select %116, %115, %117 : vector<8x256xi1>, vector<8x256xf32>
    %c64 = arith.constant 64 : index
    %c0_30 = arith.constant 0 : index
    %119 = vector.load %arg5[%c64, %c0_30] : memref<200x256xf32, #tpu.memory_space<vmem>>, vector<8x256xf32>
    tpu.vector_store %arg5[%c64, %c0_30], %118 {strides = array<i32>} : memref<200x256xf32, #tpu.memory_space<vmem>>, vector<8x256xf32>,
    %120 = vector.extract_strided_slice %1 {offsets = [0, 242], sizes = [8, 14], strides = [1, 1]} : vector<8x256xf32> to vector<8x14xf32>
    %121 = vector.extract_strided_slice %1 {offsets = [0, 0], sizes = [8, 242], strides = [1, 1]} : vector<8x256xf32> to vector<8x242xf32>
    %122 = tpu.concatenate %120, %121 in 1 : vector<8x14xf32>, vector<8x242xf32> -> vector<8x256xf32>
    %123 = arith.andi %41, %31 : vector<8x256xi1>
    %cst_31 = arith.constant 0.000000e+00 : f32
    %124 = vector.broadcast %cst_31 : f32 to vector<8x256xf32>
    %125 = arith.select %123, %122, %124 : vector<8x256xi1>, vector<8x256xf32>
    %c72 = arith.constant 72 : index
    %c0_32 = arith.constant 0 : index
    %126 = vector.load %arg5[%c72, %c0_32] : memref<200x256xf32, #tpu.memory_space<vmem>>, vector<8x256xf32>
    tpu.vector_store %arg5[%c72, %c0_32], %125 {strides = array<i32>} : memref<200x256xf32, #tpu.memory_space<vmem>>, vector<8x256xf32>,
    %127 = vector.extract_strided_slice %1 {offsets = [0, 254], sizes = [8, 2], strides = [1, 1]} : vector<8x256xf32> to vector<8x2xf32>
    %128 = vector.extract_strided_slice %1 {offsets = [0, 0], sizes = [8, 254], strides = [1, 1]} : vector<8x256xf32> to vector<8x254xf32>
    %129 = tpu.concatenate %127, %128 in 1 : vector<8x2xf32>, vector<8x254xf32> -> vector<8x256xf32>
    %130 = arith.andi %46, %11 : vector<8x256xi1>
    %cst_33 = arith.constant 0.000000e+00 : f32
    %131 = vector.broadcast %cst_33 : f32 to vector<8x256xf32>
    %132 = arith.select %130, %129, %131 : vector<8x256xi1>, vector<8x256xf32>
    %c80 = arith.constant 80 : index
    %c0_34 = arith.constant 0 : index
    %133 = vector.load %arg5[%c80, %c0_34] : memref<200x256xf32, #tpu.memory_space<vmem>>, vector<8x256xf32>
    tpu.vector_store %arg5[%c80, %c0_34], %132 {strides = array<i32>} : memref<200x256xf32, #tpu.memory_space<vmem>>, vector<8x256xf32>,
    %134 = vector.extract_strided_slice %1 {offsets = [0, 255], sizes = [8, 1], strides = [1, 1]} : vector<8x256xf32> to vector<8x1xf32>
    %135 = vector.extract_strided_slice %1 {offsets = [0, 0], sizes = [8, 255], strides = [1, 1]} : vector<8x256xf32> to vector<8x255xf32>
    %136 = tpu.concatenate %134, %135 in 1 : vector<8x1xf32>, vector<8x255xf32> -> vector<8x256xf32>
    %137 = arith.andi %46, %16 : vector<8x256xi1>
    %cst_35 = arith.constant 0.000000e+00 : f32
    %138 = vector.broadcast %cst_35 : f32 to vector<8x256xf32>
    %139 = arith.select %137, %136, %138 : vector<8x256xi1>, vector<8x256xf32>
    %c88 = arith.constant 88 : index
    %c0_36 = arith.constant 0 : index
    %140 = vector.load %arg5[%c88, %c0_36] : memref<200x256xf32, #tpu.memory_space<vmem>>, vector<8x256xf32>
    tpu.vector_store %arg5[%c88, %c0_36], %139 {strides = array<i32>} : memref<200x256xf32, #tpu.memory_space<vmem>>, vector<8x256xf32>,
    %141 = arith.andi %46, %21 : vector<8x256xi1>
    %cst_37 = arith.constant 0.000000e+00 : f32
    %142 = vector.broadcast %cst_37 : f32 to vector<8x256xf32>
    %143 = arith.select %141, %1, %142 : vector<8x256xi1>, vector<8x256xf32>
    %c96 = arith.constant 96 : index
    %c0_38 = arith.constant 0 : index
    %144 = vector.load %arg5[%c96, %c0_38] : memref<200x256xf32, #tpu.memory_space<vmem>>, vector<8x256xf32>
    tpu.vector_store %arg5[%c96, %c0_38], %143 {strides = array<i32>} : memref<200x256xf32, #tpu.memory_space<vmem>>, vector<8x256xf32>,
    %145 = vector.extract_strided_slice %1 {offsets = [0, 1], sizes = [8, 255], strides = [1, 1]} : vector<8x256xf32> to vector<8x255xf32>
    %146 = vector.extract_strided_slice %1 {offsets = [0, 0], sizes = [8, 1], strides = [1, 1]} : vector<8x256xf32> to vector<8x1xf32>
    %147 = tpu.concatenate %145, %146 in 1 : vector<8x255xf32>, vector<8x1xf32> -> vector<8x256xf32>
    %148 = arith.andi %46, %26 : vector<8x256xi1>
    %cst_39 = arith.constant 0.000000e+00 : f32
    %149 = vector.broadcast %cst_39 : f32 to vector<8x256xf32>
    %150 = arith.select %148, %147, %149 : vector<8x256xi1>, vector<8x256xf32>
    %c104 = arith.constant 104 : index
    %c0_40 = arith.constant 0 : index
    %151 = vector.load %arg5[%c104, %c0_40] : memref<200x256xf32, #tpu.memory_space<vmem>>, vector<8x256xf32>
    tpu.vector_store %arg5[%c104, %c0_40], %150 {strides = array<i32>} : memref<200x256xf32, #tpu.memory_space<vmem>>, vector<8x256xf32>,
    %152 = vector.extract_strided_slice %1 {offsets = [0, 2], sizes = [8, 254], strides = [1, 1]} : vector<8x256xf32> to vector<8x254xf32>
    %153 = vector.extract_strided_slice %1 {offsets = [0, 0], sizes = [8, 2], strides = [1, 1]} : vector<8x256xf32> to vector<8x2xf32>
    %154 = tpu.concatenate %152, %153 in 1 : vector<8x254xf32>, vector<8x2xf32> -> vector<8x256xf32>
    %155 = arith.andi %46, %31 : vector<8x256xi1>
    %cst_41 = arith.constant 0.000000e+00 : f32
    %156 = vector.broadcast %cst_41 : f32 to vector<8x256xf32>
    %157 = arith.select %155, %154, %156 : vector<8x256xi1>, vector<8x256xf32>
    %c112 = arith.constant 112 : index
    %c0_42 = arith.constant 0 : index
    %158 = vector.load %arg5[%c112, %c0_42] : memref<200x256xf32, #tpu.memory_space<vmem>>, vector<8x256xf32>
    tpu.vector_store %arg5[%c112, %c0_42], %157 {strides = array<i32>} : memref<200x256xf32, #tpu.memory_space<vmem>>, vector<8x256xf32>,
    %159 = vector.extract_strided_slice %1 {offsets = [0, 14], sizes = [8, 242], strides = [1, 1]} : vector<8x256xf32> to vector<8x242xf32>
    %160 = vector.extract_strided_slice %1 {offsets = [0, 0], sizes = [8, 14], strides = [1, 1]} : vector<8x256xf32> to vector<8x14xf32>
    %161 = tpu.concatenate %159, %160 in 1 : vector<8x242xf32>, vector<8x14xf32> -> vector<8x256xf32>
    %162 = arith.andi %51, %11 : vector<8x256xi1>
    %cst_43 = arith.constant 0.000000e+00 : f32
    %163 = vector.broadcast %cst_43 : f32 to vector<8x256xf32>
    %164 = arith.select %162, %161, %163 : vector<8x256xi1>, vector<8x256xf32>
    %c120 = arith.constant 120 : index
    %c0_44 = arith.constant 0 : index
    %165 = vector.load %arg5[%c120, %c0_44] : memref<200x256xf32, #tpu.memory_space<vmem>>, vector<8x256xf32>
    tpu.vector_store %arg5[%c120, %c0_44], %164 {strides = array<i32>} : memref<200x256xf32, #tpu.memory_space<vmem>>, vector<8x256xf32>,
    %166 = vector.extract_strided_slice %1 {offsets = [0, 15], sizes = [8, 241], strides = [1, 1]} : vector<8x256xf32> to vector<8x241xf32>
    %167 = vector.extract_strided_slice %1 {offsets = [0, 0], sizes = [8, 15], strides = [1, 1]} : vector<8x256xf32> to vector<8x15xf32>
    %168 = tpu.concatenate %166, %167 in 1 : vector<8x241xf32>, vector<8x15xf32> -> vector<8x256xf32>
    %169 = arith.andi %51, %16 : vector<8x256xi1>
    %cst_45 = arith.constant 0.000000e+00 : f32
    %170 = vector.broadcast %cst_45 : f32 to vector<8x256xf32>
    %171 = arith.select %169, %168, %170 : vector<8x256xi1>, vector<8x256xf32>
    %c128 = arith.constant 128 : index
    %c0_46 = arith.constant 0 : index
    %172 = vector.load %arg5[%c128, %c0_46] : memref<200x256xf32, #tpu.memory_space<vmem>>, vector<8x256xf32>
    tpu.vector_store %arg5[%c128, %c0_46], %171 {strides = array<i32>} : memref<200x256xf32, #tpu.memory_space<vmem>>, vector<8x256xf32>,
    %173 = vector.extract_strided_slice %1 {offsets = [0, 16], sizes = [8, 240], strides = [1, 1]} : vector<8x256xf32> to vector<8x240xf32>
    %174 = vector.extract_strided_slice %1 {offsets = [0, 0], sizes = [8, 16], strides = [1, 1]} : vector<8x256xf32> to vector<8x16xf32>
    %175 = tpu.concatenate %173, %174 in 1 : vector<8x240xf32>, vector<8x16xf32> -> vector<8x256xf32>
    %176 = arith.andi %51, %21 : vector<8x256xi1>
    %cst_47 = arith.constant 0.000000e+00 : f32
    %177 = vector.broadcast %cst_47 : f32 to vector<8x256xf32>
    %178 = arith.select %176, %175, %177 : vector<8x256xi1>, vector<8x256xf32>
    %c136 = arith.constant 136 : index
    %c0_48 = arith.constant 0 : index
    %179 = vector.load %arg5[%c136, %c0_48] : memref<200x256xf32, #tpu.memory_space<vmem>>, vector<8x256xf32>
    tpu.vector_store %arg5[%c136, %c0_48], %178 {strides = array<i32>} : memref<200x256xf32, #tpu.memory_space<vmem>>, vector<8x256xf32>,
    %180 = vector.extract_strided_slice %1 {offsets = [0, 17], sizes = [8, 239], strides = [1, 1]} : vector<8x256xf32> to vector<8x239xf32>
    %181 = vector.extract_strided_slice %1 {offsets = [0, 0], sizes = [8, 17], strides = [1, 1]} : vector<8x256xf32> to vector<8x17xf32>
    %182 = tpu.concatenate %180, %181 in 1 : vector<8x239xf32>, vector<8x17xf32> -> vector<8x256xf32>
    %183 = arith.andi %51, %26 : vector<8x256xi1>
    %cst_49 = arith.constant 0.000000e+00 : f32
    %184 = vector.broadcast %cst_49 : f32 to vector<8x256xf32>
    %185 = arith.select %183, %182, %184 : vector<8x256xi1>, vector<8x256xf32>
    %c144 = arith.constant 144 : index
    %c0_50 = arith.constant 0 : index
    %186 = vector.load %arg5[%c144, %c0_50] : memref<200x256xf32, #tpu.memory_space<vmem>>, vector<8x256xf32>
    tpu.vector_store %arg5[%c144, %c0_50], %185 {strides = array<i32>} : memref<200x256xf32, #tpu.memory_space<vmem>>, vector<8x256xf32>,
    %187 = vector.extract_strided_slice %1 {offsets = [0, 18], sizes = [8, 238], strides = [1, 1]} : vector<8x256xf32> to vector<8x238xf32>
    %188 = vector.extract_strided_slice %1 {offsets = [0, 0], sizes = [8, 18], strides = [1, 1]} : vector<8x256xf32> to vector<8x18xf32>
    %189 = tpu.concatenate %187, %188 in 1 : vector<8x238xf32>, vector<8x18xf32> -> vector<8x256xf32>
    %190 = arith.andi %51, %31 : vector<8x256xi1>
    %cst_51 = arith.constant 0.000000e+00 : f32
    %191 = vector.broadcast %cst_51 : f32 to vector<8x256xf32>
    %192 = arith.select %190, %189, %191 : vector<8x256xi1>, vector<8x256xf32>
    %c152 = arith.constant 152 : index
    %c0_52 = arith.constant 0 : index
    %193 = vector.load %arg5[%c152, %c0_52] : memref<200x256xf32, #tpu.memory_space<vmem>>, vector<8x256xf32>
    tpu.vector_store %arg5[%c152, %c0_52], %192 {strides = array<i32>} : memref<200x256xf32, #tpu.memory_space<vmem>>, vector<8x256xf32>,
    %194 = vector.extract_strided_slice %1 {offsets = [0, 30], sizes = [8, 226], strides = [1, 1]} : vector<8x256xf32> to vector<8x226xf32>
    %195 = vector.extract_strided_slice %1 {offsets = [0, 0], sizes = [8, 30], strides = [1, 1]} : vector<8x256xf32> to vector<8x30xf32>
    %196 = tpu.concatenate %194, %195 in 1 : vector<8x226xf32>, vector<8x30xf32> -> vector<8x256xf32>
    %197 = arith.andi %56, %11 : vector<8x256xi1>
    %cst_53 = arith.constant 0.000000e+00 : f32
    %198 = vector.broadcast %cst_53 : f32 to vector<8x256xf32>
    %199 = arith.select %197, %196, %198 : vector<8x256xi1>, vector<8x256xf32>
    %c160 = arith.constant 160 : index
    %c0_54 = arith.constant 0 : index
    %200 = vector.load %arg5[%c160, %c0_54] : memref<200x256xf32, #tpu.memory_space<vmem>>, vector<8x256xf32>
    tpu.vector_store %arg5[%c160, %c0_54], %199 {strides = array<i32>} : memref<200x256xf32, #tpu.memory_space<vmem>>, vector<8x256xf32>,
    %201 = vector.extract_strided_slice %1 {offsets = [0, 31], sizes = [8, 225], strides = [1, 1]} : vector<8x256xf32> to vector<8x225xf32>
    %202 = vector.extract_strided_slice %1 {offsets = [0, 0], sizes = [8, 31], strides = [1, 1]} : vector<8x256xf32> to vector<8x31xf32>
    %203 = tpu.concatenate %201, %202 in 1 : vector<8x225xf32>, vector<8x31xf32> -> vector<8x256xf32>
    %204 = arith.andi %56, %16 : vector<8x256xi1>
    %cst_55 = arith.constant 0.000000e+00 : f32
    %205 = vector.broadcast %cst_55 : f32 to vector<8x256xf32>
    %206 = arith.select %204, %203, %205 : vector<8x256xi1>, vector<8x256xf32>
    %c168 = arith.constant 168 : index
    %c0_56 = arith.constant 0 : index
    %207 = vector.load %arg5[%c168, %c0_56] : memref<200x256xf32, #tpu.memory_space<vmem>>, vector<8x256xf32>
    tpu.vector_store %arg5[%c168, %c0_56], %206 {strides = array<i32>} : memref<200x256xf32, #tpu.memory_space<vmem>>, vector<8x256xf32>,
    %208 = vector.extract_strided_slice %1 {offsets = [0, 32], sizes = [8, 224], strides = [1, 1]} : vector<8x256xf32> to vector<8x224xf32>
    %209 = vector.extract_strided_slice %1 {offsets = [0, 0], sizes = [8, 32], strides = [1, 1]} : vector<8x256xf32> to vector<8x32xf32>
    %210 = tpu.concatenate %208, %209 in 1 : vector<8x224xf32>, vector<8x32xf32> -> vector<8x256xf32>
    %211 = arith.andi %56, %21 : vector<8x256xi1>
    %cst_57 = arith.constant 0.000000e+00 : f32
    %212 = vector.broadcast %cst_57 : f32 to vector<8x256xf32>
    %213 = arith.select %211, %210, %212 : vector<8x256xi1>, vector<8x256xf32>
    %c176 = arith.constant 176 : index
    %c0_58 = arith.constant 0 : index
    %214 = vector.load %arg5[%c176, %c0_58] : memref<200x256xf32, #tpu.memory_space<vmem>>, vector<8x256xf32>
    tpu.vector_store %arg5[%c176, %c0_58], %213 {strides = array<i32>} : memref<200x256xf32, #tpu.memory_space<vmem>>, vector<8x256xf32>,
    %215 = vector.extract_strided_slice %1 {offsets = [0, 33], sizes = [8, 223], strides = [1, 1]} : vector<8x256xf32> to vector<8x223xf32>
    %216 = vector.extract_strided_slice %1 {offsets = [0, 0], sizes = [8, 33], strides = [1, 1]} : vector<8x256xf32> to vector<8x33xf32>
    %217 = tpu.concatenate %215, %216 in 1 : vector<8x223xf32>, vector<8x33xf32> -> vector<8x256xf32>
    %218 = arith.andi %56, %26 : vector<8x256xi1>
    %cst_59 = arith.constant 0.000000e+00 : f32
    %219 = vector.broadcast %cst_59 : f32 to vector<8x256xf32>
    %220 = arith.select %218, %217, %219 : vector<8x256xi1>, vector<8x256xf32>
    %c184 = arith.constant 184 : index
    %c0_60 = arith.constant 0 : index
    %221 = vector.load %arg5[%c184, %c0_60] : memref<200x256xf32, #tpu.memory_space<vmem>>, vector<8x256xf32>
    tpu.vector_store %arg5[%c184, %c0_60], %220 {strides = array<i32>} : memref<200x256xf32, #tpu.memory_space<vmem>>, vector<8x256xf32>,
    %222 = vector.extract_strided_slice %1 {offsets = [0, 34], sizes = [8, 222], strides = [1, 1]} : vector<8x256xf32> to vector<8x222xf32>
    %223 = vector.extract_strided_slice %1 {offsets = [0, 0], sizes = [8, 34], strides = [1, 1]} : vector<8x256xf32> to vector<8x34xf32>
    %224 = tpu.concatenate %222, %223 in 1 : vector<8x222xf32>, vector<8x34xf32> -> vector<8x256xf32>
    %225 = arith.andi %56, %31 : vector<8x256xi1>
    %cst_61 = arith.constant 0.000000e+00 : f32
    %226 = vector.broadcast %cst_61 : f32 to vector<8x256xf32>
    %227 = arith.select %225, %224, %226 : vector<8x256xi1>, vector<8x256xf32>
    %c192 = arith.constant 192 : index
    %c0_62 = arith.constant 0 : index
    %228 = vector.load %arg5[%c192, %c0_62] : memref<200x256xf32, #tpu.memory_space<vmem>>, vector<8x256xf32>
    tpu.vector_store %arg5[%c192, %c0_62], %227 {strides = array<i32>} : memref<200x256xf32, #tpu.memory_space<vmem>>, vector<8x256xf32>,
    %c0_63 = arith.constant 0 : index
    %c0_64 = arith.constant 0 : index
    %229 = vector.load %arg3[%c0_63, %c0_64] : memref<8x896xf32, #tpu.memory_space<vmem>>, vector<8x200xf32>
    %c0_65 = arith.constant 0 : index
    %c0_66 = arith.constant 0 : index
    %230 = vector.load %arg5[%c0_65, %c0_66] : memref<200x256xf32, #tpu.memory_space<vmem>>, vector<200x256xf32>
    %cst_67 = arith.constant dense<0.000000e+00> : vector<8x256xf32>
    %231 = tpu.matmul %229, %230, %cst_67 {dimension_numbers = #tpu.dot_dimension_numbers<[1], [0], [0], [1], [0, 0, 1, 1], [], []>} : vector<8x200xf32>, vector<200x256xf32>, vector<8x256xf32> -> vector<8x256xf32>
    %c0_68 = arith.constant 0 : index
    %c0_69 = arith.constant 0 : index
    %232 = vector.load %arg2[%c0_68, %c0_69] : memref<1024x256xf32, #tpu.memory_space<vmem>>, vector<256x256xf32>
    %cst_70 = arith.constant dense<0.000000e+00> : vector<8x256xf32>
    %233 = tpu.matmul %231, %232, %cst_70 {dimension_numbers = #tpu.dot_dimension_numbers<[1], [0], [0], [1], [0, 0, 1, 1], [], []>} : vector<8x256xf32>, vector<256x256xf32>, vector<8x256xf32> -> vector<8x256xf32>
    %c0_71 = arith.constant 0 : index
    %c784 = arith.constant 784 : index
    %234 = vector.load %arg3[%c0_71, %c784] : memref<8x896xf32, #tpu.memory_space<vmem>>, vector<8x1xf32>
    %235 = vector.broadcast %234 : vector<8x1xf32> to vector<8x256xf32>
    %236 = arith.addf %233, %235 : vector<8x256xf32>
    %cst_72 = arith.constant 0.000000e+00 : f32
    %237 = vector.broadcast %cst_72 : f32 to vector<8x256xf32>
    %238 = arith.cmpf ogt, %236, %237 : vector<8x256xf32>
    %cst_73 = arith.constant 0.000000e+00 : f32
    %239 = vector.broadcast %cst_73 : f32 to vector<8x256xf32>
    %240 = arith.minimumf %236, %239 : vector<8x256xf32>
    %241 = math.exp %240 : vector<8x256xf32>
    %cst_74 = arith.constant 1.000000e+00 : f32
    %242 = vector.broadcast %cst_74 : f32 to vector<8x256xf32>
    %243 = arith.subf %241, %242 : vector<8x256xf32>
    %244 = arith.select %238, %236, %243 : vector<8x256xi1>, vector<8x256xf32>
    %245 = tpu.iota {dimensions = array<i32: 1>} : vector<8x256xi32>
    %c7_i32 = arith.constant 7 : i32
    %246 = vector.broadcast %c7_i32 : i32 to vector<8x256xi32>
    %247 = arith.andi %245, %246 : vector<8x256xi32>
    %c3_i32 = arith.constant 3 : i32
    %248 = vector.broadcast %c3_i32 : i32 to vector<8x256xi32>
    %249 = arith.shrsi %245, %248 : vector<8x256xi32>
    %c1_i32_75 = arith.constant 1 : i32
    %250 = vector.broadcast %c1_i32_75 : i32 to vector<8x256xi32>
    %251 = arith.cmpi sge, %247, %250 : vector<8x256xi32>
    %c9_i32 = arith.constant 9 : i32
    %252 = vector.broadcast %c9_i32 : i32 to vector<8x256xi32>
    %253 = arith.cmpi slt, %247, %252 : vector<8x256xi32>
    %254 = arith.andi %251, %253 : vector<8x256xi1>
    %c0_i32_76 = arith.constant 0 : i32
    %255 = vector.broadcast %c0_i32_76 : i32 to vector<8x256xi32>
    %256 = arith.cmpi sge, %247, %255 : vector<8x256xi32>
    %c8_i32 = arith.constant 8 : i32
    %257 = vector.broadcast %c8_i32 : i32 to vector<8x256xi32>
    %258 = arith.cmpi slt, %247, %257 : vector<8x256xi32>
    %259 = arith.andi %256, %258 : vector<8x256xi1>
    %c-1_i32_77 = arith.constant -1 : i32
    %260 = vector.broadcast %c-1_i32_77 : i32 to vector<8x256xi32>
    %261 = arith.cmpi sge, %247, %260 : vector<8x256xi32>
    %c7_i32_78 = arith.constant 7 : i32
    %262 = vector.broadcast %c7_i32_78 : i32 to vector<8x256xi32>
    %263 = arith.cmpi slt, %247, %262 : vector<8x256xi32>
    %264 = arith.andi %261, %263 : vector<8x256xi1>
    %c1_i32_79 = arith.constant 1 : i32
    %265 = vector.broadcast %c1_i32_79 : i32 to vector<8x256xi32>
    %266 = arith.cmpi sge, %249, %265 : vector<8x256xi32>
    %c9_i32_80 = arith.constant 9 : i32
    %267 = vector.broadcast %c9_i32_80 : i32 to vector<8x256xi32>
    %268 = arith.cmpi slt, %249, %267 : vector<8x256xi32>
    %269 = arith.andi %266, %268 : vector<8x256xi1>
    %c0_i32_81 = arith.constant 0 : i32
    %270 = vector.broadcast %c0_i32_81 : i32 to vector<8x256xi32>
    %271 = arith.cmpi sge, %249, %270 : vector<8x256xi32>
    %c8_i32_82 = arith.constant 8 : i32
    %272 = vector.broadcast %c8_i32_82 : i32 to vector<8x256xi32>
    %273 = arith.cmpi slt, %249, %272 : vector<8x256xi32>
    %274 = arith.andi %271, %273 : vector<8x256xi1>
    %c-1_i32_83 = arith.constant -1 : i32
    %275 = vector.broadcast %c-1_i32_83 : i32 to vector<8x256xi32>
    %276 = arith.cmpi sge, %249, %275 : vector<8x256xi32>
    %c7_i32_84 = arith.constant 7 : i32
    %277 = vector.broadcast %c7_i32_84 : i32 to vector<8x256xi32>
    %278 = arith.cmpi slt, %249, %277 : vector<8x256xi32>
    %279 = arith.andi %276, %278 : vector<8x256xi1>
    %280 = vector.extract_strided_slice %244 {offsets = [0, 247], sizes = [8, 9], strides = [1, 1]} : vector<8x256xf32> to vector<8x9xf32>
    %281 = vector.extract_strided_slice %244 {offsets = [0, 0], sizes = [8, 247], strides = [1, 1]} : vector<8x256xf32> to vector<8x247xf32>
    %282 = tpu.concatenate %280, %281 in 1 : vector<8x9xf32>, vector<8x247xf32> -> vector<8x256xf32>
    %283 = arith.andi %269, %254 : vector<8x256xi1>
    %cst_85 = arith.constant 0.000000e+00 : f32
    %284 = vector.broadcast %cst_85 : f32 to vector<8x256xf32>
    %285 = arith.select %283, %282, %284 : vector<8x256xi1>, vector<8x256xf32>
    %c0_86 = arith.constant 0 : index
    %c0_87 = arith.constant 0 : index
    %286 = vector.load %arg5[%c0_86, %c0_87] : memref<200x256xf32, #tpu.memory_space<vmem>>, vector<8x256xf32>
    tpu.vector_store %arg5[%c0_86, %c0_87], %285 {strides = array<i32>} : memref<200x256xf32, #tpu.memory_space<vmem>>, vector<8x256xf32>,
    %287 = vector.extract_strided_slice %244 {offsets = [0, 248], sizes = [8, 8], strides = [1, 1]} : vector<8x256xf32> to vector<8x8xf32>
    %288 = vector.extract_strided_slice %244 {offsets = [0, 0], sizes = [8, 248], strides = [1, 1]} : vector<8x256xf32> to vector<8x248xf32>
    %289 = tpu.concatenate %287, %288 in 1 : vector<8x8xf32>, vector<8x248xf32> -> vector<8x256xf32>
    %290 = arith.andi %269, %259 : vector<8x256xi1>
    %cst_88 = arith.constant 0.000000e+00 : f32
    %291 = vector.broadcast %cst_88 : f32 to vector<8x256xf32>
    %292 = arith.select %290, %289, %291 : vector<8x256xi1>, vector<8x256xf32>
    %c8_89 = arith.constant 8 : index
    %c0_90 = arith.constant 0 : index
    %293 = vector.load %arg5[%c8_89, %c0_90] : memref<200x256xf32, #tpu.memory_space<vmem>>, vector<8x256xf32>
    tpu.vector_store %arg5[%c8_89, %c0_90], %292 {strides = array<i32>} : memref<200x256xf32, #tpu.memory_space<vmem>>, vector<8x256xf32>,
    %294 = vector.extract_strided_slice %244 {offsets = [0, 249], sizes = [8, 7], strides = [1, 1]} : vector<8x256xf32> to vector<8x7xf32>
    %295 = vector.extract_strided_slice %244 {offsets = [0, 0], sizes = [8, 249], strides = [1, 1]} : vector<8x256xf32> to vector<8x249xf32>
    %296 = tpu.concatenate %294, %295 in 1 : vector<8x7xf32>, vector<8x249xf32> -> vector<8x256xf32>
    %297 = arith.andi %269, %264 : vector<8x256xi1>
    %cst_91 = arith.constant 0.000000e+00 : f32
    %298 = vector.broadcast %cst_91 : f32 to vector<8x256xf32>
    %299 = arith.select %297, %296, %298 : vector<8x256xi1>, vector<8x256xf32>
    %c16_92 = arith.constant 16 : index
    %c0_93 = arith.constant 0 : index
    %300 = vector.load %arg5[%c16_92, %c0_93] : memref<200x256xf32, #tpu.memory_space<vmem>>, vector<8x256xf32>
    tpu.vector_store %arg5[%c16_92, %c0_93], %299 {strides = array<i32>} : memref<200x256xf32, #tpu.memory_space<vmem>>, vector<8x256xf32>,
    %301 = vector.extract_strided_slice %244 {offsets = [0, 255], sizes = [8, 1], strides = [1, 1]} : vector<8x256xf32> to vector<8x1xf32>
    %302 = vector.extract_strided_slice %244 {offsets = [0, 0], sizes = [8, 255], strides = [1, 1]} : vector<8x256xf32> to vector<8x255xf32>
    %303 = tpu.concatenate %301, %302 in 1 : vector<8x1xf32>, vector<8x255xf32> -> vector<8x256xf32>
    %304 = arith.andi %274, %254 : vector<8x256xi1>
    %cst_94 = arith.constant 0.000000e+00 : f32
    %305 = vector.broadcast %cst_94 : f32 to vector<8x256xf32>
    %306 = arith.select %304, %303, %305 : vector<8x256xi1>, vector<8x256xf32>
    %c24_95 = arith.constant 24 : index
    %c0_96 = arith.constant 0 : index
    %307 = vector.load %arg5[%c24_95, %c0_96] : memref<200x256xf32, #tpu.memory_space<vmem>>, vector<8x256xf32>
    tpu.vector_store %arg5[%c24_95, %c0_96], %306 {strides = array<i32>} : memref<200x256xf32, #tpu.memory_space<vmem>>, vector<8x256xf32>,
    %308 = arith.andi %274, %259 : vector<8x256xi1>
    %cst_97 = arith.constant 0.000000e+00 : f32
    %309 = vector.broadcast %cst_97 : f32 to vector<8x256xf32>
    %310 = arith.select %308, %244, %309 : vector<8x256xi1>, vector<8x256xf32>
    %c32_98 = arith.constant 32 : index
    %c0_99 = arith.constant 0 : index
    %311 = vector.load %arg5[%c32_98, %c0_99] : memref<200x256xf32, #tpu.memory_space<vmem>>, vector<8x256xf32>
    tpu.vector_store %arg5[%c32_98, %c0_99], %310 {strides = array<i32>} : memref<200x256xf32, #tpu.memory_space<vmem>>, vector<8x256xf32>,
    %312 = vector.extract_strided_slice %244 {offsets = [0, 1], sizes = [8, 255], strides = [1, 1]} : vector<8x256xf32> to vector<8x255xf32>
    %313 = vector.extract_strided_slice %244 {offsets = [0, 0], sizes = [8, 1], strides = [1, 1]} : vector<8x256xf32> to vector<8x1xf32>
    %314 = tpu.concatenate %312, %313 in 1 : vector<8x255xf32>, vector<8x1xf32> -> vector<8x256xf32>
    %315 = arith.andi %274, %264 : vector<8x256xi1>
    %cst_100 = arith.constant 0.000000e+00 : f32
    %316 = vector.broadcast %cst_100 : f32 to vector<8x256xf32>
    %317 = arith.select %315, %314, %316 : vector<8x256xi1>, vector<8x256xf32>
    %c40_101 = arith.constant 40 : index
    %c0_102 = arith.constant 0 : index
    %318 = vector.load %arg5[%c40_101, %c0_102] : memref<200x256xf32, #tpu.memory_space<vmem>>, vector<8x256xf32>
    tpu.vector_store %arg5[%c40_101, %c0_102], %317 {strides = array<i32>} : memref<200x256xf32, #tpu.memory_space<vmem>>, vector<8x256xf32>,
    %319 = vector.extract_strided_slice %244 {offsets = [0, 7], sizes = [8, 249], strides = [1, 1]} : vector<8x256xf32> to vector<8x249xf32>
    %320 = vector.extract_strided_slice %244 {offsets = [0, 0], sizes = [8, 7], strides = [1, 1]} : vector<8x256xf32> to vector<8x7xf32>
    %321 = tpu.concatenate %319, %320 in 1 : vector<8x249xf32>, vector<8x7xf32> -> vector<8x256xf32>
    %322 = arith.andi %279, %254 : vector<8x256xi1>
    %cst_103 = arith.constant 0.000000e+00 : f32
    %323 = vector.broadcast %cst_103 : f32 to vector<8x256xf32>
    %324 = arith.select %322, %321, %323 : vector<8x256xi1>, vector<8x256xf32>
    %c48_104 = arith.constant 48 : index
    %c0_105 = arith.constant 0 : index
    %325 = vector.load %arg5[%c48_104, %c0_105] : memref<200x256xf32, #tpu.memory_space<vmem>>, vector<8x256xf32>
    tpu.vector_store %arg5[%c48_104, %c0_105], %324 {strides = array<i32>} : memref<200x256xf32, #tpu.memory_space<vmem>>, vector<8x256xf32>,
    %326 = vector.extract_strided_slice %244 {offsets = [0, 8], sizes = [8, 248], strides = [1, 1]} : vector<8x256xf32> to vector<8x248xf32>
    %327 = vector.extract_strided_slice %244 {offsets = [0, 0], sizes = [8, 8], strides = [1, 1]} : vector<8x256xf32> to vector<8x8xf32>
    %328 = tpu.concatenate %326, %327 in 1 : vector<8x248xf32>, vector<8x8xf32> -> vector<8x256xf32>
    %329 = arith.andi %279, %259 : vector<8x256xi1>
    %cst_106 = arith.constant 0.000000e+00 : f32
    %330 = vector.broadcast %cst_106 : f32 to vector<8x256xf32>
    %331 = arith.select %329, %328, %330 : vector<8x256xi1>, vector<8x256xf32>
    %c56_107 = arith.constant 56 : index
    %c0_108 = arith.constant 0 : index
    %332 = vector.load %arg5[%c56_107, %c0_108] : memref<200x256xf32, #tpu.memory_space<vmem>>, vector<8x256xf32>
    tpu.vector_store %arg5[%c56_107, %c0_108], %331 {strides = array<i32>} : memref<200x256xf32, #tpu.memory_space<vmem>>, vector<8x256xf32>,
    %333 = vector.extract_strided_slice %244 {offsets = [0, 9], sizes = [8, 247], strides = [1, 1]} : vector<8x256xf32> to vector<8x247xf32>
    %334 = vector.extract_strided_slice %244 {offsets = [0, 0], sizes = [8, 9], strides = [1, 1]} : vector<8x256xf32> to vector<8x9xf32>
    %335 = tpu.concatenate %333, %334 in 1 : vector<8x247xf32>, vector<8x9xf32> -> vector<8x256xf32>
    %336 = arith.andi %279, %264 : vector<8x256xi1>
    %cst_109 = arith.constant 0.000000e+00 : f32
    %337 = vector.broadcast %cst_109 : f32 to vector<8x256xf32>
    %338 = arith.select %336, %335, %337 : vector<8x256xi1>, vector<8x256xf32>
    %c64_110 = arith.constant 64 : index
    %c0_111 = arith.constant 0 : index
    %339 = vector.load %arg5[%c64_110, %c0_111] : memref<200x256xf32, #tpu.memory_space<vmem>>, vector<8x256xf32>
    tpu.vector_store %arg5[%c64_110, %c0_111], %338 {strides = array<i32>} : memref<200x256xf32, #tpu.memory_space<vmem>>, vector<8x256xf32>,
    %c0_112 = arith.constant 0 : index
    %c256 = arith.constant 256 : index
    %340 = vector.load %arg3[%c0_112, %c256] : memref<8x896xf32, #tpu.memory_space<vmem>>, vector<8x72xf32>
    %c0_113 = arith.constant 0 : index
    %c0_114 = arith.constant 0 : index
    %341 = vector.load %arg5[%c0_113, %c0_114] : memref<200x256xf32, #tpu.memory_space<vmem>>, vector<72x256xf32>
    %cst_115 = arith.constant dense<0.000000e+00> : vector<8x256xf32>
    %342 = tpu.matmul %340, %341, %cst_115 {dimension_numbers = #tpu.dot_dimension_numbers<[1], [0], [0], [1], [0, 0, 1, 1], [], []>} : vector<8x72xf32>, vector<72x256xf32>, vector<8x256xf32> -> vector<8x256xf32>
    %c256_116 = arith.constant 256 : index
    %c0_117 = arith.constant 0 : index
    %343 = vector.load %arg2[%c256_116, %c0_117] : memref<1024x256xf32, #tpu.memory_space<vmem>>, vector<256x256xf32>
    %cst_118 = arith.constant dense<0.000000e+00> : vector<8x256xf32>
    %344 = tpu.matmul %342, %343, %cst_118 {dimension_numbers = #tpu.dot_dimension_numbers<[1], [0], [0], [1], [0, 0, 1, 1], [], []>} : vector<8x256xf32>, vector<256x256xf32>, vector<8x256xf32> -> vector<8x256xf32>
    %c0_119 = arith.constant 0 : index
    %c785 = arith.constant 785 : index
    %345 = vector.load %arg3[%c0_119, %c785] : memref<8x896xf32, #tpu.memory_space<vmem>>, vector<8x1xf32>
    %346 = vector.broadcast %345 : vector<8x1xf32> to vector<8x256xf32>
    %347 = arith.addf %344, %346 : vector<8x256xf32>
    %cst_120 = arith.constant 0.000000e+00 : f32
    %348 = vector.broadcast %cst_120 : f32 to vector<8x256xf32>
    %349 = arith.cmpf ogt, %347, %348 : vector<8x256xf32>
    %cst_121 = arith.constant 0.000000e+00 : f32
    %350 = vector.broadcast %cst_121 : f32 to vector<8x256xf32>
    %351 = arith.minimumf %347, %350 : vector<8x256xf32>
    %352 = math.exp %351 : vector<8x256xf32>
    %cst_122 = arith.constant 1.000000e+00 : f32
    %353 = vector.broadcast %cst_122 : f32 to vector<8x256xf32>
    %354 = arith.subf %352, %353 : vector<8x256xf32>
    %355 = arith.select %349, %347, %354 : vector<8x256xi1>, vector<8x256xf32>
    %356 = tpu.iota {dimensions = array<i32: 1>} : vector<8x256xi32>
    %c7_i32_123 = arith.constant 7 : i32
    %357 = vector.broadcast %c7_i32_123 : i32 to vector<8x256xi32>
    %358 = arith.andi %356, %357 : vector<8x256xi32>
    %c3_i32_124 = arith.constant 3 : i32
    %359 = vector.broadcast %c3_i32_124 : i32 to vector<8x256xi32>
    %360 = arith.shrsi %356, %359 : vector<8x256xi32>
    %c2_i32_125 = arith.constant 2 : i32
    %361 = vector.broadcast %c2_i32_125 : i32 to vector<8x256xi32>
    %362 = arith.cmpi sge, %358, %361 : vector<8x256xi32>
    %c10_i32 = arith.constant 10 : i32
    %363 = vector.broadcast %c10_i32 : i32 to vector<8x256xi32>
    %364 = arith.cmpi slt, %358, %363 : vector<8x256xi32>
    %365 = arith.andi %362, %364 : vector<8x256xi1>
    %c1_i32_126 = arith.constant 1 : i32
    %366 = vector.broadcast %c1_i32_126 : i32 to vector<8x256xi32>
    %367 = arith.cmpi sge, %358, %366 : vector<8x256xi32>
    %c9_i32_127 = arith.constant 9 : i32
    %368 = vector.broadcast %c9_i32_127 : i32 to vector<8x256xi32>
    %369 = arith.cmpi slt, %358, %368 : vector<8x256xi32>
    %370 = arith.andi %367, %369 : vector<8x256xi1>
    %c0_i32_128 = arith.constant 0 : i32
    %371 = vector.broadcast %c0_i32_128 : i32 to vector<8x256xi32>
    %372 = arith.cmpi sge, %358, %371 : vector<8x256xi32>
    %c8_i32_129 = arith.constant 8 : i32
    %373 = vector.broadcast %c8_i32_129 : i32 to vector<8x256xi32>
    %374 = arith.cmpi slt, %358, %373 : vector<8x256xi32>
    %375 = arith.andi %372, %374 : vector<8x256xi1>
    %c-1_i32_130 = arith.constant -1 : i32
    %376 = vector.broadcast %c-1_i32_130 : i32 to vector<8x256xi32>
    %377 = arith.cmpi sge, %358, %376 : vector<8x256xi32>
    %c7_i32_131 = arith.constant 7 : i32
    %378 = vector.broadcast %c7_i32_131 : i32 to vector<8x256xi32>
    %379 = arith.cmpi slt, %358, %378 : vector<8x256xi32>
    %380 = arith.andi %377, %379 : vector<8x256xi1>
    %c-2_i32_132 = arith.constant -2 : i32
    %381 = vector.broadcast %c-2_i32_132 : i32 to vector<8x256xi32>
    %382 = arith.cmpi sge, %358, %381 : vector<8x256xi32>
    %c6_i32 = arith.constant 6 : i32
    %383 = vector.broadcast %c6_i32 : i32 to vector<8x256xi32>
    %384 = arith.cmpi slt, %358, %383 : vector<8x256xi32>
    %385 = arith.andi %382, %384 : vector<8x256xi1>
    %c2_i32_133 = arith.constant 2 : i32
    %386 = vector.broadcast %c2_i32_133 : i32 to vector<8x256xi32>
    %387 = arith.cmpi sge, %360, %386 : vector<8x256xi32>
    %c10_i32_134 = arith.constant 10 : i32
    %388 = vector.broadcast %c10_i32_134 : i32 to vector<8x256xi32>
    %389 = arith.cmpi slt, %360, %388 : vector<8x256xi32>
    %390 = arith.andi %387, %389 : vector<8x256xi1>
    %c1_i32_135 = arith.constant 1 : i32
    %391 = vector.broadcast %c1_i32_135 : i32 to vector<8x256xi32>
    %392 = arith.cmpi sge, %360, %391 : vector<8x256xi32>
    %c9_i32_136 = arith.constant 9 : i32
    %393 = vector.broadcast %c9_i32_136 : i32 to vector<8x256xi32>
    %394 = arith.cmpi slt, %360, %393 : vector<8x256xi32>
    %395 = arith.andi %392, %394 : vector<8x256xi1>
    %c0_i32_137 = arith.constant 0 : i32
    %396 = vector.broadcast %c0_i32_137 : i32 to vector<8x256xi32>
    %397 = arith.cmpi sge, %360, %396 : vector<8x256xi32>
    %c8_i32_138 = arith.constant 8 : i32
    %398 = vector.broadcast %c8_i32_138 : i32 to vector<8x256xi32>
    %399 = arith.cmpi slt, %360, %398 : vector<8x256xi32>
    %400 = arith.andi %397, %399 : vector<8x256xi1>
    %c-1_i32_139 = arith.constant -1 : i32
    %401 = vector.broadcast %c-1_i32_139 : i32 to vector<8x256xi32>
    %402 = arith.cmpi sge, %360, %401 : vector<8x256xi32>
    %c7_i32_140 = arith.constant 7 : i32
    %403 = vector.broadcast %c7_i32_140 : i32 to vector<8x256xi32>
    %404 = arith.cmpi slt, %360, %403 : vector<8x256xi32>
    %405 = arith.andi %402, %404 : vector<8x256xi1>
    %c-2_i32_141 = arith.constant -2 : i32
    %406 = vector.broadcast %c-2_i32_141 : i32 to vector<8x256xi32>
    %407 = arith.cmpi sge, %360, %406 : vector<8x256xi32>
    %c6_i32_142 = arith.constant 6 : i32
    %408 = vector.broadcast %c6_i32_142 : i32 to vector<8x256xi32>
    %409 = arith.cmpi slt, %360, %408 : vector<8x256xi32>
    %410 = arith.andi %407, %409 : vector<8x256xi1>
    %411 = vector.extract_strided_slice %244 {offsets = [0, 238], sizes = [8, 18], strides = [1, 1]} : vector<8x256xf32> to vector<8x18xf32>
    %412 = vector.extract_strided_slice %244 {offsets = [0, 0], sizes = [8, 238], strides = [1, 1]} : vector<8x256xf32> to vector<8x238xf32>
    %413 = tpu.concatenate %411, %412 in 1 : vector<8x18xf32>, vector<8x238xf32> -> vector<8x256xf32>
    %414 = arith.andi %390, %365 : vector<8x256xi1>
    %cst_143 = arith.constant 0.000000e+00 : f32
    %415 = vector.broadcast %cst_143 : f32 to vector<8x256xf32>
    %416 = arith.select %414, %413, %415 : vector<8x256xi1>, vector<8x256xf32>
    %c0_144 = arith.constant 0 : index
    %c0_145 = arith.constant 0 : index
    %417 = vector.load %arg5[%c0_144, %c0_145] : memref<200x256xf32, #tpu.memory_space<vmem>>, vector<8x256xf32>
    tpu.vector_store %arg5[%c0_144, %c0_145], %416 {strides = array<i32>} : memref<200x256xf32, #tpu.memory_space<vmem>>, vector<8x256xf32>,
    %418 = vector.extract_strided_slice %244 {offsets = [0, 239], sizes = [8, 17], strides = [1, 1]} : vector<8x256xf32> to vector<8x17xf32>
    %419 = vector.extract_strided_slice %244 {offsets = [0, 0], sizes = [8, 239], strides = [1, 1]} : vector<8x256xf32> to vector<8x239xf32>
    %420 = tpu.concatenate %418, %419 in 1 : vector<8x17xf32>, vector<8x239xf32> -> vector<8x256xf32>
    %421 = arith.andi %390, %370 : vector<8x256xi1>
    %cst_146 = arith.constant 0.000000e+00 : f32
    %422 = vector.broadcast %cst_146 : f32 to vector<8x256xf32>
    %423 = arith.select %421, %420, %422 : vector<8x256xi1>, vector<8x256xf32>
    %c8_147 = arith.constant 8 : index
    %c0_148 = arith.constant 0 : index
    %424 = vector.load %arg5[%c8_147, %c0_148] : memref<200x256xf32, #tpu.memory_space<vmem>>, vector<8x256xf32>
    tpu.vector_store %arg5[%c8_147, %c0_148], %423 {strides = array<i32>} : memref<200x256xf32, #tpu.memory_space<vmem>>, vector<8x256xf32>,
    %425 = vector.extract_strided_slice %244 {offsets = [0, 240], sizes = [8, 16], strides = [1, 1]} : vector<8x256xf32> to vector<8x16xf32>
    %426 = vector.extract_strided_slice %244 {offsets = [0, 0], sizes = [8, 240], strides = [1, 1]} : vector<8x256xf32> to vector<8x240xf32>
    %427 = tpu.concatenate %425, %426 in 1 : vector<8x16xf32>, vector<8x240xf32> -> vector<8x256xf32>
    %428 = arith.andi %390, %375 : vector<8x256xi1>
    %cst_149 = arith.constant 0.000000e+00 : f32
    %429 = vector.broadcast %cst_149 : f32 to vector<8x256xf32>
    %430 = arith.select %428, %427, %429 : vector<8x256xi1>, vector<8x256xf32>
    %c16_150 = arith.constant 16 : index
    %c0_151 = arith.constant 0 : index
    %431 = vector.load %arg5[%c16_150, %c0_151] : memref<200x256xf32, #tpu.memory_space<vmem>>, vector<8x256xf32>
    tpu.vector_store %arg5[%c16_150, %c0_151], %430 {strides = array<i32>} : memref<200x256xf32, #tpu.memory_space<vmem>>, vector<8x256xf32>,
    %432 = vector.extract_strided_slice %244 {offsets = [0, 241], sizes = [8, 15], strides = [1, 1]} : vector<8x256xf32> to vector<8x15xf32>
    %433 = vector.extract_strided_slice %244 {offsets = [0, 0], sizes = [8, 241], strides = [1, 1]} : vector<8x256xf32> to vector<8x241xf32>
    %434 = tpu.concatenate %432, %433 in 1 : vector<8x15xf32>, vector<8x241xf32> -> vector<8x256xf32>
    %435 = arith.andi %390, %380 : vector<8x256xi1>
    %cst_152 = arith.constant 0.000000e+00 : f32
    %436 = vector.broadcast %cst_152 : f32 to vector<8x256xf32>
    %437 = arith.select %435, %434, %436 : vector<8x256xi1>, vector<8x256xf32>
    %c24_153 = arith.constant 24 : index
    %c0_154 = arith.constant 0 : index
    %438 = vector.load %arg5[%c24_153, %c0_154] : memref<200x256xf32, #tpu.memory_space<vmem>>, vector<8x256xf32>
    tpu.vector_store %arg5[%c24_153, %c0_154], %437 {strides = array<i32>} : memref<200x256xf32, #tpu.memory_space<vmem>>, vector<8x256xf32>,
    %439 = vector.extract_strided_slice %244 {offsets = [0, 242], sizes = [8, 14], strides = [1, 1]} : vector<8x256xf32> to vector<8x14xf32>
    %440 = vector.extract_strided_slice %244 {offsets = [0, 0], sizes = [8, 242], strides = [1, 1]} : vector<8x256xf32> to vector<8x242xf32>
    %441 = tpu.concatenate %439, %440 in 1 : vector<8x14xf32>, vector<8x242xf32> -> vector<8x256xf32>
    %442 = arith.andi %390, %385 : vector<8x256xi1>
    %cst_155 = arith.constant 0.000000e+00 : f32
    %443 = vector.broadcast %cst_155 : f32 to vector<8x256xf32>
    %444 = arith.select %442, %441, %443 : vector<8x256xi1>, vector<8x256xf32>
    %c32_156 = arith.constant 32 : index
    %c0_157 = arith.constant 0 : index
    %445 = vector.load %arg5[%c32_156, %c0_157] : memref<200x256xf32, #tpu.memory_space<vmem>>, vector<8x256xf32>
    tpu.vector_store %arg5[%c32_156, %c0_157], %444 {strides = array<i32>} : memref<200x256xf32, #tpu.memory_space<vmem>>, vector<8x256xf32>,
    %446 = vector.extract_strided_slice %244 {offsets = [0, 246], sizes = [8, 10], strides = [1, 1]} : vector<8x256xf32> to vector<8x10xf32>
    %447 = vector.extract_strided_slice %244 {offsets = [0, 0], sizes = [8, 246], strides = [1, 1]} : vector<8x256xf32> to vector<8x246xf32>
    %448 = tpu.concatenate %446, %447 in 1 : vector<8x10xf32>, vector<8x246xf32> -> vector<8x256xf32>
    %449 = arith.andi %395, %365 : vector<8x256xi1>
    %cst_158 = arith.constant 0.000000e+00 : f32
    %450 = vector.broadcast %cst_158 : f32 to vector<8x256xf32>
    %451 = arith.select %449, %448, %450 : vector<8x256xi1>, vector<8x256xf32>
    %c40_159 = arith.constant 40 : index
    %c0_160 = arith.constant 0 : index
    %452 = vector.load %arg5[%c40_159, %c0_160] : memref<200x256xf32, #tpu.memory_space<vmem>>, vector<8x256xf32>
    tpu.vector_store %arg5[%c40_159, %c0_160], %451 {strides = array<i32>} : memref<200x256xf32, #tpu.memory_space<vmem>>, vector<8x256xf32>,
    %453 = vector.extract_strided_slice %244 {offsets = [0, 247], sizes = [8, 9], strides = [1, 1]} : vector<8x256xf32> to vector<8x9xf32>
    %454 = vector.extract_strided_slice %244 {offsets = [0, 0], sizes = [8, 247], strides = [1, 1]} : vector<8x256xf32> to vector<8x247xf32>
    %455 = tpu.concatenate %453, %454 in 1 : vector<8x9xf32>, vector<8x247xf32> -> vector<8x256xf32>
    %456 = arith.andi %395, %370 : vector<8x256xi1>
    %cst_161 = arith.constant 0.000000e+00 : f32
    %457 = vector.broadcast %cst_161 : f32 to vector<8x256xf32>
    %458 = arith.select %456, %455, %457 : vector<8x256xi1>, vector<8x256xf32>
    %c48_162 = arith.constant 48 : index
    %c0_163 = arith.constant 0 : index
    %459 = vector.load %arg5[%c48_162, %c0_163] : memref<200x256xf32, #tpu.memory_space<vmem>>, vector<8x256xf32>
    tpu.vector_store %arg5[%c48_162, %c0_163], %458 {strides = array<i32>} : memref<200x256xf32, #tpu.memory_space<vmem>>, vector<8x256xf32>,
    %460 = vector.extract_strided_slice %244 {offsets = [0, 248], sizes = [8, 8], strides = [1, 1]} : vector<8x256xf32> to vector<8x8xf32>
    %461 = vector.extract_strided_slice %244 {offsets = [0, 0], sizes = [8, 248], strides = [1, 1]} : vector<8x256xf32> to vector<8x248xf32>
    %462 = tpu.concatenate %460, %461 in 1 : vector<8x8xf32>, vector<8x248xf32> -> vector<8x256xf32>
    %463 = arith.andi %395, %375 : vector<8x256xi1>
    %cst_164 = arith.constant 0.000000e+00 : f32
    %464 = vector.broadcast %cst_164 : f32 to vector<8x256xf32>
    %465 = arith.select %463, %462, %464 : vector<8x256xi1>, vector<8x256xf32>
    %c56_165 = arith.constant 56 : index
    %c0_166 = arith.constant 0 : index
    %466 = vector.load %arg5[%c56_165, %c0_166] : memref<200x256xf32, #tpu.memory_space<vmem>>, vector<8x256xf32>
    tpu.vector_store %arg5[%c56_165, %c0_166], %465 {strides = array<i32>} : memref<200x256xf32, #tpu.memory_space<vmem>>, vector<8x256xf32>,
    %467 = vector.extract_strided_slice %244 {offsets = [0, 249], sizes = [8, 7], strides = [1, 1]} : vector<8x256xf32> to vector<8x7xf32>
    %468 = vector.extract_strided_slice %244 {offsets = [0, 0], sizes = [8, 249], strides = [1, 1]} : vector<8x256xf32> to vector<8x249xf32>
    %469 = tpu.concatenate %467, %468 in 1 : vector<8x7xf32>, vector<8x249xf32> -> vector<8x256xf32>
    %470 = arith.andi %395, %380 : vector<8x256xi1>
    %cst_167 = arith.constant 0.000000e+00 : f32
    %471 = vector.broadcast %cst_167 : f32 to vector<8x256xf32>
    %472 = arith.select %470, %469, %471 : vector<8x256xi1>, vector<8x256xf32>
    %c64_168 = arith.constant 64 : index
    %c0_169 = arith.constant 0 : index
    %473 = vector.load %arg5[%c64_168, %c0_169] : memref<200x256xf32, #tpu.memory_space<vmem>>, vector<8x256xf32>
    tpu.vector_store %arg5[%c64_168, %c0_169], %472 {strides = array<i32>} : memref<200x256xf32, #tpu.memory_space<vmem>>, vector<8x256xf32>,
    %474 = vector.extract_strided_slice %244 {offsets = [0, 250], sizes = [8, 6], strides = [1, 1]} : vector<8x256xf32> to vector<8x6xf32>
    %475 = vector.extract_strided_slice %244 {offsets = [0, 0], sizes = [8, 250], strides = [1, 1]} : vector<8x256xf32> to vector<8x250xf32>
    %476 = tpu.concatenate %474, %475 in 1 : vector<8x6xf32>, vector<8x250xf32> -> vector<8x256xf32>
    %477 = arith.andi %395, %385 : vector<8x256xi1>
    %cst_170 = arith.constant 0.000000e+00 : f32
    %478 = vector.broadcast %cst_170 : f32 to vector<8x256xf32>
    %479 = arith.select %477, %476, %478 : vector<8x256xi1>, vector<8x256xf32>
    %c72_171 = arith.constant 72 : index
    %c0_172 = arith.constant 0 : index
    %480 = vector.load %arg5[%c72_171, %c0_172] : memref<200x256xf32, #tpu.memory_space<vmem>>, vector<8x256xf32>
    tpu.vector_store %arg5[%c72_171, %c0_172], %479 {strides = array<i32>} : memref<200x256xf32, #tpu.memory_space<vmem>>, vector<8x256xf32>,
    %481 = vector.extract_strided_slice %244 {offsets = [0, 254], sizes = [8, 2], strides = [1, 1]} : vector<8x256xf32> to vector<8x2xf32>
    %482 = vector.extract_strided_slice %244 {offsets = [0, 0], sizes = [8, 254], strides = [1, 1]} : vector<8x256xf32> to vector<8x254xf32>
    %483 = tpu.concatenate %481, %482 in 1 : vector<8x2xf32>, vector<8x254xf32> -> vector<8x256xf32>
    %484 = arith.andi %400, %365 : vector<8x256xi1>
    %cst_173 = arith.constant 0.000000e+00 : f32
    %485 = vector.broadcast %cst_173 : f32 to vector<8x256xf32>
    %486 = arith.select %484, %483, %485 : vector<8x256xi1>, vector<8x256xf32>
    %c80_174 = arith.constant 80 : index
    %c0_175 = arith.constant 0 : index
    %487 = vector.load %arg5[%c80_174, %c0_175] : memref<200x256xf32, #tpu.memory_space<vmem>>, vector<8x256xf32>
    tpu.vector_store %arg5[%c80_174, %c0_175], %486 {strides = array<i32>} : memref<200x256xf32, #tpu.memory_space<vmem>>, vector<8x256xf32>,
    %488 = vector.extract_strided_slice %244 {offsets = [0, 255], sizes = [8, 1], strides = [1, 1]} : vector<8x256xf32> to vector<8x1xf32>
    %489 = vector.extract_strided_slice %244 {offsets = [0, 0], sizes = [8, 255], strides = [1, 1]} : vector<8x256xf32> to vector<8x255xf32>
    %490 = tpu.concatenate %488, %489 in 1 : vector<8x1xf32>, vector<8x255xf32> -> vector<8x256xf32>
    %491 = arith.andi %400, %370 : vector<8x256xi1>
    %cst_176 = arith.constant 0.000000e+00 : f32
    %492 = vector.broadcast %cst_176 : f32 to vector<8x256xf32>
    %493 = arith.select %491, %490, %492 : vector<8x256xi1>, vector<8x256xf32>
    %c88_177 = arith.constant 88 : index
    %c0_178 = arith.constant 0 : index
    %494 = vector.load %arg5[%c88_177, %c0_178] : memref<200x256xf32, #tpu.memory_space<vmem>>, vector<8x256xf32>
    tpu.vector_store %arg5[%c88_177, %c0_178], %493 {strides = array<i32>} : memref<200x256xf32, #tpu.memory_space<vmem>>, vector<8x256xf32>,
    %495 = arith.andi %400, %375 : vector<8x256xi1>
    %cst_179 = arith.constant 0.000000e+00 : f32
    %496 = vector.broadcast %cst_179 : f32 to vector<8x256xf32>
    %497 = arith.select %495, %244, %496 : vector<8x256xi1>, vector<8x256xf32>
    %c96_180 = arith.constant 96 : index
    %c0_181 = arith.constant 0 : index
    %498 = vector.load %arg5[%c96_180, %c0_181] : memref<200x256xf32, #tpu.memory_space<vmem>>, vector<8x256xf32>
    tpu.vector_store %arg5[%c96_180, %c0_181], %497 {strides = array<i32>} : memref<200x256xf32, #tpu.memory_space<vmem>>, vector<8x256xf32>,
    %499 = vector.extract_strided_slice %244 {offsets = [0, 1], sizes = [8, 255], strides = [1, 1]} : vector<8x256xf32> to vector<8x255xf32>
    %500 = vector.extract_strided_slice %244 {offsets = [0, 0], sizes = [8, 1], strides = [1, 1]} : vector<8x256xf32> to vector<8x1xf32>
    %501 = tpu.concatenate %499, %500 in 1 : vector<8x255xf32>, vector<8x1xf32> -> vector<8x256xf32>
    %502 = arith.andi %400, %380 : vector<8x256xi1>
    %cst_182 = arith.constant 0.000000e+00 : f32
    %503 = vector.broadcast %cst_182 : f32 to vector<8x256xf32>
    %504 = arith.select %502, %501, %503 : vector<8x256xi1>, vector<8x256xf32>
    %c104_183 = arith.constant 104 : index
    %c0_184 = arith.constant 0 : index
    %505 = vector.load %arg5[%c104_183, %c0_184] : memref<200x256xf32, #tpu.memory_space<vmem>>, vector<8x256xf32>
    tpu.vector_store %arg5[%c104_183, %c0_184], %504 {strides = array<i32>} : memref<200x256xf32, #tpu.memory_space<vmem>>, vector<8x256xf32>,
    %506 = vector.extract_strided_slice %244 {offsets = [0, 2], sizes = [8, 254], strides = [1, 1]} : vector<8x256xf32> to vector<8x254xf32>
    %507 = vector.extract_strided_slice %244 {offsets = [0, 0], sizes = [8, 2], strides = [1, 1]} : vector<8x256xf32> to vector<8x2xf32>
    %508 = tpu.concatenate %506, %507 in 1 : vector<8x254xf32>, vector<8x2xf32> -> vector<8x256xf32>
    %509 = arith.andi %400, %385 : vector<8x256xi1>
    %cst_185 = arith.constant 0.000000e+00 : f32
    %510 = vector.broadcast %cst_185 : f32 to vector<8x256xf32>
    %511 = arith.select %509, %508, %510 : vector<8x256xi1>, vector<8x256xf32>
    %c112_186 = arith.constant 112 : index
    %c0_187 = arith.constant 0 : index
    %512 = vector.load %arg5[%c112_186, %c0_187] : memref<200x256xf32, #tpu.memory_space<vmem>>, vector<8x256xf32>
    tpu.vector_store %arg5[%c112_186, %c0_187], %511 {strides = array<i32>} : memref<200x256xf32, #tpu.memory_space<vmem>>, vector<8x256xf32>,
    %513 = vector.extract_strided_slice %244 {offsets = [0, 6], sizes = [8, 250], strides = [1, 1]} : vector<8x256xf32> to vector<8x250xf32>
    %514 = vector.extract_strided_slice %244 {offsets = [0, 0], sizes = [8, 6], strides = [1, 1]} : vector<8x256xf32> to vector<8x6xf32>
    %515 = tpu.concatenate %513, %514 in 1 : vector<8x250xf32>, vector<8x6xf32> -> vector<8x256xf32>
    %516 = arith.andi %405, %365 : vector<8x256xi1>
    %cst_188 = arith.constant 0.000000e+00 : f32
    %517 = vector.broadcast %cst_188 : f32 to vector<8x256xf32>
    %518 = arith.select %516, %515, %517 : vector<8x256xi1>, vector<8x256xf32>
    %c120_189 = arith.constant 120 : index
    %c0_190 = arith.constant 0 : index
    %519 = vector.load %arg5[%c120_189, %c0_190] : memref<200x256xf32, #tpu.memory_space<vmem>>, vector<8x256xf32>
    tpu.vector_store %arg5[%c120_189, %c0_190], %518 {strides = array<i32>} : memref<200x256xf32, #tpu.memory_space<vmem>>, vector<8x256xf32>,
    %520 = vector.extract_strided_slice %244 {offsets = [0, 7], sizes = [8, 249], strides = [1, 1]} : vector<8x256xf32> to vector<8x249xf32>
    %521 = vector.extract_strided_slice %244 {offsets = [0, 0], sizes = [8, 7], strides = [1, 1]} : vector<8x256xf32> to vector<8x7xf32>
    %522 = tpu.concatenate %520, %521 in 1 : vector<8x249xf32>, vector<8x7xf32> -> vector<8x256xf32>
    %523 = arith.andi %405, %370 : vector<8x256xi1>
    %cst_191 = arith.constant 0.000000e+00 : f32
    %524 = vector.broadcast %cst_191 : f32 to vector<8x256xf32>
    %525 = arith.select %523, %522, %524 : vector<8x256xi1>, vector<8x256xf32>
    %c128_192 = arith.constant 128 : index
    %c0_193 = arith.constant 0 : index
    %526 = vector.load %arg5[%c128_192, %c0_193] : memref<200x256xf32, #tpu.memory_space<vmem>>, vector<8x256xf32>
    tpu.vector_store %arg5[%c128_192, %c0_193], %525 {strides = array<i32>} : memref<200x256xf32, #tpu.memory_space<vmem>>, vector<8x256xf32>,
    %527 = vector.extract_strided_slice %244 {offsets = [0, 8], sizes = [8, 248], strides = [1, 1]} : vector<8x256xf32> to vector<8x248xf32>
    %528 = vector.extract_strided_slice %244 {offsets = [0, 0], sizes = [8, 8], strides = [1, 1]} : vector<8x256xf32> to vector<8x8xf32>
    %529 = tpu.concatenate %527, %528 in 1 : vector<8x248xf32>, vector<8x8xf32> -> vector<8x256xf32>
    %530 = arith.andi %405, %375 : vector<8x256xi1>
    %cst_194 = arith.constant 0.000000e+00 : f32
    %531 = vector.broadcast %cst_194 : f32 to vector<8x256xf32>
    %532 = arith.select %530, %529, %531 : vector<8x256xi1>, vector<8x256xf32>
    %c136_195 = arith.constant 136 : index
    %c0_196 = arith.constant 0 : index
    %533 = vector.load %arg5[%c136_195, %c0_196] : memref<200x256xf32, #tpu.memory_space<vmem>>, vector<8x256xf32>
    tpu.vector_store %arg5[%c136_195, %c0_196], %532 {strides = array<i32>} : memref<200x256xf32, #tpu.memory_space<vmem>>, vector<8x256xf32>,
    %534 = vector.extract_strided_slice %244 {offsets = [0, 9], sizes = [8, 247], strides = [1, 1]} : vector<8x256xf32> to vector<8x247xf32>
    %535 = vector.extract_strided_slice %244 {offsets = [0, 0], sizes = [8, 9], strides = [1, 1]} : vector<8x256xf32> to vector<8x9xf32>
    %536 = tpu.concatenate %534, %535 in 1 : vector<8x247xf32>, vector<8x9xf32> -> vector<8x256xf32>
    %537 = arith.andi %405, %380 : vector<8x256xi1>
    %cst_197 = arith.constant 0.000000e+00 : f32
    %538 = vector.broadcast %cst_197 : f32 to vector<8x256xf32>
    %539 = arith.select %537, %536, %538 : vector<8x256xi1>, vector<8x256xf32>
    %c144_198 = arith.constant 144 : index
    %c0_199 = arith.constant 0 : index
    %540 = vector.load %arg5[%c144_198, %c0_199] : memref<200x256xf32, #tpu.memory_space<vmem>>, vector<8x256xf32>
    tpu.vector_store %arg5[%c144_198, %c0_199], %539 {strides = array<i32>} : memref<200x256xf32, #tpu.memory_space<vmem>>, vector<8x256xf32>,
    %541 = vector.extract_strided_slice %244 {offsets = [0, 10], sizes = [8, 246], strides = [1, 1]} : vector<8x256xf32> to vector<8x246xf32>
    %542 = vector.extract_strided_slice %244 {offsets = [0, 0], sizes = [8, 10], strides = [1, 1]} : vector<8x256xf32> to vector<8x10xf32>
    %543 = tpu.concatenate %541, %542 in 1 : vector<8x246xf32>, vector<8x10xf32> -> vector<8x256xf32>
    %544 = arith.andi %405, %385 : vector<8x256xi1>
    %cst_200 = arith.constant 0.000000e+00 : f32
    %545 = vector.broadcast %cst_200 : f32 to vector<8x256xf32>
    %546 = arith.select %544, %543, %545 : vector<8x256xi1>, vector<8x256xf32>
    %c152_201 = arith.constant 152 : index
    %c0_202 = arith.constant 0 : index
    %547 = vector.load %arg5[%c152_201, %c0_202] : memref<200x256xf32, #tpu.memory_space<vmem>>, vector<8x256xf32>
    tpu.vector_store %arg5[%c152_201, %c0_202], %546 {strides = array<i32>} : memref<200x256xf32, #tpu.memory_space<vmem>>, vector<8x256xf32>,
    %548 = vector.extract_strided_slice %244 {offsets = [0, 14], sizes = [8, 242], strides = [1, 1]} : vector<8x256xf32> to vector<8x242xf32>
    %549 = vector.extract_strided_slice %244 {offsets = [0, 0], sizes = [8, 14], strides = [1, 1]} : vector<8x256xf32> to vector<8x14xf32>
    %550 = tpu.concatenate %548, %549 in 1 : vector<8x242xf32>, vector<8x14xf32> -> vector<8x256xf32>
    %551 = arith.andi %410, %365 : vector<8x256xi1>
    %cst_203 = arith.constant 0.000000e+00 : f32
    %552 = vector.broadcast %cst_203 : f32 to vector<8x256xf32>
    %553 = arith.select %551, %550, %552 : vector<8x256xi1>, vector<8x256xf32>
    %c160_204 = arith.constant 160 : index
    %c0_205 = arith.constant 0 : index
    %554 = vector.load %arg5[%c160_204, %c0_205] : memref<200x256xf32, #tpu.memory_space<vmem>>, vector<8x256xf32>
    tpu.vector_store %arg5[%c160_204, %c0_205], %553 {strides = array<i32>} : memref<200x256xf32, #tpu.memory_space<vmem>>, vector<8x256xf32>,
    %555 = vector.extract_strided_slice %244 {offsets = [0, 15], sizes = [8, 241], strides = [1, 1]} : vector<8x256xf32> to vector<8x241xf32>
    %556 = vector.extract_strided_slice %244 {offsets = [0, 0], sizes = [8, 15], strides = [1, 1]} : vector<8x256xf32> to vector<8x15xf32>
    %557 = tpu.concatenate %555, %556 in 1 : vector<8x241xf32>, vector<8x15xf32> -> vector<8x256xf32>
    %558 = arith.andi %410, %370 : vector<8x256xi1>
    %cst_206 = arith.constant 0.000000e+00 : f32
    %559 = vector.broadcast %cst_206 : f32 to vector<8x256xf32>
    %560 = arith.select %558, %557, %559 : vector<8x256xi1>, vector<8x256xf32>
    %c168_207 = arith.constant 168 : index
    %c0_208 = arith.constant 0 : index
    %561 = vector.load %arg5[%c168_207, %c0_208] : memref<200x256xf32, #tpu.memory_space<vmem>>, vector<8x256xf32>
    tpu.vector_store %arg5[%c168_207, %c0_208], %560 {strides = array<i32>} : memref<200x256xf32, #tpu.memory_space<vmem>>, vector<8x256xf32>,
    %562 = vector.extract_strided_slice %244 {offsets = [0, 16], sizes = [8, 240], strides = [1, 1]} : vector<8x256xf32> to vector<8x240xf32>
    %563 = vector.extract_strided_slice %244 {offsets = [0, 0], sizes = [8, 16], strides = [1, 1]} : vector<8x256xf32> to vector<8x16xf32>
    %564 = tpu.concatenate %562, %563 in 1 : vector<8x240xf32>, vector<8x16xf32> -> vector<8x256xf32>
    %565 = arith.andi %410, %375 : vector<8x256xi1>
    %cst_209 = arith.constant 0.000000e+00 : f32
    %566 = vector.broadcast %cst_209 : f32 to vector<8x256xf32>
    %567 = arith.select %565, %564, %566 : vector<8x256xi1>, vector<8x256xf32>
    %c176_210 = arith.constant 176 : index
    %c0_211 = arith.constant 0 : index
    %568 = vector.load %arg5[%c176_210, %c0_211] : memref<200x256xf32, #tpu.memory_space<vmem>>, vector<8x256xf32>
    tpu.vector_store %arg5[%c176_210, %c0_211], %567 {strides = array<i32>} : memref<200x256xf32, #tpu.memory_space<vmem>>, vector<8x256xf32>,
    %569 = vector.extract_strided_slice %244 {offsets = [0, 17], sizes = [8, 239], strides = [1, 1]} : vector<8x256xf32> to vector<8x239xf32>
    %570 = vector.extract_strided_slice %244 {offsets = [0, 0], sizes = [8, 17], strides = [1, 1]} : vector<8x256xf32> to vector<8x17xf32>
    %571 = tpu.concatenate %569, %570 in 1 : vector<8x239xf32>, vector<8x17xf32> -> vector<8x256xf32>
    %572 = arith.andi %410, %380 : vector<8x256xi1>
    %cst_212 = arith.constant 0.000000e+00 : f32
    %573 = vector.broadcast %cst_212 : f32 to vector<8x256xf32>
    %574 = arith.select %572, %571, %573 : vector<8x256xi1>, vector<8x256xf32>
    %c184_213 = arith.constant 184 : index
    %c0_214 = arith.constant 0 : index
    %575 = vector.load %arg5[%c184_213, %c0_214] : memref<200x256xf32, #tpu.memory_space<vmem>>, vector<8x256xf32>
    tpu.vector_store %arg5[%c184_213, %c0_214], %574 {strides = array<i32>} : memref<200x256xf32, #tpu.memory_space<vmem>>, vector<8x256xf32>,
    %576 = vector.extract_strided_slice %244 {offsets = [0, 18], sizes = [8, 238], strides = [1, 1]} : vector<8x256xf32> to vector<8x238xf32>
    %577 = vector.extract_strided_slice %244 {offsets = [0, 0], sizes = [8, 18], strides = [1, 1]} : vector<8x256xf32> to vector<8x18xf32>
    %578 = tpu.concatenate %576, %577 in 1 : vector<8x238xf32>, vector<8x18xf32> -> vector<8x256xf32>
    %579 = arith.andi %410, %385 : vector<8x256xi1>
    %cst_215 = arith.constant 0.000000e+00 : f32
    %580 = vector.broadcast %cst_215 : f32 to vector<8x256xf32>
    %581 = arith.select %579, %578, %580 : vector<8x256xi1>, vector<8x256xf32>
    %c192_216 = arith.constant 192 : index
    %c0_217 = arith.constant 0 : index
    %582 = vector.load %arg5[%c192_216, %c0_217] : memref<200x256xf32, #tpu.memory_space<vmem>>, vector<8x256xf32>
    tpu.vector_store %arg5[%c192_216, %c0_217], %581 {strides = array<i32>} : memref<200x256xf32, #tpu.memory_space<vmem>>, vector<8x256xf32>,
    %c0_218 = arith.constant 0 : index
    %c384 = arith.constant 384 : index
    %583 = vector.load %arg3[%c0_218, %c384] : memref<8x896xf32, #tpu.memory_space<vmem>>, vector<8x200xf32>
    %c0_219 = arith.constant 0 : index
    %c0_220 = arith.constant 0 : index
    %584 = vector.load %arg5[%c0_219, %c0_220] : memref<200x256xf32, #tpu.memory_space<vmem>>, vector<200x256xf32>
    %cst_221 = arith.constant dense<0.000000e+00> : vector<8x256xf32>
    %585 = tpu.matmul %583, %584, %cst_221 {dimension_numbers = #tpu.dot_dimension_numbers<[1], [0], [0], [1], [0, 0, 1, 1], [], []>} : vector<8x200xf32>, vector<200x256xf32>, vector<8x256xf32> -> vector<8x256xf32>
    %c0_222 = arith.constant 0 : index
    %c786 = arith.constant 786 : index
    %586 = vector.load %arg3[%c0_222, %c786] : memref<8x896xf32, #tpu.memory_space<vmem>>, vector<8x1xf32>
    %587 = vector.broadcast %586 : vector<8x1xf32> to vector<8x256xf32>
    %588 = arith.addf %585, %587 : vector<8x256xf32>
    %cst_223 = arith.constant 0.000000e+00 : f32
    %589 = vector.broadcast %cst_223 : f32 to vector<8x256xf32>
    %590 = arith.cmpf ogt, %588, %589 : vector<8x256xf32>
    %cst_224 = arith.constant 0.000000e+00 : f32
    %591 = vector.broadcast %cst_224 : f32 to vector<8x256xf32>
    %592 = arith.minimumf %588, %591 : vector<8x256xf32>
    %593 = math.exp %592 : vector<8x256xf32>
    %cst_225 = arith.constant 1.000000e+00 : f32
    %594 = vector.broadcast %cst_225 : f32 to vector<8x256xf32>
    %595 = arith.subf %593, %594 : vector<8x256xf32>
    %596 = arith.select %590, %588, %595 : vector<8x256xi1>, vector<8x256xf32>
    %597 = tpu.iota {dimensions = array<i32: 1>} : vector<8x256xi32>
    %c3_i32_226 = arith.constant 3 : i32
    %598 = vector.broadcast %c3_i32_226 : i32 to vector<8x256xi32>
    %599 = arith.andi %597, %598 : vector<8x256xi32>
    %c2_i32_227 = arith.constant 2 : i32
    %600 = vector.broadcast %c2_i32_227 : i32 to vector<8x256xi32>
    %601 = arith.shrsi %597, %600 : vector<8x256xi32>
    %c1_i32_228 = arith.constant 1 : i32
    %602 = vector.broadcast %c1_i32_228 : i32 to vector<8x256xi32>
    %603 = arith.cmpi sge, %599, %602 : vector<8x256xi32>
    %c5_i32 = arith.constant 5 : i32
    %604 = vector.broadcast %c5_i32 : i32 to vector<8x256xi32>
    %605 = arith.cmpi slt, %599, %604 : vector<8x256xi32>
    %606 = arith.andi %603, %605 : vector<8x256xi1>
    %c0_i32_229 = arith.constant 0 : i32
    %607 = vector.broadcast %c0_i32_229 : i32 to vector<8x256xi32>
    %608 = arith.cmpi sge, %599, %607 : vector<8x256xi32>
    %c4_i32_230 = arith.constant 4 : i32
    %609 = vector.broadcast %c4_i32_230 : i32 to vector<8x256xi32>
    %610 = arith.cmpi slt, %599, %609 : vector<8x256xi32>
    %611 = arith.andi %608, %610 : vector<8x256xi1>
    %c-1_i32_231 = arith.constant -1 : i32
    %612 = vector.broadcast %c-1_i32_231 : i32 to vector<8x256xi32>
    %613 = arith.cmpi sge, %599, %612 : vector<8x256xi32>
    %c3_i32_232 = arith.constant 3 : i32
    %614 = vector.broadcast %c3_i32_232 : i32 to vector<8x256xi32>
    %615 = arith.cmpi slt, %599, %614 : vector<8x256xi32>
    %616 = arith.andi %613, %615 : vector<8x256xi1>
    %c1_i32_233 = arith.constant 1 : i32
    %617 = vector.broadcast %c1_i32_233 : i32 to vector<8x256xi32>
    %618 = arith.cmpi sge, %601, %617 : vector<8x256xi32>
    %c5_i32_234 = arith.constant 5 : i32
    %619 = vector.broadcast %c5_i32_234 : i32 to vector<8x256xi32>
    %620 = arith.cmpi slt, %601, %619 : vector<8x256xi32>
    %621 = arith.andi %618, %620 : vector<8x256xi1>
    %c0_i32_235 = arith.constant 0 : i32
    %622 = vector.broadcast %c0_i32_235 : i32 to vector<8x256xi32>
    %623 = arith.cmpi sge, %601, %622 : vector<8x256xi32>
    %c4_i32_236 = arith.constant 4 : i32
    %624 = vector.broadcast %c4_i32_236 : i32 to vector<8x256xi32>
    %625 = arith.cmpi slt, %601, %624 : vector<8x256xi32>
    %626 = arith.andi %623, %625 : vector<8x256xi1>
    %c-1_i32_237 = arith.constant -1 : i32
    %627 = vector.broadcast %c-1_i32_237 : i32 to vector<8x256xi32>
    %628 = arith.cmpi sge, %601, %627 : vector<8x256xi32>
    %c3_i32_238 = arith.constant 3 : i32
    %629 = vector.broadcast %c3_i32_238 : i32 to vector<8x256xi32>
    %630 = arith.cmpi slt, %601, %629 : vector<8x256xi32>
    %631 = arith.andi %628, %630 : vector<8x256xi1>
    %632 = vector.extract_strided_slice %355 {offsets = [0, 251], sizes = [8, 5], strides = [1, 1]} : vector<8x256xf32> to vector<8x5xf32>
    %633 = vector.extract_strided_slice %355 {offsets = [0, 0], sizes = [8, 251], strides = [1, 1]} : vector<8x256xf32> to vector<8x251xf32>
    %634 = tpu.concatenate %632, %633 in 1 : vector<8x5xf32>, vector<8x251xf32> -> vector<8x256xf32>
    %635 = arith.andi %621, %606 : vector<8x256xi1>
    %cst_239 = arith.constant 0.000000e+00 : f32
    %636 = vector.broadcast %cst_239 : f32 to vector<8x256xf32>
    %637 = arith.select %635, %634, %636 : vector<8x256xi1>, vector<8x256xf32>
    %c0_240 = arith.constant 0 : index
    %c0_241 = arith.constant 0 : index
    %638 = vector.load %arg5[%c0_240, %c0_241] : memref<200x256xf32, #tpu.memory_space<vmem>>, vector<8x256xf32>
    tpu.vector_store %arg5[%c0_240, %c0_241], %637 {strides = array<i32>} : memref<200x256xf32, #tpu.memory_space<vmem>>, vector<8x256xf32>,
    %639 = vector.extract_strided_slice %355 {offsets = [0, 252], sizes = [8, 4], strides = [1, 1]} : vector<8x256xf32> to vector<8x4xf32>
    %640 = vector.extract_strided_slice %355 {offsets = [0, 0], sizes = [8, 252], strides = [1, 1]} : vector<8x256xf32> to vector<8x252xf32>
    %641 = tpu.concatenate %639, %640 in 1 : vector<8x4xf32>, vector<8x252xf32> -> vector<8x256xf32>
    %642 = arith.andi %621, %611 : vector<8x256xi1>
    %cst_242 = arith.constant 0.000000e+00 : f32
    %643 = vector.broadcast %cst_242 : f32 to vector<8x256xf32>
    %644 = arith.select %642, %641, %643 : vector<8x256xi1>, vector<8x256xf32>
    %c8_243 = arith.constant 8 : index
    %c0_244 = arith.constant 0 : index
    %645 = vector.load %arg5[%c8_243, %c0_244] : memref<200x256xf32, #tpu.memory_space<vmem>>, vector<8x256xf32>
    tpu.vector_store %arg5[%c8_243, %c0_244], %644 {strides = array<i32>} : memref<200x256xf32, #tpu.memory_space<vmem>>, vector<8x256xf32>,
    %646 = vector.extract_strided_slice %355 {offsets = [0, 253], sizes = [8, 3], strides = [1, 1]} : vector<8x256xf32> to vector<8x3xf32>
    %647 = vector.extract_strided_slice %355 {offsets = [0, 0], sizes = [8, 253], strides = [1, 1]} : vector<8x256xf32> to vector<8x253xf32>
    %648 = tpu.concatenate %646, %647 in 1 : vector<8x3xf32>, vector<8x253xf32> -> vector<8x256xf32>
    %649 = arith.andi %621, %616 : vector<8x256xi1>
    %cst_245 = arith.constant 0.000000e+00 : f32
    %650 = vector.broadcast %cst_245 : f32 to vector<8x256xf32>
    %651 = arith.select %649, %648, %650 : vector<8x256xi1>, vector<8x256xf32>
    %c16_246 = arith.constant 16 : index
    %c0_247 = arith.constant 0 : index
    %652 = vector.load %arg5[%c16_246, %c0_247] : memref<200x256xf32, #tpu.memory_space<vmem>>, vector<8x256xf32>
    tpu.vector_store %arg5[%c16_246, %c0_247], %651 {strides = array<i32>} : memref<200x256xf32, #tpu.memory_space<vmem>>, vector<8x256xf32>,
    %653 = vector.extract_strided_slice %355 {offsets = [0, 255], sizes = [8, 1], strides = [1, 1]} : vector<8x256xf32> to vector<8x1xf32>
    %654 = vector.extract_strided_slice %355 {offsets = [0, 0], sizes = [8, 255], strides = [1, 1]} : vector<8x256xf32> to vector<8x255xf32>
    %655 = tpu.concatenate %653, %654 in 1 : vector<8x1xf32>, vector<8x255xf32> -> vector<8x256xf32>
    %656 = arith.andi %626, %606 : vector<8x256xi1>
    %cst_248 = arith.constant 0.000000e+00 : f32
    %657 = vector.broadcast %cst_248 : f32 to vector<8x256xf32>
    %658 = arith.select %656, %655, %657 : vector<8x256xi1>, vector<8x256xf32>
    %c24_249 = arith.constant 24 : index
    %c0_250 = arith.constant 0 : index
    %659 = vector.load %arg5[%c24_249, %c0_250] : memref<200x256xf32, #tpu.memory_space<vmem>>, vector<8x256xf32>
    tpu.vector_store %arg5[%c24_249, %c0_250], %658 {strides = array<i32>} : memref<200x256xf32, #tpu.memory_space<vmem>>, vector<8x256xf32>,
    %660 = arith.andi %626, %611 : vector<8x256xi1>
    %cst_251 = arith.constant 0.000000e+00 : f32
    %661 = vector.broadcast %cst_251 : f32 to vector<8x256xf32>
    %662 = arith.select %660, %355, %661 : vector<8x256xi1>, vector<8x256xf32>
    %c32_252 = arith.constant 32 : index
    %c0_253 = arith.constant 0 : index
    %663 = vector.load %arg5[%c32_252, %c0_253] : memref<200x256xf32, #tpu.memory_space<vmem>>, vector<8x256xf32>
    tpu.vector_store %arg5[%c32_252, %c0_253], %662 {strides = array<i32>} : memref<200x256xf32, #tpu.memory_space<vmem>>, vector<8x256xf32>,
    %664 = vector.extract_strided_slice %355 {offsets = [0, 1], sizes = [8, 255], strides = [1, 1]} : vector<8x256xf32> to vector<8x255xf32>
    %665 = vector.extract_strided_slice %355 {offsets = [0, 0], sizes = [8, 1], strides = [1, 1]} : vector<8x256xf32> to vector<8x1xf32>
    %666 = tpu.concatenate %664, %665 in 1 : vector<8x255xf32>, vector<8x1xf32> -> vector<8x256xf32>
    %667 = arith.andi %626, %616 : vector<8x256xi1>
    %cst_254 = arith.constant 0.000000e+00 : f32
    %668 = vector.broadcast %cst_254 : f32 to vector<8x256xf32>
    %669 = arith.select %667, %666, %668 : vector<8x256xi1>, vector<8x256xf32>
    %c40_255 = arith.constant 40 : index
    %c0_256 = arith.constant 0 : index
    %670 = vector.load %arg5[%c40_255, %c0_256] : memref<200x256xf32, #tpu.memory_space<vmem>>, vector<8x256xf32>
    tpu.vector_store %arg5[%c40_255, %c0_256], %669 {strides = array<i32>} : memref<200x256xf32, #tpu.memory_space<vmem>>, vector<8x256xf32>,
    %671 = vector.extract_strided_slice %355 {offsets = [0, 3], sizes = [8, 253], strides = [1, 1]} : vector<8x256xf32> to vector<8x253xf32>
    %672 = vector.extract_strided_slice %355 {offsets = [0, 0], sizes = [8, 3], strides = [1, 1]} : vector<8x256xf32> to vector<8x3xf32>
    %673 = tpu.concatenate %671, %672 in 1 : vector<8x253xf32>, vector<8x3xf32> -> vector<8x256xf32>
    %674 = arith.andi %631, %606 : vector<8x256xi1>
    %cst_257 = arith.constant 0.000000e+00 : f32
    %675 = vector.broadcast %cst_257 : f32 to vector<8x256xf32>
    %676 = arith.select %674, %673, %675 : vector<8x256xi1>, vector<8x256xf32>
    %c48_258 = arith.constant 48 : index
    %c0_259 = arith.constant 0 : index
    %677 = vector.load %arg5[%c48_258, %c0_259] : memref<200x256xf32, #tpu.memory_space<vmem>>, vector<8x256xf32>
    tpu.vector_store %arg5[%c48_258, %c0_259], %676 {strides = array<i32>} : memref<200x256xf32, #tpu.memory_space<vmem>>, vector<8x256xf32>,
    %678 = vector.extract_strided_slice %355 {offsets = [0, 4], sizes = [8, 252], strides = [1, 1]} : vector<8x256xf32> to vector<8x252xf32>
    %679 = vector.extract_strided_slice %355 {offsets = [0, 0], sizes = [8, 4], strides = [1, 1]} : vector<8x256xf32> to vector<8x4xf32>
    %680 = tpu.concatenate %678, %679 in 1 : vector<8x252xf32>, vector<8x4xf32> -> vector<8x256xf32>
    %681 = arith.andi %631, %611 : vector<8x256xi1>
    %cst_260 = arith.constant 0.000000e+00 : f32
    %682 = vector.broadcast %cst_260 : f32 to vector<8x256xf32>
    %683 = arith.select %681, %680, %682 : vector<8x256xi1>, vector<8x256xf32>
    %c56_261 = arith.constant 56 : index
    %c0_262 = arith.constant 0 : index
    %684 = vector.load %arg5[%c56_261, %c0_262] : memref<200x256xf32, #tpu.memory_space<vmem>>, vector<8x256xf32>
    tpu.vector_store %arg5[%c56_261, %c0_262], %683 {strides = array<i32>} : memref<200x256xf32, #tpu.memory_space<vmem>>, vector<8x256xf32>,
    %685 = vector.extract_strided_slice %355 {offsets = [0, 5], sizes = [8, 251], strides = [1, 1]} : vector<8x256xf32> to vector<8x251xf32>
    %686 = vector.extract_strided_slice %355 {offsets = [0, 0], sizes = [8, 5], strides = [1, 1]} : vector<8x256xf32> to vector<8x5xf32>
    %687 = tpu.concatenate %685, %686 in 1 : vector<8x251xf32>, vector<8x5xf32> -> vector<8x256xf32>
    %688 = arith.andi %631, %616 : vector<8x256xi1>
    %cst_263 = arith.constant 0.000000e+00 : f32
    %689 = vector.broadcast %cst_263 : f32 to vector<8x256xf32>
    %690 = arith.select %688, %687, %689 : vector<8x256xi1>, vector<8x256xf32>
    %c64_264 = arith.constant 64 : index
    %c0_265 = arith.constant 0 : index
    %691 = vector.load %arg5[%c64_264, %c0_265] : memref<200x256xf32, #tpu.memory_space<vmem>>, vector<8x256xf32>
    tpu.vector_store %arg5[%c64_264, %c0_265], %690 {strides = array<i32>} : memref<200x256xf32, #tpu.memory_space<vmem>>, vector<8x256xf32>,
    %c0_266 = arith.constant 0 : index
    %c640 = arith.constant 640 : index
    %692 = vector.load %arg3[%c0_266, %c640] : memref<8x896xf32, #tpu.memory_space<vmem>>, vector<8x72xf32>
    %c0_267 = arith.constant 0 : index
    %c0_268 = arith.constant 0 : index
    %693 = vector.load %arg5[%c0_267, %c0_268] : memref<200x256xf32, #tpu.memory_space<vmem>>, vector<72x256xf32>
    %cst_269 = arith.constant dense<0.000000e+00> : vector<8x256xf32>
    %694 = tpu.matmul %692, %693, %cst_269 {dimension_numbers = #tpu.dot_dimension_numbers<[1], [0], [0], [1], [0, 0, 1, 1], [], []>} : vector<8x72xf32>, vector<72x256xf32>, vector<8x256xf32> -> vector<8x256xf32>
    %c0_270 = arith.constant 0 : index
    %c787 = arith.constant 787 : index
    %695 = vector.load %arg3[%c0_270, %c787] : memref<8x896xf32, #tpu.memory_space<vmem>>, vector<8x1xf32>
    %696 = vector.broadcast %695 : vector<8x1xf32> to vector<8x256xf32>
    %697 = arith.addf %694, %696 : vector<8x256xf32>
    %cst_271 = arith.constant 0.000000e+00 : f32
    %698 = vector.broadcast %cst_271 : f32 to vector<8x256xf32>
    %699 = arith.cmpf ogt, %697, %698 : vector<8x256xf32>
    %cst_272 = arith.constant 0.000000e+00 : f32
    %700 = vector.broadcast %cst_272 : f32 to vector<8x256xf32>
    %701 = arith.minimumf %697, %700 : vector<8x256xf32>
    %702 = math.exp %701 : vector<8x256xf32>
    %cst_273 = arith.constant 1.000000e+00 : f32
    %703 = vector.broadcast %cst_273 : f32 to vector<8x256xf32>
    %704 = arith.subf %702, %703 : vector<8x256xf32>
    %705 = arith.select %699, %697, %704 : vector<8x256xi1>, vector<8x256xf32>
    %c512 = arith.constant 512 : index
    %c0_274 = arith.constant 0 : index
    %706 = vector.load %arg2[%c512, %c0_274] : memref<1024x256xf32, #tpu.memory_space<vmem>>, vector<256x256xf32>
    %cst_275 = arith.constant dense<0.000000e+00> : vector<8x256xf32>
    %707 = tpu.matmul %705, %706, %cst_275 {dimension_numbers = #tpu.dot_dimension_numbers<[1], [0], [0], [1], [0, 0, 1, 1], [], []>} : vector<8x256xf32>, vector<256x256xf32>, vector<8x256xf32> -> vector<8x256xf32>
    %708 = arith.addf %596, %707 : vector<8x256xf32>
    %c768 = arith.constant 768 : index
    %c0_276 = arith.constant 0 : index
    %709 = vector.load %arg2[%c768, %c0_276] : memref<1024x256xf32, #tpu.memory_space<vmem>>, vector<256x256xf32>
    %cst_277 = arith.constant dense<0.000000e+00> : vector<8x256xf32>
    %710 = tpu.matmul %708, %709, %cst_277 {dimension_numbers = #tpu.dot_dimension_numbers<[1], [0], [0], [1], [0, 0, 1, 1], [], []>} : vector<8x256xf32>, vector<256x256xf32>, vector<8x256xf32> -> vector<8x256xf32>
    %c0_278 = arith.constant 0 : index
    %c768_279 = arith.constant 768 : index
    %711 = vector.load %arg3[%c0_278, %c768_279] : memref<8x896xf32, #tpu.memory_space<vmem>>, vector<8x8xf32>
    %cst_280 = arith.constant dense<0.000000e+00> : vector<8x256xf32>
    %712 = tpu.matmul %711, %1, %cst_280 {dimension_numbers = #tpu.dot_dimension_numbers<[1], [0], [0], [1], [0, 0, 1, 1], [], []>} : vector<8x8xf32>, vector<8x256xf32>, vector<8x256xf32> -> vector<8x256xf32>
    %c0_281 = arith.constant 0 : index
    %c788 = arith.constant 788 : index
    %713 = vector.load %arg3[%c0_281, %c788] : memref<8x896xf32, #tpu.memory_space<vmem>>, vector<8x1xf32>
    %714 = vector.broadcast %713 : vector<8x1xf32> to vector<8x256xf32>
    %715 = arith.addf %712, %714 : vector<8x256xf32>
    %cst_282 = arith.constant 0.000000e+00 : f32
    %716 = vector.broadcast %cst_282 : f32 to vector<8x256xf32>
    %717 = arith.cmpf ogt, %715, %716 : vector<8x256xf32>
    %cst_283 = arith.constant 0.000000e+00 : f32
    %718 = vector.broadcast %cst_283 : f32 to vector<8x256xf32>
    %719 = arith.minimumf %715, %718 : vector<8x256xf32>
    %720 = math.exp %719 : vector<8x256xf32>
    %cst_284 = arith.constant 1.000000e+00 : f32
    %721 = vector.broadcast %cst_284 : f32 to vector<8x256xf32>
    %722 = arith.subf %720, %721 : vector<8x256xf32>
    %723 = arith.select %717, %715, %722 : vector<8x256xi1>, vector<8x256xf32>
    %cst_285 = arith.constant 3.906250e-03 : f32
    %724 = vector.broadcast %cst_285 : f32 to vector<256x1xf32>
    %cst_286 = arith.constant dense<0.000000e+00> : vector<8x1xf32>
    %725 = tpu.matmul %1, %724, %cst_286 {dimension_numbers = #tpu.dot_dimension_numbers<[1], [0], [0], [1], [0, 0, 1, 1], [], []>} : vector<8x256xf32>, vector<256x1xf32>, vector<8x1xf32> -> vector<8x1xf32>
    %c0_287 = arith.constant 0 : index
    %c776 = arith.constant 776 : index
    %726 = vector.load %arg3[%c0_287, %c776] : memref<8x896xf32, #tpu.memory_space<vmem>>, vector<8x8xf32>
    %cst_288 = arith.constant dense<0.000000e+00> : vector<8x1xf32>
    %727 = tpu.matmul %726, %725, %cst_288 {dimension_numbers = #tpu.dot_dimension_numbers<[1], [0], [0], [1], [0, 0, 1, 1], [], []>} : vector<8x8xf32>, vector<8x1xf32>, vector<8x1xf32> -> vector<8x1xf32>
    %728 = arith.mulf %723, %710 : vector<8x256xf32>
    %729 = vector.broadcast %727 : vector<8x1xf32> to vector<8x256xf32>
    %730 = arith.addf %728, %729 : vector<8x256xf32>
    %c0_289 = arith.constant 0 : index
    %c0_290 = arith.constant 0 : index
    %c0_291 = arith.constant 0 : index
    %731 = vector.load %arg4[%c0_289, %c0_290, %c0_291] : memref<1x8x256xf32, #tpu.memory_space<vmem>>, vector<1x8x256xf32>
    %732 = vector.shape_cast %731 : vector<1x8x256xf32> to vector<8x256xf32>
    %733 = vector.shape_cast %730 : vector<8x256xf32> to vector<1x8x256xf32>
    tpu.vector_store %arg4[%c0_289, %c0_290, %c0_291], %733 {strides = array<i32>} : memref<1x8x256xf32, #tpu.memory_space<vmem>>, vector<1x8x256xf32>,
    return
  }
  func.func @transform_0(%arg0: i32) -> (i32, i32, i32) {
    %c0_i32 = arith.constant 0 : i32
    %c0_i32_0 = arith.constant 0 : i32
    %c0_i32_1 = arith.constant 0 : i32
    return %arg0, %c0_i32, %c0_i32_0 : i32, i32, i32
  }
  func.func @transform_1(%arg0: i32) -> (i32, i32) {
    %c0_i32 = arith.constant 0 : i32
    %c0_i32_0 = arith.constant 0 : i32
    %c0_i32_1 = arith.constant 0 : i32
    return %c0_i32, %c0_i32_0 : i32, i32
  }
  func.func @transform_2(%arg0: i32) -> (i32, i32) {
    %c0_i32 = arith.constant 0 : i32
    %c0_i32_0 = arith.constant 0 : i32
    %c0_i32_1 = arith.constant 0 : i32
    return %c0_i32, %c0_i32_0 : i32, i32
  }
  func.func @transform_3(%arg0: i32) -> (i32, i32, i32) {
    %c0_i32 = arith.constant 0 : i32
    %c0_i32_0 = arith.constant 0 : i32
    %c0_i32_1 = arith.constant 0 : i32
    return %arg0, %c0_i32, %c0_i32_0 : i32, i32, i32
  }
}

</mosaic_0001>

<llo_original>
// kernel: fpav2_forward.1
$region0: #{fpav2_forward.1}
  #allocation0 [shape = 'u32[]', space=smem, size = 0x4, offset = 0x4, fixed_abs, tag = 'smem constant byte address 0x4 - core index']
  #allocation1 [shape = 'u32[72,128]{1,0:T(1,128)}', space=vmem, size = 0x9000, scoped, tag = 'internal scratch']
  #allocation2 [shape = 'f32[200,256]{1,0:T(8,128)}', space=vmem, size = 0x32000, scoped, tag = 'scratch operand']
  %s0 = inlined_call_operand.vmem [shape: f32[2,8,256], index: 0, kind: input, shape index: {}]
  %s1 = inlined_call_operand.hbm [shape: f32[1024,256], index: 1, kind: input, shape index: {}]
  %s2 = inlined_call_operand.vmem [shape: f32[8,896], index: 2, kind: input, shape index: {}]
  %s3 = inlined_call_operand.vmem [shape: f32[2,8,256], index: 3, kind: output, shape index: {}]
  %s4 = sld [smem:[#allocation0]]
  $region49: #{fpav2_forward.1} parent=0
    _
  %s6 = ssub.s32 1, %s4
  %s7 = scalar_select 0, %s6, %s4
  $region1: #{fpav2_forward.1} parent=0
    #allocation3 [shape = 'u8[1048576]{0}', space=vmem, size = 0x100000, scoped, tag = 'input window, operand 1, single buffered']
    #allocation4 [shape = 's32[2]{0}', space=sflag, size = 0x8, scoped, tag = 'scoped memory for fpav2_forward.1']
    %8 = vsyncpa [#allocation4], 0
    loop: start=0, step=1, limit=4
    $region2: #{fpav2_forward.1} parent=1 // loop_pre_header
      _
    $region3: #{fpav2_forward.1} parent=1 // loop_header
      %s10 = sphi 0, %s14
      %p11 = scmp.ge.s32.totalorder %s10, 4
      %s20 = sphi 0, %s22
      %s23 = sphi 0, %s20
      %s24 = sphi 0, %s23
      %s40 = sphi 0, %s24
      %s44 = sphi 0, %s44
      %s46 = sphi 0, %s44
      %s47 = sphi 0, %s46
      %s61 = sphi 0, %s47
      %s65 = sphi 0, %s65
      %s67 = sphi 0, %s65
      %s68 = sphi 0, %s67
      %s82 = sphi 0, %s68
      %s88 = sphi 0, %s90
      %s91 = sphi 0, %s88
      %s92 = sphi 0, %s91
      %s108 = sphi 0, %s92
    $region4: #{fpav2_forward.1} parent=1 // loop_header_branch
      %13 = sbr.rel (%p11) target = $region8
    $region5: #{fpav2_forward.1} parent=1 // loop_body
      %s15 = ssub.s32 %s10, 1
      %s16 = ssub.s32 %s10, 2
      %s17 = sadd.s32 %s10, 1
      %s18 = ssub.s32 %s10, %s17
      %p19 = scmp.eq.s32.totalorder %s18, 0
      %s21 = sadd.s32 %s20, 1
      %s22 = scalar_select %p19, %s20, %s21
      %p25 = pneg %p19
      %p26 = scmp.eq.s32.totalorder %s10, 1
      %p27 = por %p25, %p26
      %p28 = scmp.ne.s32.totalorder %s20, %s23
      %p29 = scmp.eq.s32.totalorder %s10, 0
      %p30 = por %p28, %p29
      %p31 = scmp.ne.s32.totalorder %s20, %s23
      %p32 = scmp.eq.s32.totalorder %s15, 1
      %p33 = por %p31, %p32
      %p34 = scmp.ne.s32.totalorder %s23, %s24
      %p35 = scmp.eq.s32.totalorder %s15, 0
      %p36 = por %p34, %p35
      %p37 = scmp.ne.s32.totalorder %s23, %s24
      %p38 = scmp.eq.s32.totalorder %s16, 1
      %p39 = por %p37, %p38
      %p41 = scmp.ne.s32.totalorder %s24, %s40
      %p42 = scmp.eq.s32.totalorder %s16, 0
      %p43 = por %p41, %p42
      %s45 = sadd.s32 %s44, 1
      %p48 = scmp.eq.s32.totalorder %s10, 1
      %p49 = scmp.ne.s32.totalorder %s44, %s46
      %p50 = scmp.eq.s32.totalorder %s10, 0
      %p51 = por %p49, %p50
      %p52 = scmp.ne.s32.totalorder %s44, %s46
      %p53 = scmp.eq.s32.totalorder %s15, 1
      %p54 = por %p52, %p53
      %p55 = scmp.ne.s32.totalorder %s46, %s47
      %p56 = scmp.eq.s32.totalorder %s15, 0
      %p57 = por %p55, %p56
      %p58 = scmp.ne.s32.totalorder %s46, %s47
      %p59 = scmp.eq.s32.totalorder %s16, 1
      %p60 = por %p58, %p59
      %p62 = scmp.ne.s32.totalorder %s47, %s61
      %p63 = scmp.eq.s32.totalorder %s16, 0
      %p64 = por %p62, %p63
      %s66 = sadd.s32 %s65, 1
      %p69 = scmp.eq.s32.totalorder %s10, 1
      %p70 = scmp.ne.s32.totalorder %s65, %s67
      %p71 = scmp.eq.s32.totalorder %s10, 0
      %p72 = por %p70, %p71
      %p73 = scmp.ne.s32.totalorder %s65, %s67
      %p74 = scmp.eq.s32.totalorder %s15, 1
      %p75 = por %p73, %p74
      %p76 = scmp.ne.s32.totalorder %s67, %s68
      %p77 = scmp.eq.s32.totalorder %s15, 0
      %p78 = por %p76, %p77
      %p79 = scmp.ne.s32.totalorder %s67, %s68
      %p80 = scmp.eq.s32.totalorder %s16, 1
      %p81 = por %p79, %p80
      %p83 = scmp.ne.s32.totalorder %s68, %s82
      %p84 = scmp.eq.s32.totalorder %s16, 0
      %p85 = por %p83, %p84
      %s86 = ssub.s32 %s10, %s17
      %p87 = scmp.eq.s32.totalorder %s86, 0
      %s89 = sadd.s32 %s88, 1
      %s90 = scalar_select %p87, %s88, %s89
      %p93 = pneg %p87
      %p94 = scmp.eq.s32.totalorder %s10, 1
      %p95 = por %p93, %p94
      %p96 = scmp.ne.s32.totalorder %s88, %s91
      %p97 = scmp.eq.s32.totalorder %s10, 0
      %p98 = por %p96, %p97
      %p99 = scmp.ne.s32.totalorder %s88, %s91
      %p100 = scmp.eq.s32.totalorder %s15, 1
      %p101 = por %p99, %p100
      %p102 = scmp.ne.s32.totalorder %s91, %s92
      %p103 = scmp.eq.s32.totalorder %s15, 0
      %p104 = por %p102, %p103
      %p105 = scmp.ne.s32.totalorder %s91, %s92
      %p106 = scmp.eq.s32.totalorder %s16, 1
      %p107 = por %p105, %p106
      %p109 = scmp.ne.s32.totalorder %s92, %s108
      %p110 = scmp.eq.s32.totalorder %s16, 0
      %p111 = por %p109, %p110
      %p112 = scmp.le.s32.totalorder 1, %s10
      %p113 = scmp.lt.s32.totalorder %s10, 3
      %p114 = pnand %p112, %p113
      %p115 = pneg %p114
      // Predicated region
      $region9: #{fpav2_forward.1} parent=5 // pred_check
        _
      $region10: #{fpav2_forward.1} parent=5 // pred_check_branch
        %117 = sbr.rel (%p114) target = $region12
      $region11: #{fpav2_forward.1} parent=5 // pred_region
        %s118 = ssub.s32 %s10, 1
        // Predicated region
        $region13: #{fpav2_forward.1} parent=11 // pred_check
          %p119 = pneg %p57
        $region14: #{fpav2_forward.1} parent=11 // pred_check_branch
          %121 = sbr.rel (%p119) target = $region16
        $region15: #{fpav2_forward.1} parent=11 // pred_region
          %123 = vsyncadd [#allocation4], 0
          %s124 = sshll.u32 %s1, 4
          %s125 = int_to_ptr.hbm [resolvable:$true] %s124
          %s126 = sshll.u32 [#allocation3], 4
          %s127 = int_to_ptr.vmem [resolvable:$true] %s126
          %132 = dma.hbm_to_vmem [thread:$0]  %s125, 32768, %s127, [#allocation4], 256, 256, 16
        $region16: #{fpav2_forward.1} parent=11 // pred_fallthru
          _
        // Predicated region
        $region17: #{fpav2_forward.1} parent=11 // pred_check
          %p133 = pneg %p78
        $region18: #{fpav2_forward.1} parent=11 // pred_check_branch
          %135 = sbr.rel (%p133) target = $region20
        $region19: #{fpav2_forward.1} parent=11 // pred_region
          _
        $region20: #{fpav2_forward.1} parent=11 // pred_fallthru
          _
      $region12: #{fpav2_forward.1} parent=5 // pred_fallthru
        _
      %p136 = scmp.lt.s32.totalorder %s10, 2
      // Predicated region
      $region21: #{fpav2_forward.1} parent=5 // pred_check
        %p137 = pneg %p136
      $region22: #{fpav2_forward.1} parent=5 // pred_check_branch
        %139 = sbr.rel (%p137) target = $region24
      $region23: #{fpav2_forward.1} parent=5 // pred_region
        // Predicated region
        $region25: #{fpav2_forward.1} parent=23 // pred_check
          %p140 = pneg %p30
        $region26: #{fpav2_forward.1} parent=23 // pred_check_branch
          %142 = sbr.rel (%p140) target = $region28
        $region27: #{fpav2_forward.1} parent=23 // pred_region
          %p143 = scmp.lt.s32.totalorder %s10, 1
          %s144 = scalar_select %p143, %s10, 1
          %s145 = smul.addr %s144, 2
          %s146 = smul.addr %s145, 8
          %s147 = scalar_lea.vmem %s0, %s146
        $region28: #{fpav2_forward.1} parent=23 // pred_fallthru
          _
      $region24: #{fpav2_forward.1} parent=5 // pred_fallthru
        _
      %p148 = scmp.le.s32.totalorder 1, %s10
      %p149 = scmp.lt.s32.totalorder %s10, 3
      %p150 = pnand %p148, %p149
      %p151 = pneg %p150
      // Predicated region
      $region29: #{fpav2_forward.1} parent=5 // pred_check
        _
      $region30: #{fpav2_forward.1} parent=5 // pred_check_branch
        %153 = sbr.rel (%p150) target = $region32
      $region31: #{fpav2_forward.1} parent=5 // pred_region
        %s154 = ssub.s32 %s10, 1
        // Predicated region
        $region33: #{fpav2_forward.1} parent=31 // pred_check
          %p155 = pneg %p57
        $region34: #{fpav2_forward.1} parent=31 // pred_check_branch
          %157 = sbr.rel (%p155) target = $region36
        $region35: #{fpav2_forward.1} parent=31 // pred_region
          %159 = dma.done [#allocation4], 32768
        $region36: #{fpav2_forward.1} parent=31 // pred_fallthru
          _
        %p160 = scmp.lt.s32.totalorder %s15, 1
        %s161 = scalar_select %p160, %s15, 1
        %s162 = smul.addr %s161, 2
        %s163 = smul.addr %s162, 8
        %s164 = scalar_lea.vmem %s0, %s163
        %p165 = pneg %p36
        %p166 = pneg %p33
        %p167 = pneg %p57
        %p168 = pneg %p54
        %p169 = pneg %p78
        %p170 = pneg %p75
        %p171 = pneg %p104
        %p172 = pneg %p101
        %p173 = scmp.lt.s32.totalorder %s15, 1
        %s174 = scalar_select %p173, %s15, 1
        %s175 = smul.addr %s174, 2
        %s176 = smul.addr %s175, 8
        %s177 = scalar_lea.vmem %s3, %s176
        %p178 = scmp.lt.s32.totalorder %s15, 1
        %s179 = scalar_select %p178, %s15, 1
        %s180 = smul.addr %s179, 2
        %s181 = smul.addr %s180, 8
        %s182 = scalar_lea.vmem %s0, %s181
        %p183 = scmp.lt.s32.totalorder %s15, 1
        %s184 = scalar_select %p183, %s15, 1
        %s185 = smul.addr %s184, 2
        %s186 = smul.addr %s185, 8
        %s187 = scalar_lea.vmem %s3, %s186
        %v188 = vld [vmem:[%s182] sm:$0xff]
        %v189 = vld [vmem:[%s182 + $0x8] sm:$0xff]
        %v190 = vlaneseq
        %v191 = vand.u32 %v190, 127
        %v192 = vadd.s32 %v191, 128
        %v193 = vand.u32 %v191, 15
        %v194 = vand.u32 %v192, 15
        %v195 = vshra.s32 %v191, 4
        %v196 = vshra.s32 %v192, 4
        %vm197 = vcmp.ge.s32.totalorder %v193, 2
        %vm198 = vcmp.ge.s32.totalorder %v194, 2
        %vm199 = vcmp.lt.s32.totalorder %v193, 18
        %vm200 = vcmp.lt.s32.totalorder %v194, 18
        %vm201 = vmand %vm197, %vm199
        %vm202 = vmand %vm198, %vm200
        %vm203 = vcmp.ge.s32.totalorder %v193, 1
        %vm204 = vcmp.ge.s32.totalorder %v194, 1
        %vm205 = vcmp.lt.s32.totalorder %v193, 17
        %vm206 = vcmp.lt.s32.totalorder %v194, 17
        %vm207 = vmand %vm203, %vm205
        %vm208 = vmand %vm204, %vm206
        %vm209 = vcmp.ge.s32.totalorder %v193, 0
        %vm210 = vcmp.ge.s32.totalorder %v194, 0
        %vm211 = vcmp.lt.s32.totalorder %v193, 16
        %vm212 = vcmp.lt.s32.totalorder %v194, 16
        %vm213 = vmand %vm209, %vm211
        %vm214 = vmand %vm210, %vm212
        %vm215 = vcmp.ge.s32.totalorder %v193, 4294967295
        %vm216 = vcmp.ge.s32.totalorder %v194, 4294967295
        %vm217 = vcmp.lt.s32.totalorder %v193, 15
        %vm218 = vcmp.lt.s32.totalorder %v194, 15
        %vm219 = vmand %vm215, %vm217
        %vm220 = vmand %vm216, %vm218
        %vm221 = vcmp.ge.s32.totalorder %v193, 4294967294
        %vm222 = vcmp.ge.s32.totalorder %v194, 4294967294
        %vm223 = vcmp.lt.s32.totalorder %v193, 14
        %vm224 = vcmp.lt.s32.totalorder %v194, 14
        %vm225 = vmand %vm221, %vm223
        %vm226 = vmand %vm222, %vm224
        %vm227 = vcmp.ge.s32.totalorder %v195, 2
        %vm228 = vcmp.ge.s32.totalorder %v196, 2
        %vm229 = vcmp.lt.s32.totalorder %v195, 18
        %vm230 = vcmp.lt.s32.totalorder %v196, 18
        %vm231 = vmand %vm227, %vm229
        %vm232 = vmand %vm228, %vm230
        %vm233 = vcmp.ge.s32.totalorder %v195, 1
        %vm234 = vcmp.ge.s32.totalorder %v196, 1
        %vm235 = vcmp.lt.s32.totalorder %v195, 17
        %vm236 = vcmp.lt.s32.totalorder %v196, 17
        %vm237 = vmand %vm233, %vm235
        %vm238 = vmand %vm234, %vm236
        %vm239 = vcmp.ge.s32.totalorder %v195, 0
        %vm240 = vcmp.ge.s32.totalorder %v196, 0
        %vm241 = vcmp.lt.s32.totalorder %v195, 16
        %vm242 = vcmp.lt.s32.totalorder %v196, 16
        %vm243 = vmand %vm239, %vm241
        %vm244 = vmand %vm240, %vm242
        %vm245 = vcmp.ge.s32.totalorder %v195, 4294967295
        %vm246 = vcmp.ge.s32.totalorder %v196, 4294967295
        %vm247 = vcmp.lt.s32.totalorder %v195, 15
        %vm248 = vcmp.lt.s32.totalorder %v196, 15
        %vm249 = vmand %vm245, %vm247
        %vm250 = vmand %vm246, %vm248
        %vm251 = vcmp.ge.s32.totalorder %v195, 4294967294
        %vm252 = vcmp.ge.s32.totalorder %v196, 4294967294
        %vm253 = vcmp.lt.s32.totalorder %v195, 14
        %vm254 = vcmp.lt.s32.totalorder %v196, 14
        %vm255 = vmand %vm251, %vm253
        %vm256 = vmand %vm252, %vm254
        %258 = vrot.lane.b32.xlu0 %v189, 34
        %v259 = vpop.permute.xlu0 %258
        %262 = vrot.lane.b32.xlu0 %v188, 34
        %v263 = vpop.permute.xlu0 %262
        %vm264 = vcmask 277504
        %v265 = vsel %vm264, %v263, %v259
        %v268 = vsel %vm264, %v259, %v263
        %vm269 = vmand %vm231, %vm201
        %vm270 = vmand %vm232, %vm202
        %v271 = vsel %vm269, %v268, 0.0
        %v272 = vsel %vm270, %v265, 0.0
        %273 = vst [vmem:[#allocation2] sm:$0xff] %v271
        %274 = vst [vmem:[#allocation2 + $0x8] sm:$0xff] %v272
        %275 = vrot.lane.b32.xlu0 %v189, 33
        %v276 = vpop.permute.xlu0 %275
        %278 = vrot.lane.b32.xlu0 %v188, 33
        %v279 = vpop.permute.xlu0 %278
        %vm280 = vcmask 269312
        %v281 = vsel %vm280, %v279, %v276
        %v284 = vsel %vm280, %v276, %v279
        %vm285 = vmand %vm231, %vm207
        %vm286 = vmand %vm232, %vm208
        %v287 = vsel %vm285, %v284, 0.0
        %v288 = vsel %vm286, %v281, 0.0
        %289 = vst [vmem:[#allocation2 + $0x10] sm:$0xff] %v287
        %290 = vst [vmem:[#allocation2 + $0x18] sm:$0xff] %v288
        %291 = vrot.lane.b32.xlu0 %v189, 32
        %v292 = vpop.permute.xlu0 %291
        %294 = vrot.lane.b32.xlu0 %v188, 32
        %v295 = vpop.permute.xlu0 %294
        %vm296 = vcmask 261120
        %v297 = vsel %vm296, %v295, %v292
        %v300 = vsel %vm296, %v292, %v295
        %vm301 = vmand %vm231, %vm213
        %vm302 = vmand %vm232, %vm214
        %v303 = vsel %vm301, %v300, 0.0
        %v304 = vsel %vm302, %v297, 0.0
        %305 = vst [vmem:[#allocation2 + $0x20] sm:$0xff] %v303
        %306 = vst [vmem:[#allocation2 + $0x28] sm:$0xff] %v304
        %307 = vrot.lane.b32.xlu0 %v189, 31
        %v308 = vpop.permute.xlu0 %307
        %310 = vrot.lane.b32.xlu0 %v188, 31
        %v311 = vpop.permute.xlu0 %310
        %vm312 = vcmask 252928
        %v313 = vsel %vm312, %v311, %v308
        %v316 = vsel %vm312, %v308, %v311
        %vm317 = vmand %vm231, %vm219
        %vm318 = vmand %vm232, %vm220
        %v319 = vsel %vm317, %v316, 0.0
        %v320 = vsel %vm318, %v313, 0.0
        %321 = vst [vmem:[#allocation2 + $0x30] sm:$0xff] %v319
        %322 = vst [vmem:[#allocation2 + $0x38] sm:$0xff] %v320
        %323 = vrot.lane.b32.xlu0 %v189, 30
        %v324 = vpop.permute.xlu0 %323
        %326 = vrot.lane.b32.xlu0 %v188, 30
        %v327 = vpop.permute.xlu0 %326
        %vm328 = vcmask 244736
        %v329 = vsel %vm328, %v327, %v324
        %v332 = vsel %vm328, %v324, %v327
        %vm333 = vmand %vm231, %vm225
        %vm334 = vmand %vm232, %vm226
        %v335 = vsel %vm333, %v332, 0.0
        %v336 = vsel %vm334, %v329, 0.0
        %337 = vst [vmem:[#allocation2 + $0x40] sm:$0xff] %v335
        %338 = vst [vmem:[#allocation2 + $0x48] sm:$0xff] %v336
        %339 = vrot.lane.b32.xlu0 %v189, 18
        %v340 = vpop.permute.xlu0 %339
        %342 = vrot.lane.b32.xlu0 %v188, 18
        %v343 = vpop.permute.xlu0 %342
        %vm344 = vcmask 146432
        %v345 = vsel %vm344, %v343, %v340
        %v348 = vsel %vm344, %v340, %v343
        %vm349 = vmand %vm237, %vm201
        %vm350 = vmand %vm238, %vm202
        %v351 = vsel %vm349, %v348, 0.0
        %v352 = vsel %vm350, %v345, 0.0
        %353 = vst [vmem:[#allocation2 + $0x50] sm:$0xff] %v351
        %354 = vst [vmem:[#allocation2 + $0x58] sm:$0xff] %v352
        %355 = vrot.lane.b32.xlu0 %v189, 17
        %v356 = vpop.permute.xlu0 %355
        %358 = vrot.lane.b32.xlu0 %v188, 17
        %v359 = vpop.permute.xlu0 %358
        %vm360 = vcmask 138240
        %v361 = vsel %vm360, %v359, %v356
        %v364 = vsel %vm360, %v356, %v359
        %vm365 = vmand %vm237, %vm207
        %vm366 = vmand %vm238, %vm208
        %v367 = vsel %vm365, %v364, 0.0
        %v368 = vsel %vm366, %v361, 0.0
        %369 = vst [vmem:[#allocation2 + $0x60] sm:$0xff] %v367
        %370 = vst [vmem:[#allocation2 + $0x68] sm:$0xff] %v368
        %371 = vrot.lane.b32.xlu0 %v189, 16
        %v372 = vpop.permute.xlu0 %371
        %374 = vrot.lane.b32.xlu0 %v188, 16
        %v375 = vpop.permute.xlu0 %374
        %vm376 = vcmask 130048
        %v377 = vsel %vm376, %v375, %v372
        %v380 = vsel %vm376, %v372, %v375
        %vm381 = vmand %vm237, %vm213
        %vm382 = vmand %vm238, %vm214
        %v383 = vsel %vm381, %v380, 0.0
        %v384 = vsel %vm382, %v377, 0.0
        %385 = vst [vmem:[#allocation2 + $0x70] sm:$0xff] %v383
        %386 = vst [vmem:[#allocation2 + $0x78] sm:$0xff] %v384
        %387 = vrot.lane.b32.xlu0 %v189, 15
        %v388 = vpop.permute.xlu0 %387
        %390 = vrot.lane.b32.xlu0 %v188, 15
        %v391 = vpop.permute.xlu0 %390
        %vm392 = vcmask 121856
        %v393 = vsel %vm392, %v391, %v388
        %v396 = vsel %vm392, %v388, %v391
        %vm397 = vmand %vm237, %vm219
        %vm398 = vmand %vm238, %vm220
        %v399 = vsel %vm397, %v396, 0.0
        %v400 = vsel %vm398, %v393, 0.0
        %401 = vst [vmem:[#allocation2 + $0x80] sm:$0xff] %v399
        %402 = vst [vmem:[#allocation2 + $0x88] sm:$0xff] %v400
        %403 = vrot.lane.b32.xlu0 %v189, 14
        %v404 = vpop.permute.xlu0 %403
        %406 = vrot.lane.b32.xlu0 %v188, 14
        %v407 = vpop.permute.xlu0 %406
        %vm408 = vcmask 113664
        %v409 = vsel %vm408, %v407, %v404
        %v412 = vsel %vm408, %v404, %v407
        %vm413 = vmand %vm237, %vm225
        %vm414 = vmand %vm238, %vm226
        %v415 = vsel %vm413, %v412, 0.0
        %v416 = vsel %vm414, %v409, 0.0
        %417 = vst [vmem:[#allocation2 + $0x90] sm:$0xff] %v415
        %418 = vst [vmem:[#allocation2 + $0x98] sm:$0xff] %v416
        %419 = vrot.lane.b32.xlu0 %v189, 2
        %v420 = vpop.permute.xlu0 %419
        %422 = vrot.lane.b32.xlu0 %v188, 2
        %v423 = vpop.permute.xlu0 %422
        %vm424 = vcmask 15360
        %v425 = vsel %vm424, %v423, %v420
        %v428 = vsel %vm424, %v420, %v423
        %vm429 = vmand %vm243, %vm201
        %vm430 = vmand %vm244, %vm202
        %v431 = vsel %vm429, %v428, 0.0
        %v432 = vsel %vm430, %v425, 0.0
        %433 = vst [vmem:[#allocation2 + $0xa0] sm:$0xff] %v431
        %434 = vst [vmem:[#allocation2 + $0xa8] sm:$0xff] %v432
        %435 = vrot.lane.b32.xlu0 %v189, 1
        %v436 = vpop.permute.xlu0 %435
        %438 = vrot.lane.b32.xlu0 %v188, 1
        %v439 = vpop.permute.xlu0 %438
        %vm440 = vcmask 7168
        %v441 = vsel %vm440, %v439, %v436
        %v444 = vsel %vm440, %v436, %v439
        %vm445 = vmand %vm243, %vm207
        %vm446 = vmand %vm244, %vm208
        %v447 = vsel %vm445, %v444, 0.0
        %v448 = vsel %vm446, %v441, 0.0
        %449 = vst [vmem:[#allocation2 + $0xb0] sm:$0xff] %v447
        %450 = vst [vmem:[#allocation2 + $0xb8] sm:$0xff] %v448
        %vm451 = vmand %vm243, %vm213
        %vm452 = vmand %vm244, %vm214
        %v453 = vsel %vm451, %v188, 0.0
        %v454 = vsel %vm452, %v189, 0.0
        %455 = vst [vmem:[#allocation2 + $0xc0] sm:$0xff] %v453
        %456 = vst [vmem:[#allocation2 + $0xc8] sm:$0xff] %v454
        %457 = vrot.lane.b32.xlu0 %v188, 127
        %v458 = vpop.permute.xlu0 %457
        %459 = vrot.lane.b32.xlu0 %v189, 127
        %v460 = vpop.permute.xlu0 %459
        %vm461 = vcmask 1039360
        %v462 = vsel %vm461, %v458, %v460
        %v466 = vsel %vm461, %v460, %v458
        %vm467 = vmand %vm243, %vm219
        %vm468 = vmand %vm244, %vm220
        %v469 = vsel %vm467, %v462, 0.0
        %v470 = vsel %vm468, %v466, 0.0
        %471 = vst [vmem:[#allocation2 + $0xd0] sm:$0xff] %v469
        %472 = vst [vmem:[#allocation2 + $0xd8] sm:$0xff] %v470
        %473 = vrot.lane.b32.xlu0 %v188, 126
        %v474 = vpop.permute.xlu0 %473
        %475 = vrot.lane.b32.xlu0 %v189, 126
        %v476 = vpop.permute.xlu0 %475
        %vm477 = vcmask 1031168
        %v478 = vsel %vm477, %v474, %v476
        %v482 = vsel %vm477, %v476, %v474
        %vm483 = vmand %vm243, %vm225
        %vm484 = vmand %vm244, %vm226
        %v485 = vsel %vm483, %v478, 0.0
        %v486 = vsel %vm484, %v482, 0.0
        %487 = vst [vmem:[#allocation2 + $0xe0] sm:$0xff] %v485
        %488 = vst [vmem:[#allocation2 + $0xe8] sm:$0xff] %v486
        %489 = vrot.lane.b32.xlu0 %v188, 114
        %v490 = vpop.permute.xlu0 %489
        %491 = vrot.lane.b32.xlu0 %v189, 114
        %v492 = vpop.permute.xlu0 %491
        %vm493 = vcmask 932864
        %v494 = vsel %vm493, %v490, %v492
        %v498 = vsel %vm493, %v492, %v490
        %vm499 = vmand %vm249, %vm201
        %vm500 = vmand %vm250, %vm202
        %v501 = vsel %vm499, %v494, 0.0
        %v502 = vsel %vm500, %v498, 0.0
        %503 = vst [vmem:[#allocation2 + $0xf0] sm:$0xff] %v501
        %504 = vst [vmem:[#allocation2 + $0xf8] sm:$0xff] %v502
        %505 = vrot.lane.b32.xlu0 %v188, 113
        %v506 = vpop.permute.xlu0 %505
        %507 = vrot.lane.b32.xlu0 %v189, 113
        %v508 = vpop.permute.xlu0 %507
        %vm509 = vcmask 924672
        %v510 = vsel %vm509, %v506, %v508
        %v514 = vsel %vm509, %v508, %v506
        %vm515 = vmand %vm249, %vm207
        %vm516 = vmand %vm250, %vm208
        %v517 = vsel %vm515, %v510, 0.0
        %v518 = vsel %vm516, %v514, 0.0
        %519 = vst [vmem:[#allocation2 + $0x100] sm:$0xff] %v517
        %520 = vst [vmem:[#allocation2 + $0x108] sm:$0xff] %v518
        %521 = vrot.lane.b32.xlu0 %v188, 112
        %v522 = vpop.permute.xlu0 %521
        %523 = vrot.lane.b32.xlu0 %v189, 112
        %v524 = vpop.permute.xlu0 %523
        %vm525 = vcmask 916480
        %v526 = vsel %vm525, %v522, %v524
        %v530 = vsel %vm525, %v524, %v522
        %vm531 = vmand %vm249, %vm213
        %vm532 = vmand %vm250, %vm214
        %v533 = vsel %vm531, %v526, 0.0
        %v534 = vsel %vm532, %v530, 0.0
        %535 = vst [vmem:[#allocation2 + $0x110] sm:$0xff] %v533
        %536 = vst [vmem:[#allocation2 + $0x118] sm:$0xff] %v534
        %537 = vrot.lane.b32.xlu0 %v188, 111
        %v538 = vpop.permute.xlu0 %537
        %539 = vrot.lane.b32.xlu0 %v189, 111
        %v540 = vpop.permute.xlu0 %539
        %vm541 = vcmask 908288
        %v542 = vsel %vm541, %v538, %v540
        %v546 = vsel %vm541, %v540, %v538
        %vm547 = vmand %vm249, %vm219
        %vm548 = vmand %vm250, %vm220
        %v549 = vsel %vm547, %v542, 0.0
        %v550 = vsel %vm548, %v546, 0.0
        %551 = vst [vmem:[#allocation2 + $0x120] sm:$0xff] %v549
        %552 = vst [vmem:[#allocation2 + $0x128] sm:$0xff] %v550
        %553 = vrot.lane.b32.xlu0 %v188, 110
        %v554 = vpop.permute.xlu0 %553
        %555 = vrot.lane.b32.xlu0 %v189, 110
        %v556 = vpop.permute.xlu0 %555
        %vm557 = vcmask 900096
        %v558 = vsel %vm557, %v554, %v556
        %v562 = vsel %vm557, %v556, %v554
        %vm563 = vmand %vm249, %vm225
        %vm564 = vmand %vm250, %vm226
        %v565 = vsel %vm563, %v558, 0.0
        %v566 = vsel %vm564, %v562, 0.0
        %567 = vst [vmem:[#allocation2 + $0x130] sm:$0xff] %v565
        %568 = vst [vmem:[#allocation2 + $0x138] sm:$0xff] %v566
        %569 = vrot.lane.b32.xlu0 %v188, 98
        %v570 = vpop.permute.xlu0 %569
        %571 = vrot.lane.b32.xlu0 %v189, 98
        %v572 = vpop.permute.xlu0 %571
        %vm573 = vcmask 801792
        %v574 = vsel %vm573, %v570, %v572
        %v578 = vsel %vm573, %v572, %v570
        %vm579 = vmand %vm255, %vm201
        %vm580 = vmand %vm256, %vm202
        %v581 = vsel %vm579, %v574, 0.0
        %v582 = vsel %vm580, %v578, 0.0
        %583 = vst [vmem:[#allocation2 + $0x140] sm:$0xff] %v581
        %584 = vst [vmem:[#allocation2 + $0x148] sm:$0xff] %v582
        %585 = vrot.lane.b32.xlu0 %v188, 97
        %v586 = vpop.permute.xlu0 %585
        %587 = vrot.lane.b32.xlu0 %v189, 97
        %v588 = vpop.permute.xlu0 %587
        %vm589 = vcmask 793600
        %v590 = vsel %vm589, %v586, %v588
        %v594 = vsel %vm589, %v588, %v586
        %vm595 = vmand %vm255, %vm207
        %vm596 = vmand %vm256, %vm208
        %v597 = vsel %vm595, %v590, 0.0
        %v598 = vsel %vm596, %v594, 0.0
        %599 = vst [vmem:[#allocation2 + $0x150] sm:$0xff] %v597
        %600 = vst [vmem:[#allocation2 + $0x158] sm:$0xff] %v598
        %601 = vrot.lane.b32.xlu0 %v188, 96
        %v602 = vpop.permute.xlu0 %601
        %603 = vrot.lane.b32.xlu0 %v189, 96
        %v604 = vpop.permute.xlu0 %603
        %vm605 = vcmask 785408
        %v606 = vsel %vm605, %v602, %v604
        %v610 = vsel %vm605, %v604, %v602
        %vm611 = vmand %vm255, %vm213
        %vm612 = vmand %vm256, %vm214
        %v613 = vsel %vm611, %v606, 0.0
        %v614 = vsel %vm612, %v610, 0.0
        %615 = vst [vmem:[#allocation2 + $0x160] sm:$0xff] %v613
        %616 = vst [vmem:[#allocation2 + $0x168] sm:$0xff] %v614
        %617 = vrot.lane.b32.xlu0 %v188, 95
        %v618 = vpop.permute.xlu0 %617
        %619 = vrot.lane.b32.xlu0 %v189, 95
        %v620 = vpop.permute.xlu0 %619
        %vm621 = vcmask 777216
        %v622 = vsel %vm621, %v618, %v620
        %v626 = vsel %vm621, %v620, %v618
        %vm627 = vmand %vm255, %vm219
        %vm628 = vmand %vm256, %vm220
        %v629 = vsel %vm627, %v622, 0.0
        %v630 = vsel %vm628, %v626, 0.0
        %631 = vst [vmem:[#allocation2 + $0x170] sm:$0xff] %v629
        %632 = vst [vmem:[#allocation2 + $0x178] sm:$0xff] %v630
        %633 = vrot.lane.b32.xlu0 %v188, 94
        %v634 = vpop.permute.xlu0 %633
        %635 = vrot.lane.b32.xlu0 %v189, 94
        %v636 = vpop.permute.xlu0 %635
        %vm637 = vcmask 769024
        %v638 = vsel %vm637, %v634, %v636
        %v642 = vsel %vm637, %v636, %v634
        %vm643 = vmand %vm255, %vm225
        %vm644 = vmand %vm256, %vm226
        %v645 = vsel %vm643, %v638, 0.0
        %v646 = vsel %vm644, %v642, 0.0
        %647 = vst [vmem:[#allocation2 + $0x180] sm:$0xff] %v645
        %648 = vst [vmem:[#allocation2 + $0x188] sm:$0xff] %v646
        %v649 = vld [vmem:[%s2] sm:$0xff]
        %v650 = vld [vmem:[%s2 + $0x8] sm:$0xff]
        %v651 = vld [vmem:[#allocation2] sm:$0xff]
        %v652 = vld [vmem:[#allocation2 + $0x8] sm:$0xff]
        %v653 = vld [vmem:[#allocation2 + $0x10] sm:$0xff]
        %v654 = vld [vmem:[#allocation2 + $0x18] sm:$0xff]
        %v655 = vld [vmem:[#allocation2 + $0x20] sm:$0xff]
        %v656 = vld [vmem:[#allocation2 + $0x28] sm:$0xff]
        %v657 = vld [vmem:[#allocation2 + $0x30] sm:$0xff]
        %v658 = vld [vmem:[#allocation2 + $0x38] sm:$0xff]
        %v659 = vld [vmem:[#allocation2 + $0x40] sm:$0xff]
        %v660 = vld [vmem:[#allocation2 + $0x48] sm:$0xff]
        %v661 = vld [vmem:[#allocation2 + $0x50] sm:$0xff]
        %v662 = vld [vmem:[#allocation2 + $0x58] sm:$0xff]
        %v663 = vld [vmem:[#allocation2 + $0x60] sm:$0xff]
        %v664 = vld [vmem:[#allocation2 + $0x68] sm:$0xff]
        %v665 = vld [vmem:[#allocation2 + $0x70] sm:$0xff]
        %v666 = vld [vmem:[#allocation2 + $0x78] sm:$0xff]
        %v667 = vld [vmem:[#allocation2 + $0x80] sm:$0xff]
        %v668 = vld [vmem:[#allocation2 + $0x88] sm:$0xff]
        %v669 = vld [vmem:[#allocation2 + $0x90] sm:$0xff]
        %v670 = vld [vmem:[#allocation2 + $0x98] sm:$0xff]
        %v671 = vld [vmem:[#allocation2 + $0xa0] sm:$0xff]
        %v672 = vld [vmem:[#allocation2 + $0xa8] sm:$0xff]
        %v673 = vld [vmem:[#allocation2 + $0xb0] sm:$0xff]
        %v674 = vld [vmem:[#allocation2 + $0xb8] sm:$0xff]
        %v675 = vld [vmem:[#allocation2 + $0xc0] sm:$0xff]
        %v676 = vld [vmem:[#allocation2 + $0xc8] sm:$0xff]
        %v677 = vld [vmem:[#allocation2 + $0xd0] sm:$0xff]
        %v678 = vld [vmem:[#allocation2 + $0xd8] sm:$0xff]
        %v679 = vld [vmem:[#allocation2 + $0xe0] sm:$0xff]
        %v680 = vld [vmem:[#allocation2 + $0xe8] sm:$0xff]
        %v681 = vld [vmem:[#allocation2 + $0xf0] sm:$0xff]
        %v682 = vld [vmem:[#allocation2 + $0xf8] sm:$0xff]
        %v683 = vld [vmem:[#allocation2 + $0x100] sm:$0xff]
        %v684 = vld [vmem:[#allocation2 + $0x108] sm:$0xff]
        %v685 = vld [vmem:[#allocation2 + $0x110] sm:$0xff]
        %v686 = vld [vmem:[#allocation2 + $0x118] sm:$0xff]
        %v687 = vld [vmem:[#allocation2 + $0x120] sm:$0xff]
        %v688 = vld [vmem:[#allocation2 + $0x128] sm:$0xff]
        %v689 = vld [vmem:[#allocation2 + $0x130] sm:$0xff]
        %v690 = vld [vmem:[#allocation2 + $0x138] sm:$0xff]
        %v691 = vld [vmem:[#allocation2 + $0x140] sm:$0xff]
        %v692 = vld [vmem:[#allocation2 + $0x148] sm:$0xff]
        %v693 = vld [vmem:[#allocation2 + $0x150] sm:$0xff]
        %v694 = vld [vmem:[#allocation2 + $0x158] sm:$0xff]
        %v695 = vld [vmem:[#allocation2 + $0x160] sm:$0xff]
        %v696 = vld [vmem:[#allocation2 + $0x168] sm:$0xff]
        %v697 = vld [vmem:[#allocation2 + $0x170] sm:$0xff]
        %v698 = vld [vmem:[#allocation2 + $0x178] sm:$0xff]
        %v699 = vld [vmem:[#allocation2 + $0x180] sm:$0xff]
        %v700 = vld [vmem:[#allocation2 + $0x188] sm:$0xff]
        %vm701 = vcmask 588800
        %v703 = vsel %vm701, %v650, 0
        %705 = vmatpush.msra.mxu0 %v681
        %706 = vmatpush.msra.mxu0 %v679
        %707 = vmatpush.msra.mxu0 %v677
        %708 = vmatpush.msra.mxu0 %v675
        %709 = vmatpush.msra.mxu0 %v673
        %710 = vmatpush.msra.mxu0 %v671
        %711 = vmatpush.msra.mxu0 %v669
        %712 = vmatpush.msra.mxu0 %v667
        %713 = vmatpush.msra.mxu0 %v665
        %714 = vmatpush.msra.mxu0 %v663
        %715 = vmatpush.msra.mxu0 %v661
        %716 = vmatpush.msra.mxu0 %v659
        %717 = vmatpush.msra.mxu0 %v657
        %718 = vmatpush.msra.mxu0 %v655
        %719 = vmatpush.msra.mxu0 %v653
        %720 = vmatpush.msra.mxu0 %v651
        %721 = vmatmul.f32.gmra.mxu0 %v649
        %v722 = vpop.f32.mrf.mxu0
        %v723 = vadd.f32 0.0, %v722
        %724 = vdwg.mxu0
        %725 = vmatpush.msra.mxu0 0.0
        %726 = vmatpush.msra.mxu0 0.0
        %727 = vmatpush.msra.mxu0 0.0
        %728 = vmatpush.msra.mxu0 0.0
        %729 = vmatpush.msra.mxu0 0.0
        %730 = vmatpush.msra.mxu0 0.0
        %731 = vmatpush.msra.mxu0 0.0
        %732 = vmatpush.msra.mxu0 %v699
        %733 = vmatpush.msra.mxu0 %v697
        %734 = vmatpush.msra.mxu0 %v695
        %735 = vmatpush.msra.mxu0 %v693
        %736 = vmatpush.msra.mxu0 %v691
        %737 = vmatpush.msra.mxu0 %v689
        %738 = vmatpush.msra.mxu0 %v687
        %739 = vmatpush.msra.mxu0 %v685
        %740 = vmatpush.msra.mxu0 %v683
        %741 = vmatmul.f32.gmra.mxu0 %v703
        %v742 = vpop.f32.mrf.mxu0
        %v743 = vadd.f32 %v723, %v742
        %744 = vdwg.mxu0
        %745 = vmatpush.msra.mxu0 %v682
        %746 = vmatpush.msra.mxu0 %v680
        %747 = vmatpush.msra.mxu0 %v678
        %748 = vmatpush.msra.mxu0 %v676
        %749 = vmatpush.msra.mxu0 %v674
        %750 = vmatpush.msra.mxu0 %v672
        %751 = vmatpush.msra.mxu0 %v670
        %752 = vmatpush.msra.mxu0 %v668
        %753 = vmatpush.msra.mxu0 %v666
        %754 = vmatpush.msra.mxu0 %v664
        %755 = vmatpush.msra.mxu0 %v662
        %756 = vmatpush.msra.mxu0 %v660
        %757 = vmatpush.msra.mxu0 %v658
        %758 = vmatpush.msra.mxu0 %v656
        %759 = vmatpush.msra.mxu0 %v654
        %760 = vmatpush.msra.mxu0 %v652
        %761 = vmatmul.f32.gmra.mxu0 %v649
        %v762 = vpop.f32.mrf.mxu0
        %v763 = vadd.f32 0.0, %v762
        %764 = vdwg.mxu0
        %765 = vmatpush.msra.mxu0 0.0
        %766 = vmatpush.msra.mxu0 0.0
        %767 = vmatpush.msra.mxu0 0.0
        %768 = vmatpush.msra.mxu0 0.0
        %769 = vmatpush.msra.mxu0 0.0
        %770 = vmatpush.msra.mxu0 0.0
        %771 = vmatpush.msra.mxu0 0.0
        %772 = vmatpush.msra.mxu0 %v700
        %773 = vmatpush.msra.mxu0 %v698
        %774 = vmatpush.msra.mxu0 %v696
        %775 = vmatpush.msra.mxu0 %v694
        %776 = vmatpush.msra.mxu0 %v692
        %777 = vmatpush.msra.mxu0 %v690
        %778 = vmatpush.msra.mxu0 %v688
        %779 = vmatpush.msra.mxu0 %v686
        %780 = vmatpush.msra.mxu0 %v684
        %781 = vmatmul.f32.gmra.mxu0 %v703
        %v782 = vpop.f32.mrf.mxu0
        %v783 = vadd.f32 %v763, %v782
        %784 = vdwg.mxu0
        %v785 = vld [vmem:[#allocation3] sm:$0xff]
        %v786 = vld [vmem:[#allocation3 + $0x8] sm:$0xff]
        %v787 = vld [vmem:[#allocation3 + $0x10] sm:$0xff]
        %v788 = vld [vmem:[#allocation3 + $0x18] sm:$0xff]
        %v789 = vld [vmem:[#allocation3 + $0x20] sm:$0xff]
        %v790 = vld [vmem:[#allocation3 + $0x28] sm:$0xff]
        %v791 = vld [vmem:[#allocation3 + $0x30] sm:$0xff]
        %v792 = vld [vmem:[#allocation3 + $0x38] sm:$0xff]
        %v793 = vld [vmem:[#allocation3 + $0x40] sm:$0xff]
        %v794 = vld [vmem:[#allocation3 + $0x48] sm:$0xff]
        %v795 = vld [vmem:[#allocation3 + $0x50] sm:$0xff]
        %v796 = vld [vmem:[#allocation3 + $0x58] sm:$0xff]
        %v797 = vld [vmem:[#allocation3 + $0x60] sm:$0xff]
        %v798 = vld [vmem:[#allocation3 + $0x68] sm:$0xff]
        %v799 = vld [vmem:[#allocation3 + $0x70] sm:$0xff]
        %v800 = vld [vmem:[#allocation3 + $0x78] sm:$0xff]
        %v801 = vld [vmem:[#allocation3 + $0x80] sm:$0xff]
        %v802 = vld [vmem:[#allocation3 + $0x88] sm:$0xff]
        %v803 = vld [vmem:[#allocation3 + $0x90] sm:$0xff]
        %v804 = vld [vmem:[#allocation3 + $0x98] sm:$0xff]
        %v805 = vld [vmem:[#allocation3 + $0xa0] sm:$0xff]
        %v806 = vld [vmem:[#allocation3 + $0xa8] sm:$0xff]
        %v807 = vld [vmem:[#allocation3 + $0xb0] sm:$0xff]
        %v808 = vld [vmem:[#allocation3 + $0xb8] sm:$0xff]
        %v809 = vld [vmem:[#allocation3 + $0xc0] sm:$0xff]
        %v810 = vld [vmem:[#allocation3 + $0xc8] sm:$0xff]
        %v811 = vld [vmem:[#allocation3 + $0xd0] sm:$0xff]
        %v812 = vld [vmem:[#allocation3 + $0xd8] sm:$0xff]
        %v813 = vld [vmem:[#allocation3 + $0xe0] sm:$0xff]
        %v814 = vld [vmem:[#allocation3 + $0xe8] sm:$0xff]
        %v815 = vld [vmem:[#allocation3 + $0xf0] sm:$0xff]
        %v816 = vld [vmem:[#allocation3 + $0xf8] sm:$0xff]
        %v817 = vld [vmem:[#allocation3 + $0x100] sm:$0xff]
        %v818 = vld [vmem:[#allocation3 + $0x108] sm:$0xff]
        %v819 = vld [vmem:[#allocation3 + $0x110] sm:$0xff]
        %v820 = vld [vmem:[#allocation3 + $0x118] sm:$0xff]
        %v821 = vld [vmem:[#allocation3 + $0x120] sm:$0xff]
        %v822 = vld [vmem:[#allocation3 + $0x128] sm:$0xff]
        %v823 = vld [vmem:[#allocation3 + $0x130] sm:$0xff]
        %v824 = vld [vmem:[#allocation3 + $0x138] sm:$0xff]
        %v825 = vld [vmem:[#allocation3 + $0x140] sm:$0xff]
        %v826 = vld [vmem:[#allocation3 + $0x148] sm:$0xff]
        %v827 = vld [vmem:[#allocation3 + $0x150] sm:$0xff]
        %v828 = vld [vmem:[#allocation3 + $0x158] sm:$0xff]
        %v829 = vld [vmem:[#allocation3 + $0x160] sm:$0xff]
        %v830 = vld [vmem:[#allocation3 + $0x168] sm:$0xff]
        %v831 = vld [vmem:[#allocation3 + $0x170] sm:$0xff]
        %v832 = vld [vmem:[#allocation3 + $0x178] sm:$0xff]
        %v833 = vld [vmem:[#allocation3 + $0x180] sm:$0xff]
        %v834 = vld [vmem:[#allocation3 + $0x188] sm:$0xff]
        %v835 = vld [vmem:[#allocation3 + $0x190] sm:$0xff]
        %v836 = vld [vmem:[#allocation3 + $0x198] sm:$0xff]
        %v837 = vld [vmem:[#allocation3 + $0x1a0] sm:$0xff]
        %v838 = vld [vmem:[#allocation3 + $0x1a8] sm:$0xff]
        %v839 = vld [vmem:[#allocation3 + $0x1b0] sm:$0xff]
        %v840 = vld [vmem:[#allocation3 + $0x1b8] sm:$0xff]
        %v841 = vld [vmem:[#allocation3 + $0x1c0] sm:$0xff]
        %v842 = vld [vmem:[#allocation3 + $0x1c8] sm:$0xff]
        %v843 = vld [vmem:[#allocation3 + $0x1d0] sm:$0xff]
        %v844 = vld [vmem:[#allocation3 + $0x1d8] sm:$0xff]
        %v845 = vld [vmem:[#allocation3 + $0x1e0] sm:$0xff]
        %v846 = vld [vmem:[#allocation3 + $0x1e8] sm:$0xff]
        %v847 = vld [vmem:[#allocation3 + $0x1f0] sm:$0xff]
        %v848 = vld [vmem:[#allocation3 + $0x1f8] sm:$0xff]
        %v849 = vld [vmem:[%s2 + $0x30] sm:$0xff]
        %851 = vset.pattern.permute.xlu0 16
        %852 = vperm.xlu0 %851, %v849
        %v853 = vpop.permute.xlu0 %852
        %855 = vmatpush.msra.mxu0 %v815
        %856 = vmatpush.msra.mxu0 %v813
        %857 = vmatpush.msra.mxu0 %v811
        %858 = vmatpush.msra.mxu0 %v809
        %859 = vmatpush.msra.mxu0 %v807
        %860 = vmatpush.msra.mxu0 %v805
        %861 = vmatpush.msra.mxu0 %v803
        %862 = vmatpush.msra.mxu0 %v801
        %863 = vmatpush.msra.mxu0 %v799
        %864 = vmatpush.msra.mxu0 %v797
        %865 = vmatpush.msra.mxu0 %v795
        %866 = vmatpush.msra.mxu0 %v793
        %867 = vmatpush.msra.mxu0 %v791
        %868 = vmatpush.msra.mxu0 %v789
        %869 = vmatpush.msra.mxu0 %v787
        %870 = vmatpush.msra.mxu0 %v785
        %871 = vmatmul.f32.gmra.mxu0 %v743
        %v872 = vpop.f32.mrf.mxu0
        %v873 = vadd.f32 %v853, %v872
        %874 = vdwg.mxu0
        %875 = vmatpush.msra.mxu0 %v847
        %876 = vmatpush.msra.mxu0 %v845
        %877 = vmatpush.msra.mxu0 %v843
        %878 = vmatpush.msra.mxu0 %v841
        %879 = vmatpush.msra.mxu0 %v839
        %880 = vmatpush.msra.mxu0 %v837
        %881 = vmatpush.msra.mxu0 %v835
        %882 = vmatpush.msra.mxu0 %v833
        %883 = vmatpush.msra.mxu0 %v831
        %884 = vmatpush.msra.mxu0 %v829
        %885 = vmatpush.msra.mxu0 %v827
        %886 = vmatpush.msra.mxu0 %v825
        %887 = vmatpush.msra.mxu0 %v823
        %888 = vmatpush.msra.mxu0 %v821
        %889 = vmatpush.msra.mxu0 %v819
        %890 = vmatpush.msra.mxu0 %v817
        %891 = vmatmul.f32.gmra.mxu0 %v783
        %v892 = vpop.f32.mrf.mxu0
        %v893 = vadd.f32 %v873, %v892
        %894 = vdwg.mxu0
        %895 = vmatpush.msra.mxu0 %v816
        %896 = vmatpush.msra.mxu0 %v814
        %897 = vmatpush.msra.mxu0 %v812
        %898 = vmatpush.msra.mxu0 %v810
        %899 = vmatpush.msra.mxu0 %v808
        %900 = vmatpush.msra.mxu0 %v806
        %901 = vmatpush.msra.mxu0 %v804
        %902 = vmatpush.msra.mxu0 %v802
        %903 = vmatpush.msra.mxu0 %v800
        %904 = vmatpush.msra.mxu0 %v798
        %905 = vmatpush.msra.mxu0 %v796
        %906 = vmatpush.msra.mxu0 %v794
        %907 = vmatpush.msra.mxu0 %v792
        %908 = vmatpush.msra.mxu0 %v790
        %909 = vmatpush.msra.mxu0 %v788
        %910 = vmatpush.msra.mxu0 %v786
        %911 = vmatmul.f32.gmra.mxu0 %v743
        %v912 = vpop.f32.mrf.mxu0
        %v913 = vadd.f32 %v853, %v912
        %914 = vdwg.mxu0
        %915 = vmatpush.msra.mxu0 %v848
        %916 = vmatpush.msra.mxu0 %v846
        %917 = vmatpush.msra.mxu0 %v844
        %918 = vmatpush.msra.mxu0 %v842
        %919 = vmatpush.msra.mxu0 %v840
        %920 = vmatpush.msra.mxu0 %v838
        %921 = vmatpush.msra.mxu0 %v836
        %922 = vmatpush.msra.mxu0 %v834
        %923 = vmatpush.msra.mxu0 %v832
        %924 = vmatpush.msra.mxu0 %v830
        %925 = vmatpush.msra.mxu0 %v828
        %926 = vmatpush.msra.mxu0 %v826
        %927 = vmatpush.msra.mxu0 %v824
        %928 = vmatpush.msra.mxu0 %v822
        %929 = vmatpush.msra.mxu0 %v820
        %930 = vmatpush.msra.mxu0 %v818
        %931 = vmatmul.f32.gmra.mxu0 %v783
        %v932 = vpop.f32.mrf.mxu0
        %v933 = vadd.f32 %v913, %v932
        %934 = vdwg.mxu0
        %vm935 = vcmp.gt.f32.partialorder %v893, 0.0
        %vm936 = vcmp.gt.f32.partialorder %v933, 0.0
        %v937 = vmin.f32 %v893, 0.0
        %v938 = vmin.f32 %v933, 0.0
        %v939 = vmul.f32 %v937, 1.442695
        %v940 = vpow.pop %v939
        %v941 = vmul.f32 %v938, 1.442695
        %v942 = vpow.pop %v941
        %v943 = vsub.f32 %v940, 1.0
        %v944 = vsub.f32 %v942, 1.0
        %v945 = vsel %vm935, %v893, %v943
        %v946 = vsel %vm936, %v933, %v944
        %v947 = vand.u32 %v191, 7
        %v948 = vand.u32 %v192, 7
        %v949 = vshra.s32 %v191, 3
        %v950 = vshra.s32 %v192, 3
        %vm951 = vcmp.ge.s32.totalorder %v947, 1
        %vm952 = vcmp.ge.s32.totalorder %v948, 1
        %vm953 = vcmp.lt.s32.totalorder %v947, 9
        %vm954 = vcmp.lt.s32.totalorder %v948, 9
        %vm955 = vmand %vm951, %vm953
        %vm956 = vmand %vm952, %vm954
        %vm957 = vcmp.ge.s32.totalorder %v947, 0
        %vm958 = vcmp.ge.s32.totalorder %v948, 0
        %vm959 = vcmp.lt.s32.totalorder %v947, 8
        %vm960 = vcmp.lt.s32.totalorder %v948, 8
        %vm961 = vmand %vm957, %vm959
        %vm962 = vmand %vm958, %vm960
        %vm963 = vcmp.ge.s32.totalorder %v947, 4294967295
        %vm964 = vcmp.ge.s32.totalorder %v948, 4294967295
        %vm965 = vcmp.lt.s32.totalorder %v947, 7
        %vm966 = vcmp.lt.s32.totalorder %v948, 7
        %vm967 = vmand %vm963, %vm965
        %vm968 = vmand %vm964, %vm966
        %vm969 = vcmp.ge.s32.totalorder %v949, 1
        %vm970 = vcmp.ge.s32.totalorder %v950, 1
        %vm971 = vcmp.lt.s32.totalorder %v949, 9
        %vm972 = vcmp.lt.s32.totalorder %v950, 9
        %vm973 = vmand %vm969, %vm971
        %vm974 = vmand %vm970, %vm972
        %vm975 = vcmp.ge.s32.totalorder %v949, 0
        %vm976 = vcmp.ge.s32.totalorder %v950, 0
        %vm977 = vcmp.lt.s32.totalorder %v949, 8
        %vm978 = vcmp.lt.s32.totalorder %v950, 8
        %vm979 = vmand %vm975, %vm977
        %vm980 = vmand %vm976, %vm978
        %vm981 = vcmp.ge.s32.totalorder %v949, 4294967295
        %vm982 = vcmp.ge.s32.totalorder %v950, 4294967295
        %vm983 = vcmp.lt.s32.totalorder %v949, 7
        %vm984 = vcmp.lt.s32.totalorder %v950, 7
        %vm985 = vmand %vm981, %vm983
        %vm986 = vmand %vm982, %vm984
        %988 = vrot.lane.b32.xlu0 %v946, 9
        %v989 = vpop.permute.xlu0 %988
        %992 = vrot.lane.b32.xlu0 %v945, 9
        %v993 = vpop.permute.xlu0 %992
        %vm994 = vcmask 72704
        %v995 = vsel %vm994, %v993, %v989
        %v998 = vsel %vm994, %v989, %v993
        %vm999 = vmand %vm973, %vm955
        %vm1000 = vmand %vm974, %vm956
        %v1001 = vsel %vm999, %v998, 0.0
        %v1002 = vsel %vm1000, %v995, 0.0
        %1003 = vst [vmem:[#allocation2] sm:$0xff] %v1001
        %1004 = vst [vmem:[#allocation2 + $0x8] sm:$0xff] %v1002
        %1005 = vrot.lane.b32.xlu0 %v946, 8
        %v1006 = vpop.permute.xlu0 %1005
        %1008 = vrot.lane.b32.xlu0 %v945, 8
        %v1009 = vpop.permute.xlu0 %1008
        %vm1010 = vcmask 64512
        %v1011 = vsel %vm1010, %v1009, %v1006
        %v1014 = vsel %vm1010, %v1006, %v1009
        %vm1015 = vmand %vm973, %vm961
        %vm1016 = vmand %vm974, %vm962
        %v1017 = vsel %vm1015, %v1014, 0.0
        %v1018 = vsel %vm1016, %v1011, 0.0
        %1019 = vst [vmem:[#allocation2 + $0x10] sm:$0xff] %v1017
        %1020 = vst [vmem:[#allocation2 + $0x18] sm:$0xff] %v1018
        %1021 = vrot.lane.b32.xlu0 %v946, 7
        %v1022 = vpop.permute.xlu0 %1021
        %1024 = vrot.lane.b32.xlu0 %v945, 7
        %v1025 = vpop.permute.xlu0 %1024
        %vm1026 = vcmask 56320
        %v1027 = vsel %vm1026, %v1025, %v1022
        %v1030 = vsel %vm1026, %v1022, %v1025
        %vm1031 = vmand %vm973, %vm967
        %vm1032 = vmand %vm974, %vm968
        %v1033 = vsel %vm1031, %v1030, 0.0
        %v1034 = vsel %vm1032, %v1027, 0.0
        %1035 = vst [vmem:[#allocation2 + $0x20] sm:$0xff] %v1033
        %1036 = vst [vmem:[#allocation2 + $0x28] sm:$0xff] %v1034
        %1037 = vrot.lane.b32.xlu0 %v946, 1
        %v1038 = vpop.permute.xlu0 %1037
        %1040 = vrot.lane.b32.xlu0 %v945, 1
        %v1041 = vpop.permute.xlu0 %1040
        %v1042 = vsel %vm440, %v1041, %v1038
        %v1045 = vsel %vm440, %v1038, %v1041
        %vm1046 = vmand %vm979, %vm955
        %vm1047 = vmand %vm980, %vm956
        %v1048 = vsel %vm1046, %v1045, 0.0
        %v1049 = vsel %vm1047, %v1042, 0.0
        %1050 = vst [vmem:[#allocation2 + $0x30] sm:$0xff] %v1048
        %1051 = vst [vmem:[#allocation2 + $0x38] sm:$0xff] %v1049
        %vm1052 = vmand %vm979, %vm961
        %vm1053 = vmand %vm980, %vm962
        %v1054 = vsel %vm1052, %v945, 0.0
        %v1055 = vsel %vm1053, %v946, 0.0
        %1056 = vst [vmem:[#allocation2 + $0x40] sm:$0xff] %v1054
        %1057 = vst [vmem:[#allocation2 + $0x48] sm:$0xff] %v1055
        %1058 = vrot.lane.b32.xlu0 %v945, 127
        %v1059 = vpop.permute.xlu0 %1058
        %1060 = vrot.lane.b32.xlu0 %v946, 127
        %v1061 = vpop.permute.xlu0 %1060
        %v1062 = vsel %vm461, %v1059, %v1061
        %v1066 = vsel %vm461, %v1061, %v1059
        %vm1067 = vmand %vm979, %vm967
        %vm1068 = vmand %vm980, %vm968
        %v1069 = vsel %vm1067, %v1062, 0.0
        %v1070 = vsel %vm1068, %v1066, 0.0
        %1071 = vst [vmem:[#allocation2 + $0x50] sm:$0xff] %v1069
        %1072 = vst [vmem:[#allocation2 + $0x58] sm:$0xff] %v1070
        %1073 = vrot.lane.b32.xlu0 %v945, 121
        %v1074 = vpop.permute.xlu0 %1073
        %1075 = vrot.lane.b32.xlu0 %v946, 121
        %v1076 = vpop.permute.xlu0 %1075
        %vm1077 = vcmask 990208
        %v1078 = vsel %vm1077, %v1074, %v1076
        %v1082 = vsel %vm1077, %v1076, %v1074
        %vm1083 = vmand %vm985, %vm955
        %vm1084 = vmand %vm986, %vm956
        %v1085 = vsel %vm1083, %v1078, 0.0
        %v1086 = vsel %vm1084, %v1082, 0.0
        %1087 = vst [vmem:[#allocation2 + $0x60] sm:$0xff] %v1085
        %1088 = vst [vmem:[#allocation2 + $0x68] sm:$0xff] %v1086
        %1089 = vrot.lane.b32.xlu0 %v945, 120
        %v1090 = vpop.permute.xlu0 %1089
        %1091 = vrot.lane.b32.xlu0 %v946, 120
        %v1092 = vpop.permute.xlu0 %1091
        %vm1093 = vcmask 982016
        %v1094 = vsel %vm1093, %v1090, %v1092
        %v1098 = vsel %vm1093, %v1092, %v1090
        %vm1099 = vmand %vm985, %vm961
        %vm1100 = vmand %vm986, %vm962
        %v1101 = vsel %vm1099, %v1094, 0.0
        %v1102 = vsel %vm1100, %v1098, 0.0
        %1103 = vst [vmem:[#allocation2 + $0x70] sm:$0xff] %v1101
        %1104 = vst [vmem:[#allocation2 + $0x78] sm:$0xff] %v1102
        %1105 = vrot.lane.b32.xlu0 %v945, 119
        %v1106 = vpop.permute.xlu0 %1105
        %1107 = vrot.lane.b32.xlu0 %v946, 119
        %v1108 = vpop.permute.xlu0 %1107
        %vm1109 = vcmask 973824
        %v1110 = vsel %vm1109, %v1106, %v1108
        %v1114 = vsel %vm1109, %v1108, %v1106
        %vm1115 = vmand %vm985, %vm967
        %vm1116 = vmand %vm986, %vm968
        %v1117 = vsel %vm1115, %v1110, 0.0
        %v1118 = vsel %vm1116, %v1114, 0.0
        %1119 = vst [vmem:[#allocation2 + $0x80] sm:$0xff] %v1117
        %1120 = vst [vmem:[#allocation2 + $0x88] sm:$0xff] %v1118
        %v1121 = vld [vmem:[%s2 + $0x10] sm:$0xff]
        %v1122 = vld [vmem:[#allocation2] sm:$0xff]
        %v1123 = vld [vmem:[#allocation2 + $0x8] sm:$0xff]
        %v1124 = vld [vmem:[#allocation2 + $0x10] sm:$0xff]
        %v1125 = vld [vmem:[#allocation2 + $0x18] sm:$0xff]
        %v1126 = vld [vmem:[#allocation2 + $0x20] sm:$0xff]
        %v1127 = vld [vmem:[#allocation2 + $0x28] sm:$0xff]
        %v1128 = vld [vmem:[#allocation2 + $0x30] sm:$0xff]
        %v1129 = vld [vmem:[#allocation2 + $0x38] sm:$0xff]
        %v1130 = vld [vmem:[#allocation2 + $0x40] sm:$0xff]
        %v1131 = vld [vmem:[#allocation2 + $0x48] sm:$0xff]
        %v1132 = vld [vmem:[#allocation2 + $0x50] sm:$0xff]
        %v1133 = vld [vmem:[#allocation2 + $0x58] sm:$0xff]
        %v1134 = vld [vmem:[#allocation2 + $0x60] sm:$0xff]
        %v1135 = vld [vmem:[#allocation2 + $0x68] sm:$0xff]
        %v1136 = vld [vmem:[#allocation2 + $0x70] sm:$0xff]
        %v1137 = vld [vmem:[#allocation2 + $0x78] sm:$0xff]
        %v1138 = vld [vmem:[#allocation2 + $0x80] sm:$0xff]
        %v1139 = vld [vmem:[#allocation2 + $0x88] sm:$0xff]
        %v1141 = vsel %vm701, %v1121, 0
        %1143 = vmatpush.msra.mxu0 0.0
        %1144 = vmatpush.msra.mxu0 0.0
        %1145 = vmatpush.msra.mxu0 0.0
        %1146 = vmatpush.msra.mxu0 0.0
        %1147 = vmatpush.msra.mxu0 0.0
        %1148 = vmatpush.msra.mxu0 0.0
        %1149 = vmatpush.msra.mxu0 0.0
        %1150 = vmatpush.msra.mxu0 %v1138
        %1151 = vmatpush.msra.mxu0 %v1136
        %1152 = vmatpush.msra.mxu0 %v1134
        %1153 = vmatpush.msra.mxu0 %v1132
        %1154 = vmatpush.msra.mxu0 %v1130
        %1155 = vmatpush.msra.mxu0 %v1128
        %1156 = vmatpush.msra.mxu0 %v1126
        %1157 = vmatpush.msra.mxu0 %v1124
        %1158 = vmatpush.msra.mxu0 %v1122
        %1159 = vmatmul.f32.gmra.mxu0 %v1141
        %v1160 = vpop.f32.mrf.mxu0
        %v1161 = vadd.f32 0.0, %v1160
        %1162 = vdwg.mxu0
        %1163 = vmatpush.msra.mxu0 0.0
        %1164 = vmatpush.msra.mxu0 0.0
        %1165 = vmatpush.msra.mxu0 0.0
        %1166 = vmatpush.msra.mxu0 0.0
        %1167 = vmatpush.msra.mxu0 0.0
        %1168 = vmatpush.msra.mxu0 0.0
        %1169 = vmatpush.msra.mxu0 0.0
        %1170 = vmatpush.msra.mxu0 %v1139
        %1171 = vmatpush.msra.mxu0 %v1137
        %1172 = vmatpush.msra.mxu0 %v1135
        %1173 = vmatpush.msra.mxu0 %v1133
        %1174 = vmatpush.msra.mxu0 %v1131
        %1175 = vmatpush.msra.mxu0 %v1129
        %1176 = vmatpush.msra.mxu0 %v1127
        %1177 = vmatpush.msra.mxu0 %v1125
        %1178 = vmatpush.msra.mxu0 %v1123
        %1179 = vmatmul.f32.gmra.mxu0 %v1141
        %v1180 = vpop.f32.mrf.mxu0
        %v1181 = vadd.f32 0.0, %v1180
        %1182 = vdwg.mxu0
        %v1183 = vld [vmem:[#allocation3 + $0x200] sm:$0xff]
        %v1184 = vld [vmem:[#allocation3 + $0x208] sm:$0xff]
        %v1185 = vld [vmem:[#allocation3 + $0x210] sm:$0xff]
        %v1186 = vld [vmem:[#allocation3 + $0x218] sm:$0xff]
        %v1187 = vld [vmem:[#allocation3 + $0x220] sm:$0xff]
        %v1188 = vld [vmem:[#allocation3 + $0x228] sm:$0xff]
        %v1189 = vld [vmem:[#allocation3 + $0x230] sm:$0xff]
        %v1190 = vld [vmem:[#allocation3 + $0x238] sm:$0xff]
        %v1191 = vld [vmem:[#allocation3 + $0x240] sm:$0xff]
        %v1192 = vld [vmem:[#allocation3 + $0x248] sm:$0xff]
        %v1193 = vld [vmem:[#allocation3 + $0x250] sm:$0xff]
        %v1194 = vld [vmem:[#allocation3 + $0x258] sm:$0xff]
        %v1195 = vld [vmem:[#allocation3 + $0x260] sm:$0xff]
        %v1196 = vld [vmem:[#allocation3 + $0x268] sm:$0xff]
        %v1197 = vld [vmem:[#allocation3 + $0x270] sm:$0xff]
        %v1198 = vld [vmem:[#allocation3 + $0x278] sm:$0xff]
        %v1199 = vld [vmem:[#allocation3 + $0x280] sm:$0xff]
        %v1200 = vld [vmem:[#allocation3 + $0x288] sm:$0xff]
        %v1201 = vld [vmem:[#allocation3 + $0x290] sm:$0xff]
        %v1202 = vld [vmem:[#allocation3 + $0x298] sm:$0xff]
        %v1203 = vld [vmem:[#allocation3 + $0x2a0] sm:$0xff]
        %v1204 = vld [vmem:[#allocation3 + $0x2a8] sm:$0xff]
        %v1205 = vld [vmem:[#allocation3 + $0x2b0] sm:$0xff]
        %v1206 = vld [vmem:[#allocation3 + $0x2b8] sm:$0xff]
        %v1207 = vld [vmem:[#allocation3 + $0x2c0] sm:$0xff]
        %v1208 = vld [vmem:[#allocation3 + $0x2c8] sm:$0xff]
        %v1209 = vld [vmem:[#allocation3 + $0x2d0] sm:$0xff]
        %v1210 = vld [vmem:[#allocation3 + $0x2d8] sm:$0xff]
        %v1211 = vld [vmem:[#allocation3 + $0x2e0] sm:$0xff]
        %v1212 = vld [vmem:[#allocation3 + $0x2e8] sm:$0xff]
        %v1213 = vld [vmem:[#allocation3 + $0x2f0] sm:$0xff]
        %v1214 = vld [vmem:[#allocation3 + $0x2f8] sm:$0xff]
        %v1215 = vld [vmem:[#allocation3 + $0x300] sm:$0xff]
        %v1216 = vld [vmem:[#allocation3 + $0x308] sm:$0xff]
        %v1217 = vld [vmem:[#allocation3 + $0x310] sm:$0xff]
        %v1218 = vld [vmem:[#allocation3 + $0x318] sm:$0xff]
        %v1219 = vld [vmem:[#allocation3 + $0x320] sm:$0xff]
        %v1220 = vld [vmem:[#allocation3 + $0x328] sm:$0xff]
        %v1221 = vld [vmem:[#allocation3 + $0x330] sm:$0xff]
        %v1222 = vld [vmem:[#allocation3 + $0x338] sm:$0xff]
        %v1223 = vld [vmem:[#allocation3 + $0x340] sm:$0xff]
        %v1224 = vld [vmem:[#allocation3 + $0x348] sm:$0xff]
        %v1225 = vld [vmem:[#allocation3 + $0x350] sm:$0xff]
        %v1226 = vld [vmem:[#allocation3 + $0x358] sm:$0xff]
        %v1227 = vld [vmem:[#allocation3 + $0x360] sm:$0xff]
        %v1228 = vld [vmem:[#allocation3 + $0x368] sm:$0xff]
        %v1229 = vld [vmem:[#allocation3 + $0x370] sm:$0xff]
        %v1230 = vld [vmem:[#allocation3 + $0x378] sm:$0xff]
        %v1231 = vld [vmem:[#allocation3 + $0x380] sm:$0xff]
        %v1232 = vld [vmem:[#allocation3 + $0x388] sm:$0xff]
        %v1233 = vld [vmem:[#allocation3 + $0x390] sm:$0xff]
        %v1234 = vld [vmem:[#allocation3 + $0x398] sm:$0xff]
        %v1235 = vld [vmem:[#allocation3 + $0x3a0] sm:$0xff]
        %v1236 = vld [vmem:[#allocation3 + $0x3a8] sm:$0xff]
        %v1237 = vld [vmem:[#allocation3 + $0x3b0] sm:$0xff]
        %v1238 = vld [vmem:[#allocation3 + $0x3b8] sm:$0xff]
        %v1239 = vld [vmem:[#allocation3 + $0x3c0] sm:$0xff]
        %v1240 = vld [vmem:[#allocation3 + $0x3c8] sm:$0xff]
        %v1241 = vld [vmem:[#allocation3 + $0x3d0] sm:$0xff]
        %v1242 = vld [vmem:[#allocation3 + $0x3d8] sm:$0xff]
        %v1243 = vld [vmem:[#allocation3 + $0x3e0] sm:$0xff]
        %v1244 = vld [vmem:[#allocation3 + $0x3e8] sm:$0xff]
        %v1245 = vld [vmem:[#allocation3 + $0x3f0] sm:$0xff]
        %v1246 = vld [vmem:[#allocation3 + $0x3f8] sm:$0xff]
        %v1247 = vld [vmem:[%s2 + $0x30] sm:$0xff]
        %1249 = vset.pattern.permute.xlu0 17
        %1250 = vperm.xlu0 %1249, %v1247
        %v1251 = vpop.permute.xlu0 %1250
        %1253 = vmatpush.msra.mxu0 %v1213
        %1254 = vmatpush.msra.mxu0 %v1211
        %1255 = vmatpush.msra.mxu0 %v1209
        %1256 = vmatpush.msra.mxu0 %v1207
        %1257 = vmatpush.msra.mxu0 %v1205
        %1258 = vmatpush.msra.mxu0 %v1203
        %1259 = vmatpush.msra.mxu0 %v1201
        %1260 = vmatpush.msra.mxu0 %v1199
        %1261 = vmatpush.msra.mxu0 %v1197
        %1262 = vmatpush.msra.mxu0 %v1195
        %1263 = vmatpush.msra.mxu0 %v1193
        %1264 = vmatpush.msra.mxu0 %v1191
        %1265 = vmatpush.msra.mxu0 %v1189
        %1266 = vmatpush.msra.mxu0 %v1187
        %1267 = vmatpush.msra.mxu0 %v1185
        %1268 = vmatpush.msra.mxu0 %v1183
        %1269 = vmatmul.f32.gmra.mxu0 %v1161
        %v1270 = vpop.f32.mrf.mxu0
        %v1271 = vadd.f32 %v1251, %v1270
        %1272 = vdwg.mxu0
        %1273 = vmatpush.msra.mxu0 %v1245
        %1274 = vmatpush.msra.mxu0 %v1243
        %1275 = vmatpush.msra.mxu0 %v1241
        %1276 = vmatpush.msra.mxu0 %v1239
        %1277 = vmatpush.msra.mxu0 %v1237
        %1278 = vmatpush.msra.mxu0 %v1235
        %1279 = vmatpush.msra.mxu0 %v1233
        %1280 = vmatpush.msra.mxu0 %v1231
        %1281 = vmatpush.msra.mxu0 %v1229
        %1282 = vmatpush.msra.mxu0 %v1227
        %1283 = vmatpush.msra.mxu0 %v1225
        %1284 = vmatpush.msra.mxu0 %v1223
        %1285 = vmatpush.msra.mxu0 %v1221
        %1286 = vmatpush.msra.mxu0 %v1219
        %1287 = vmatpush.msra.mxu0 %v1217
        %1288 = vmatpush.msra.mxu0 %v1215
        %1289 = vmatmul.f32.gmra.mxu0 %v1181
        %v1290 = vpop.f32.mrf.mxu0
        %v1291 = vadd.f32 %v1271, %v1290
        %1292 = vdwg.mxu0
        %1293 = vmatpush.msra.mxu0 %v1214
        %1294 = vmatpush.msra.mxu0 %v1212
        %1295 = vmatpush.msra.mxu0 %v1210
        %1296 = vmatpush.msra.mxu0 %v1208
        %1297 = vmatpush.msra.mxu0 %v1206
        %1298 = vmatpush.msra.mxu0 %v1204
        %1299 = vmatpush.msra.mxu0 %v1202
        %1300 = vmatpush.msra.mxu0 %v1200
        %1301 = vmatpush.msra.mxu0 %v1198
        %1302 = vmatpush.msra.mxu0 %v1196
        %1303 = vmatpush.msra.mxu0 %v1194
        %1304 = vmatpush.msra.mxu0 %v1192
        %1305 = vmatpush.msra.mxu0 %v1190
        %1306 = vmatpush.msra.mxu0 %v1188
        %1307 = vmatpush.msra.mxu0 %v1186
        %1308 = vmatpush.msra.mxu0 %v1184
        %1309 = vmatmul.f32.gmra.mxu0 %v1161
        %v1310 = vpop.f32.mrf.mxu0
        %v1311 = vadd.f32 %v1251, %v1310
        %1312 = vdwg.mxu0
        %1313 = vmatpush.msra.mxu0 %v1246
        %1314 = vmatpush.msra.mxu0 %v1244
        %1315 = vmatpush.msra.mxu0 %v1242
        %1316 = vmatpush.msra.mxu0 %v1240
        %1317 = vmatpush.msra.mxu0 %v1238
        %1318 = vmatpush.msra.mxu0 %v1236
        %1319 = vmatpush.msra.mxu0 %v1234
        %1320 = vmatpush.msra.mxu0 %v1232
        %1321 = vmatpush.msra.mxu0 %v1230
        %1322 = vmatpush.msra.mxu0 %v1228
        %1323 = vmatpush.msra.mxu0 %v1226
        %1324 = vmatpush.msra.mxu0 %v1224
        %1325 = vmatpush.msra.mxu0 %v1222
        %1326 = vmatpush.msra.mxu0 %v1220
        %1327 = vmatpush.msra.mxu0 %v1218
        %1328 = vmatpush.msra.mxu0 %v1216
        %1329 = vmatmul.f32.gmra.mxu0 %v1181
        %v1330 = vpop.f32.mrf.mxu0
        %v1331 = vadd.f32 %v1311, %v1330
        %1332 = vdwg.mxu0
        %vm1333 = vcmp.gt.f32.partialorder %v1291, 0.0
        %vm1334 = vcmp.gt.f32.partialorder %v1331, 0.0
        %v1335 = vmin.f32 %v1291, 0.0
        %v1336 = vmin.f32 %v1331, 0.0
        %v1337 = vmul.f32 %v1335, 1.442695
        %v1338 = vpow.pop %v1337
        %v1339 = vmul.f32 %v1336, 1.442695
        %v1340 = vpow.pop %v1339
        %v1341 = vsub.f32 %v1338, 1.0
        %v1342 = vsub.f32 %v1340, 1.0
        %v1343 = vsel %vm1333, %v1291, %v1341
        %v1344 = vsel %vm1334, %v1331, %v1342
        %vm1345 = vcmp.ge.s32.totalorder %v947, 2
        %vm1346 = vcmp.ge.s32.totalorder %v948, 2
        %vm1347 = vcmp.lt.s32.totalorder %v947, 10
        %vm1348 = vcmp.lt.s32.totalorder %v948, 10
        %vm1349 = vmand %vm1345, %vm1347
        %vm1350 = vmand %vm1346, %vm1348
        %vm1351 = vcmp.ge.s32.totalorder %v947, 4294967294
        %vm1352 = vcmp.ge.s32.totalorder %v948, 4294967294
        %vm1353 = vcmp.lt.s32.totalorder %v947, 6
        %vm1354 = vcmp.lt.s32.totalorder %v948, 6
        %vm1355 = vmand %vm1351, %vm1353
        %vm1356 = vmand %vm1352, %vm1354
        %vm1357 = vcmp.ge.s32.totalorder %v949, 2
        %vm1358 = vcmp.ge.s32.totalorder %v950, 2
        %vm1359 = vcmp.lt.s32.totalorder %v949, 10
        %vm1360 = vcmp.lt.s32.totalorder %v950, 10
        %vm1361 = vmand %vm1357, %vm1359
        %vm1362 = vmand %vm1358, %vm1360
        %vm1363 = vcmp.ge.s32.totalorder %v949, 4294967294
        %vm1364 = vcmp.ge.s32.totalorder %v950, 4294967294
        %vm1365 = vcmp.lt.s32.totalorder %v949, 6
        %vm1366 = vcmp.lt.s32.totalorder %v950, 6
        %vm1367 = vmand %vm1363, %vm1365
        %vm1368 = vmand %vm1364, %vm1366
        %1369 = vrot.lane.b32.xlu0 %v946, 18
        %v1370 = vpop.permute.xlu0 %1369
        %1372 = vrot.lane.b32.xlu0 %v945, 18
        %v1373 = vpop.permute.xlu0 %1372
        %v1374 = vsel %vm344, %v1373, %v1370
        %v1377 = vsel %vm344, %v1370, %v1373
        %vm1378 = vmand %vm1361, %vm1349
        %vm1379 = vmand %vm1362, %vm1350
        %v1380 = vsel %vm1378, %v1377, 0.0
        %v1381 = vsel %vm1379, %v1374, 0.0
        %1382 = vst [vmem:[#allocation2] sm:$0xff] %v1380
        %1383 = vst [vmem:[#allocation2 + $0x8] sm:$0xff] %v1381
        %1384 = vrot.lane.b32.xlu0 %v946, 17
        %v1385 = vpop.permute.xlu0 %1384
        %1387 = vrot.lane.b32.xlu0 %v945, 17
        %v1388 = vpop.permute.xlu0 %1387
        %v1389 = vsel %vm360, %v1388, %v1385
        %v1392 = vsel %vm360, %v1385, %v1388
        %vm1393 = vmand %vm1361, %vm955
        %vm1394 = vmand %vm1362, %vm956
        %v1395 = vsel %vm1393, %v1392, 0.0
        %v1396 = vsel %vm1394, %v1389, 0.0
        %1397 = vst [vmem:[#allocation2 + $0x10] sm:$0xff] %v1395
        %1398 = vst [vmem:[#allocation2 + $0x18] sm:$0xff] %v1396
        %1399 = vrot.lane.b32.xlu0 %v946, 16
        %v1400 = vpop.permute.xlu0 %1399
        %1402 = vrot.lane.b32.xlu0 %v945, 16
        %v1403 = vpop.permute.xlu0 %1402
        %v1404 = vsel %vm376, %v1403, %v1400
        %v1407 = vsel %vm376, %v1400, %v1403
        %vm1408 = vmand %vm1361, %vm961
        %vm1409 = vmand %vm1362, %vm962
        %v1410 = vsel %vm1408, %v1407, 0.0
        %v1411 = vsel %vm1409, %v1404, 0.0
        %1412 = vst [vmem:[#allocation2 + $0x20] sm:$0xff] %v1410
        %1413 = vst [vmem:[#allocation2 + $0x28] sm:$0xff] %v1411
        %1414 = vrot.lane.b32.xlu0 %v946, 15
        %v1415 = vpop.permute.xlu0 %1414
        %1417 = vrot.lane.b32.xlu0 %v945, 15
        %v1418 = vpop.permute.xlu0 %1417
        %v1419 = vsel %vm392, %v1418, %v1415
        %v1422 = vsel %vm392, %v1415, %v1418
        %vm1423 = vmand %vm1361, %vm967
        %vm1424 = vmand %vm1362, %vm968
        %v1425 = vsel %vm1423, %v1422, 0.0
        %v1426 = vsel %vm1424, %v1419, 0.0
        %1427 = vst [vmem:[#allocation2 + $0x30] sm:$0xff] %v1425
        %1428 = vst [vmem:[#allocation2 + $0x38] sm:$0xff] %v1426
        %1429 = vrot.lane.b32.xlu0 %v946, 14
        %v1430 = vpop.permute.xlu0 %1429
        %1432 = vrot.lane.b32.xlu0 %v945, 14
        %v1433 = vpop.permute.xlu0 %1432
        %v1434 = vsel %vm408, %v1433, %v1430
        %v1437 = vsel %vm408, %v1430, %v1433
        %vm1438 = vmand %vm1361, %vm1355
        %vm1439 = vmand %vm1362, %vm1356
        %v1440 = vsel %vm1438, %v1437, 0.0
        %v1441 = vsel %vm1439, %v1434, 0.0
        %1442 = vst [vmem:[#allocation2 + $0x40] sm:$0xff] %v1440
        %1443 = vst [vmem:[#allocation2 + $0x48] sm:$0xff] %v1441
        %1444 = vrot.lane.b32.xlu0 %v946, 10
        %v1445 = vpop.permute.xlu0 %1444
        %1447 = vrot.lane.b32.xlu0 %v945, 10
        %v1448 = vpop.permute.xlu0 %1447
        %vm1449 = vcmask 80896
        %v1450 = vsel %vm1449, %v1448, %v1445
        %v1453 = vsel %vm1449, %v1445, %v1448
        %vm1454 = vmand %vm973, %vm1349
        %vm1455 = vmand %vm974, %vm1350
        %v1456 = vsel %vm1454, %v1453, 0.0
        %v1457 = vsel %vm1455, %v1450, 0.0
        %1458 = vst [vmem:[#allocation2 + $0x50] sm:$0xff] %v1456
        %1459 = vst [vmem:[#allocation2 + $0x58] sm:$0xff] %v1457
        %1460 = vst [vmem:[#allocation2 + $0x60] sm:$0xff] %v1001
        %1461 = vst [vmem:[#allocation2 + $0x68] sm:$0xff] %v1002
        %1462 = vst [vmem:[#allocation2 + $0x70] sm:$0xff] %v1017
        %1463 = vst [vmem:[#allocation2 + $0x78] sm:$0xff] %v1018
        %1464 = vst [vmem:[#allocation2 + $0x80] sm:$0xff] %v1033
        %1465 = vst [vmem:[#allocation2 + $0x88] sm:$0xff] %v1034
        %1466 = vrot.lane.b32.xlu0 %v946, 6
        %v1467 = vpop.permute.xlu0 %1466
        %1469 = vrot.lane.b32.xlu0 %v945, 6
        %v1470 = vpop.permute.xlu0 %1469
        %vm1471 = vcmask 48128
        %v1472 = vsel %vm1471, %v1470, %v1467
        %v1475 = vsel %vm1471, %v1467, %v1470
        %vm1476 = vmand %vm973, %vm1355
        %vm1477 = vmand %vm974, %vm1356
        %v1478 = vsel %vm1476, %v1475, 0.0
        %v1479 = vsel %vm1477, %v1472, 0.0
        %1480 = vst [vmem:[#allocation2 + $0x90] sm:$0xff] %v1478
        %1481 = vst [vmem:[#allocation2 + $0x98] sm:$0xff] %v1479
        %1482 = vrot.lane.b32.xlu0 %v946, 2
        %v1483 = vpop.permute.xlu0 %1482
        %1485 = vrot.lane.b32.xlu0 %v945, 2
        %v1486 = vpop.permute.xlu0 %1485
        %v1487 = vsel %vm424, %v1486, %v1483
        %v1490 = vsel %vm424, %v1483, %v1486
        %vm1491 = vmand %vm979, %vm1349
        %vm1492 = vmand %vm980, %vm1350
        %v1493 = vsel %vm1491, %v1490, 0.0
        %v1494 = vsel %vm1492, %v1487, 0.0
        %1495 = vst [vmem:[#allocation2 + $0xa0] sm:$0xff] %v1493
        %1496 = vst [vmem:[#allocation2 + $0xa8] sm:$0xff] %v1494
        %1497 = vst [vmem:[#allocation2 + $0xb0] sm:$0xff] %v1048
        %1498 = vst [vmem:[#allocation2 + $0xb8] sm:$0xff] %v1049
        %1499 = vst [vmem:[#allocation2 + $0xc0] sm:$0xff] %v1054
        %1500 = vst [vmem:[#allocation2 + $0xc8] sm:$0xff] %v1055
        %1501 = vst [vmem:[#allocation2 + $0xd0] sm:$0xff] %v1069
        %1502 = vst [vmem:[#allocation2 + $0xd8] sm:$0xff] %v1070
        %1503 = vrot.lane.b32.xlu0 %v945, 126
        %v1504 = vpop.permute.xlu0 %1503
        %1505 = vrot.lane.b32.xlu0 %v946, 126
        %v1506 = vpop.permute.xlu0 %1505
        %v1507 = vsel %vm477, %v1504, %v1506
        %v1511 = vsel %vm477, %v1506, %v1504
        %vm1512 = vmand %vm979, %vm1355
        %vm1513 = vmand %vm980, %vm1356
        %v1514 = vsel %vm1512, %v1507, 0.0
        %v1515 = vsel %vm1513, %v1511, 0.0
        %1516 = vst [vmem:[#allocation2 + $0xe0] sm:$0xff] %v1514
        %1517 = vst [vmem:[#allocation2 + $0xe8] sm:$0xff] %v1515
        %1518 = vrot.lane.b32.xlu0 %v945, 122
        %v1519 = vpop.permute.xlu0 %1518
        %1520 = vrot.lane.b32.xlu0 %v946, 122
        %v1521 = vpop.permute.xlu0 %1520
        %vm1522 = vcmask 998400
        %v1523 = vsel %vm1522, %v1519, %v1521
        %v1527 = vsel %vm1522, %v1521, %v1519
        %vm1528 = vmand %vm985, %vm1349
        %vm1529 = vmand %vm986, %vm1350
        %v1530 = vsel %vm1528, %v1523, 0.0
        %v1531 = vsel %vm1529, %v1527, 0.0
        %1532 = vst [vmem:[#allocation2 + $0xf0] sm:$0xff] %v1530
        %1533 = vst [vmem:[#allocation2 + $0xf8] sm:$0xff] %v1531
        %1534 = vst [vmem:[#allocation2 + $0x100] sm:$0xff] %v1085
        %1535 = vst [vmem:[#allocation2 + $0x108] sm:$0xff] %v1086
        %1536 = vst [vmem:[#allocation2 + $0x110] sm:$0xff] %v1101
        %1537 = vst [vmem:[#allocation2 + $0x118] sm:$0xff] %v1102
        %1538 = vst [vmem:[#allocation2 + $0x120] sm:$0xff] %v1117
        %1539 = vst [vmem:[#allocation2 + $0x128] sm:$0xff] %v1118
        %1540 = vrot.lane.b32.xlu0 %v945, 118
        %v1541 = vpop.permute.xlu0 %1540
        %1542 = vrot.lane.b32.xlu0 %v946, 118
        %v1543 = vpop.permute.xlu0 %1542
        %vm1544 = vcmask 965632
        %v1545 = vsel %vm1544, %v1541, %v1543
        %v1549 = vsel %vm1544, %v1543, %v1541
        %vm1550 = vmand %vm985, %vm1355
        %vm1551 = vmand %vm986, %vm1356
        %v1552 = vsel %vm1550, %v1545, 0.0
        %v1553 = vsel %vm1551, %v1549, 0.0
        %1554 = vst [vmem:[#allocation2 + $0x130] sm:$0xff] %v1552
        %1555 = vst [vmem:[#allocation2 + $0x138] sm:$0xff] %v1553
        %1556 = vrot.lane.b32.xlu0 %v945, 114
        %v1557 = vpop.permute.xlu0 %1556
        %1558 = vrot.lane.b32.xlu0 %v946, 114
        %v1559 = vpop.permute.xlu0 %1558
        %v1560 = vsel %vm493, %v1557, %v1559
        %v1564 = vsel %vm493, %v1559, %v1557
        %vm1565 = vmand %vm1367, %vm1349
        %vm1566 = vmand %vm1368, %vm1350
        %v1567 = vsel %vm1565, %v1560, 0.0
        %v1568 = vsel %vm1566, %v1564, 0.0
        %1569 = vst [vmem:[#allocation2 + $0x140] sm:$0xff] %v1567
        %1570 = vst [vmem:[#allocation2 + $0x148] sm:$0xff] %v1568
        %1571 = vrot.lane.b32.xlu0 %v945, 113
        %v1572 = vpop.permute.xlu0 %1571
        %1573 = vrot.lane.b32.xlu0 %v946, 113
        %v1574 = vpop.permute.xlu0 %1573
        %v1575 = vsel %vm509, %v1572, %v1574
        %v1579 = vsel %vm509, %v1574, %v1572
        %vm1580 = vmand %vm1367, %vm955
        %vm1581 = vmand %vm1368, %vm956
        %v1582 = vsel %vm1580, %v1575, 0.0
        %v1583 = vsel %vm1581, %v1579, 0.0
        %1584 = vst [vmem:[#allocation2 + $0x150] sm:$0xff] %v1582
        %1585 = vst [vmem:[#allocation2 + $0x158] sm:$0xff] %v1583
        %1586 = vrot.lane.b32.xlu0 %v945, 112
        %v1587 = vpop.permute.xlu0 %1586
        %1588 = vrot.lane.b32.xlu0 %v946, 112
        %v1589 = vpop.permute.xlu0 %1588
        %v1590 = vsel %vm525, %v1587, %v1589
        %v1594 = vsel %vm525, %v1589, %v1587
        %vm1595 = vmand %vm1367, %vm961
        %vm1596 = vmand %vm1368, %vm962
        %v1597 = vsel %vm1595, %v1590, 0.0
        %v1598 = vsel %vm1596, %v1594, 0.0
        %1599 = vst [vmem:[#allocation2 + $0x160] sm:$0xff] %v1597
        %1600 = vst [vmem:[#allocation2 + $0x168] sm:$0xff] %v1598
        %1601 = vrot.lane.b32.xlu0 %v945, 111
        %v1602 = vpop.permute.xlu0 %1601
        %1603 = vrot.lane.b32.xlu0 %v946, 111
        %v1604 = vpop.permute.xlu0 %1603
        %v1605 = vsel %vm541, %v1602, %v1604
        %v1609 = vsel %vm541, %v1604, %v1602
        %vm1610 = vmand %vm1367, %vm967
        %vm1611 = vmand %vm1368, %vm968
        %v1612 = vsel %vm1610, %v1605, 0.0
        %v1613 = vsel %vm1611, %v1609, 0.0
        %1614 = vst [vmem:[#allocation2 + $0x170] sm:$0xff] %v1612
        %1615 = vst [vmem:[#allocation2 + $0x178] sm:$0xff] %v1613
        %1616 = vrot.lane.b32.xlu0 %v945, 110
        %v1617 = vpop.permute.xlu0 %1616
        %1618 = vrot.lane.b32.xlu0 %v946, 110
        %v1619 = vpop.permute.xlu0 %1618
        %v1620 = vsel %vm557, %v1617, %v1619
        %v1624 = vsel %vm557, %v1619, %v1617
        %vm1625 = vmand %vm1367, %vm1355
        %vm1626 = vmand %vm1368, %vm1356
        %v1627 = vsel %vm1625, %v1620, 0.0
        %v1628 = vsel %vm1626, %v1624, 0.0
        %1629 = vst [vmem:[#allocation2 + $0x180] sm:$0xff] %v1627
        %1630 = vst [vmem:[#allocation2 + $0x188] sm:$0xff] %v1628
        %v1631 = vld [vmem:[%s2 + $0x18] sm:$0xff]
        %v1632 = vld [vmem:[%s2 + $0x20] sm:$0xff]
        %v1633 = vld [vmem:[#allocation2] sm:$0xff]
        %v1634 = vld [vmem:[#allocation2 + $0x8] sm:$0xff]
        %v1635 = vld [vmem:[#allocation2 + $0x10] sm:$0xff]
        %v1636 = vld [vmem:[#allocation2 + $0x18] sm:$0xff]
        %v1637 = vld [vmem:[#allocation2 + $0x20] sm:$0xff]
        %v1638 = vld [vmem:[#allocation2 + $0x28] sm:$0xff]
        %v1639 = vld [vmem:[#allocation2 + $0x30] sm:$0xff]
        %v1640 = vld [vmem:[#allocation2 + $0x38] sm:$0xff]
        %v1641 = vld [vmem:[#allocation2 + $0x40] sm:$0xff]
        %v1642 = vld [vmem:[#allocation2 + $0x48] sm:$0xff]
        %v1643 = vld [vmem:[#allocation2 + $0x50] sm:$0xff]
        %v1644 = vld [vmem:[#allocation2 + $0x58] sm:$0xff]
        %v1645 = vld [vmem:[#allocation2 + $0x60] sm:$0xff]
        %v1646 = vld [vmem:[#allocation2 + $0x68] sm:$0xff]
        %v1647 = vld [vmem:[#allocation2 + $0x70] sm:$0xff]
        %v1648 = vld [vmem:[#allocation2 + $0x78] sm:$0xff]
        %v1649 = vld [vmem:[#allocation2 + $0x80] sm:$0xff]
        %v1650 = vld [vmem:[#allocation2 + $0x88] sm:$0xff]
        %v1651 = vld [vmem:[#allocation2 + $0x90] sm:$0xff]
        %v1652 = vld [vmem:[#allocation2 + $0x98] sm:$0xff]
        %v1653 = vld [vmem:[#allocation2 + $0xa0] sm:$0xff]
        %v1654 = vld [vmem:[#allocation2 + $0xa8] sm:$0xff]
        %v1655 = vld [vmem:[#allocation2 + $0xb0] sm:$0xff]
        %v1656 = vld [vmem:[#allocation2 + $0xb8] sm:$0xff]
        %v1657 = vld [vmem:[#allocation2 + $0xc0] sm:$0xff]
        %v1658 = vld [vmem:[#allocation2 + $0xc8] sm:$0xff]
        %v1659 = vld [vmem:[#allocation2 + $0xd0] sm:$0xff]
        %v1660 = vld [vmem:[#allocation2 + $0xd8] sm:$0xff]
        %v1661 = vld [vmem:[#allocation2 + $0xe0] sm:$0xff]
        %v1662 = vld [vmem:[#allocation2 + $0xe8] sm:$0xff]
        %v1663 = vld [vmem:[#allocation2 + $0xf0] sm:$0xff]
        %v1664 = vld [vmem:[#allocation2 + $0xf8] sm:$0xff]
        %v1665 = vld [vmem:[#allocation2 + $0x100] sm:$0xff]
        %v1666 = vld [vmem:[#allocation2 + $0x108] sm:$0xff]
        %v1667 = vld [vmem:[#allocation2 + $0x110] sm:$0xff]
        %v1668 = vld [vmem:[#allocation2 + $0x118] sm:$0xff]
        %v1669 = vld [vmem:[#allocation2 + $0x120] sm:$0xff]
        %v1670 = vld [vmem:[#allocation2 + $0x128] sm:$0xff]
        %v1671 = vld [vmem:[#allocation2 + $0x130] sm:$0xff]
        %v1672 = vld [vmem:[#allocation2 + $0x138] sm:$0xff]
        %v1673 = vld [vmem:[#allocation2 + $0x140] sm:$0xff]
        %v1674 = vld [vmem:[#allocation2 + $0x148] sm:$0xff]
        %v1675 = vld [vmem:[#allocation2 + $0x150] sm:$0xff]
        %v1676 = vld [vmem:[#allocation2 + $0x158] sm:$0xff]
        %v1677 = vld [vmem:[#allocation2 + $0x160] sm:$0xff]
        %v1678 = vld [vmem:[#allocation2 + $0x168] sm:$0xff]
        %v1679 = vld [vmem:[#allocation2 + $0x170] sm:$0xff]
        %v1680 = vld [vmem:[#allocation2 + $0x178] sm:$0xff]
        %v1681 = vld [vmem:[#allocation2 + $0x180] sm:$0xff]
        %v1682 = vld [vmem:[#allocation2 + $0x188] sm:$0xff]
        %v1683 = vld [vmem:[%s2 + $0x30] sm:$0xff]
        %1685 = vset.pattern.permute.xlu0 18
        %1686 = vperm.xlu0 %1685, %v1683
        %v1687 = vpop.permute.xlu0 %1686
        %v1690 = vsel %vm701, %v1632, 0
        %1692 = vmatpush.msra.mxu0 %v1663
        %1693 = vmatpush.msra.mxu0 %v1661
        %1694 = vmatpush.msra.mxu0 %v1659
        %1695 = vmatpush.msra.mxu0 %v1657
        %1696 = vmatpush.msra.mxu0 %v1655
        %1697 = vmatpush.msra.mxu0 %v1653
        %1698 = vmatpush.msra.mxu0 %v1651
        %1699 = vmatpush.msra.mxu0 %v1649
        %1700 = vmatpush.msra.mxu0 %v1647
        %1701 = vmatpush.msra.mxu0 %v1645
        %1702 = vmatpush.msra.mxu0 %v1643
        %1703 = vmatpush.msra.mxu0 %v1641
        %1704 = vmatpush.msra.mxu0 %v1639
        %1705 = vmatpush.msra.mxu0 %v1637
        %1706 = vmatpush.msra.mxu0 %v1635
        %1707 = vmatpush.msra.mxu0 %v1633
        %1708 = vmatmul.f32.gmra.mxu0 %v1631
        %v1709 = vpop.f32.mrf.mxu0
        %v1710 = vadd.f32 %v1687, %v1709
        %1711 = vdwg.mxu0
        %1712 = vmatpush.msra.mxu0 0.0
        %1713 = vmatpush.msra.mxu0 0.0
        %1714 = vmatpush.msra.mxu0 0.0
        %1715 = vmatpush.msra.mxu0 0.0
        %1716 = vmatpush.msra.mxu0 0.0
        %1717 = vmatpush.msra.mxu0 0.0
        %1718 = vmatpush.msra.mxu0 0.0
        %1719 = vmatpush.msra.mxu0 %v1681
        %1720 = vmatpush.msra.mxu0 %v1679
        %1721 = vmatpush.msra.mxu0 %v1677
        %1722 = vmatpush.msra.mxu0 %v1675
        %1723 = vmatpush.msra.mxu0 %v1673
        %1724 = vmatpush.msra.mxu0 %v1671
        %1725 = vmatpush.msra.mxu0 %v1669
        %1726 = vmatpush.msra.mxu0 %v1667
        %1727 = vmatpush.msra.mxu0 %v1665
        %1728 = vmatmul.f32.gmra.mxu0 %v1690
        %v1729 = vpop.f32.mrf.mxu0
        %v1730 = vadd.f32 %v1710, %v1729
        %1731 = vdwg.mxu0
        %1732 = vmatpush.msra.mxu0 %v1664
        %1733 = vmatpush.msra.mxu0 %v1662
        %1734 = vmatpush.msra.mxu0 %v1660
        %1735 = vmatpush.msra.mxu0 %v1658
        %1736 = vmatpush.msra.mxu0 %v1656
        %1737 = vmatpush.msra.mxu0 %v1654
        %1738 = vmatpush.msra.mxu0 %v1652
        %1739 = vmatpush.msra.mxu0 %v1650
        %1740 = vmatpush.msra.mxu0 %v1648
        %1741 = vmatpush.msra.mxu0 %v1646
        %1742 = vmatpush.msra.mxu0 %v1644
        %1743 = vmatpush.msra.mxu0 %v1642
        %1744 = vmatpush.msra.mxu0 %v1640
        %1745 = vmatpush.msra.mxu0 %v1638
        %1746 = vmatpush.msra.mxu0 %v1636
        %1747 = vmatpush.msra.mxu0 %v1634
        %1748 = vmatmul.f32.gmra.mxu0 %v1631
        %v1749 = vpop.f32.mrf.mxu0
        %v1750 = vadd.f32 %v1687, %v1749
        %1751 = vdwg.mxu0
        %1752 = vmatpush.msra.mxu0 0.0
        %1753 = vmatpush.msra.mxu0 0.0
        %1754 = vmatpush.msra.mxu0 0.0
        %1755 = vmatpush.msra.mxu0 0.0
        %1756 = vmatpush.msra.mxu0 0.0
        %1757 = vmatpush.msra.mxu0 0.0
        %1758 = vmatpush.msra.mxu0 0.0
        %1759 = vmatpush.msra.mxu0 %v1682
        %1760 = vmatpush.msra.mxu0 %v1680
        %1761 = vmatpush.msra.mxu0 %v1678
        %1762 = vmatpush.msra.mxu0 %v1676
        %1763 = vmatpush.msra.mxu0 %v1674
        %1764 = vmatpush.msra.mxu0 %v1672
        %1765 = vmatpush.msra.mxu0 %v1670
        %1766 = vmatpush.msra.mxu0 %v1668
        %1767 = vmatpush.msra.mxu0 %v1666
        %1768 = vmatmul.f32.gmra.mxu0 %v1690
        %v1769 = vpop.f32.mrf.mxu0
        %v1770 = vadd.f32 %v1750, %v1769
        %1771 = vdwg.mxu0
        %vm1772 = vcmp.gt.f32.partialorder %v1730, 0.0
        %vm1773 = vcmp.gt.f32.partialorder %v1770, 0.0
        %v1774 = vmin.f32 %v1730, 0.0
        %v1775 = vmin.f32 %v1770, 0.0
        %v1776 = vmul.f32 %v1774, 1.442695
        %v1777 = vpow.pop %v1776
        %v1778 = vmul.f32 %v1775, 1.442695
        %v1779 = vpow.pop %v1778
        %v1780 = vsub.f32 %v1777, 1.0
        %v1781 = vsub.f32 %v1779, 1.0
        %v1782 = vsel %vm1772, %v1730, %v1780
        %v1783 = vsel %vm1773, %v1770, %v1781
        %v1784 = vand.u32 %v191, 3
        %v1785 = vand.u32 %v192, 3
        %v1786 = vshra.s32 %v191, 2
        %v1787 = vshra.s32 %v192, 2
        %vm1788 = vcmp.ge.s32.totalorder %v1784, 1
        %vm1789 = vcmp.ge.s32.totalorder %v1785, 1
        %vm1790 = vcmp.lt.s32.totalorder %v1784, 5
        %vm1791 = vcmp.lt.s32.totalorder %v1785, 5
        %vm1792 = vmand %vm1788, %vm1790
        %vm1793 = vmand %vm1789, %vm1791
        %vm1794 = vcmp.ge.s32.totalorder %v1784, 0
        %vm1795 = vcmp.ge.s32.totalorder %v1785, 0
        %vm1796 = vcmp.lt.s32.totalorder %v1784, 4
        %vm1797 = vcmp.lt.s32.totalorder %v1785, 4
        %vm1798 = vmand %vm1794, %vm1796
        %vm1799 = vmand %vm1795, %vm1797
        %vm1800 = vcmp.ge.s32.totalorder %v1784, 4294967295
        %vm1801 = vcmp.ge.s32.totalorder %v1785, 4294967295
        %vm1802 = vcmp.lt.s32.totalorder %v1784, 3
        %vm1803 = vcmp.lt.s32.totalorder %v1785, 3
        %vm1804 = vmand %vm1800, %vm1802
        %vm1805 = vmand %vm1801, %vm1803
        %vm1806 = vcmp.ge.s32.totalorder %v1786, 1
        %vm1807 = vcmp.ge.s32.totalorder %v1787, 1
        %vm1808 = vcmp.lt.s32.totalorder %v1786, 5
        %vm1809 = vcmp.lt.s32.totalorder %v1787, 5
        %vm1810 = vmand %vm1806, %vm1808
        %vm1811 = vmand %vm1807, %vm1809
        %vm1812 = vcmp.ge.s32.totalorder %v1786, 0
        %vm1813 = vcmp.ge.s32.totalorder %v1787, 0
        %vm1814 = vcmp.lt.s32.totalorder %v1786, 4
        %vm1815 = vcmp.lt.s32.totalorder %v1787, 4
        %vm1816 = vmand %vm1812, %vm1814
        %vm1817 = vmand %vm1813, %vm1815
        %vm1818 = vcmp.ge.s32.totalorder %v1786, 4294967295
        %vm1819 = vcmp.ge.s32.totalorder %v1787, 4294967295
        %vm1820 = vcmp.lt.s32.totalorder %v1786, 3
        %vm1821 = vcmp.lt.s32.totalorder %v1787, 3
        %vm1822 = vmand %vm1818, %vm1820
        %vm1823 = vmand %vm1819, %vm1821
        %1825 = vrot.lane.b32.xlu0 %v1344, 5
        %v1826 = vpop.permute.xlu0 %1825
        %1829 = vrot.lane.b32.xlu0 %v1343, 5
        %v1830 = vpop.permute.xlu0 %1829
        %vm1831 = vcmask 39936
        %v1832 = vsel %vm1831, %v1830, %v1826
        %v1835 = vsel %vm1831, %v1826, %v1830
        %vm1836 = vmand %vm1810, %vm1792
        %vm1837 = vmand %vm1811, %vm1793
        %v1838 = vsel %vm1836, %v1835, 0.0
        %v1839 = vsel %vm1837, %v1832, 0.0
        %1840 = vst [vmem:[#allocation2] sm:$0xff] %v1838
        %1841 = vst [vmem:[#allocation2 + $0x8] sm:$0xff] %v1839
        %1842 = vrot.lane.b32.xlu0 %v1344, 4
        %v1843 = vpop.permute.xlu0 %1842
        %1845 = vrot.lane.b32.xlu0 %v1343, 4
        %v1846 = vpop.permute.xlu0 %1845
        %vm1847 = vcmask 31744
        %v1848 = vsel %vm1847, %v1846, %v1843
        %v1851 = vsel %vm1847, %v1843, %v1846
        %vm1852 = vmand %vm1810, %vm1798
        %vm1853 = vmand %vm1811, %vm1799
        %v1854 = vsel %vm1852, %v1851, 0.0
        %v1855 = vsel %vm1853, %v1848, 0.0
        %1856 = vst [vmem:[#allocation2 + $0x10] sm:$0xff] %v1854
        %1857 = vst [vmem:[#allocation2 + $0x18] sm:$0xff] %v1855
        %1858 = vrot.lane.b32.xlu0 %v1344, 3
        %v1859 = vpop.permute.xlu0 %1858
        %1861 = vrot.lane.b32.xlu0 %v1343, 3
        %v1862 = vpop.permute.xlu0 %1861
        %vm1863 = vcmask 23552
        %v1864 = vsel %vm1863, %v1862, %v1859
        %v1867 = vsel %vm1863, %v1859, %v1862
        %vm1868 = vmand %vm1810, %vm1804
        %vm1869 = vmand %vm1811, %vm1805
        %v1870 = vsel %vm1868, %v1867, 0.0
        %v1871 = vsel %vm1869, %v1864, 0.0
        %1872 = vst [vmem:[#allocation2 + $0x20] sm:$0xff] %v1870
        %1873 = vst [vmem:[#allocation2 + $0x28] sm:$0xff] %v1871
        %1874 = vrot.lane.b32.xlu0 %v1344, 1
        %v1875 = vpop.permute.xlu0 %1874
        %1877 = vrot.lane.b32.xlu0 %v1343, 1
        %v1878 = vpop.permute.xlu0 %1877
        %v1879 = vsel %vm440, %v1878, %v1875
        %v1882 = vsel %vm440, %v1875, %v1878
        %vm1883 = vmand %vm1816, %vm1792
        %vm1884 = vmand %vm1817, %vm1793
        %v1885 = vsel %vm1883, %v1882, 0.0
        %v1886 = vsel %vm1884, %v1879, 0.0
        %1887 = vst [vmem:[#allocation2 + $0x30] sm:$0xff] %v1885
        %1888 = vst [vmem:[#allocation2 + $0x38] sm:$0xff] %v1886
        %vm1889 = vmand %vm1816, %vm1798
        %vm1890 = vmand %vm1817, %vm1799
        %v1891 = vsel %vm1889, %v1343, 0.0
        %v1892 = vsel %vm1890, %v1344, 0.0
        %1893 = vst [vmem:[#allocation2 + $0x40] sm:$0xff] %v1891
        %1894 = vst [vmem:[#allocation2 + $0x48] sm:$0xff] %v1892
        %1895 = vrot.lane.b32.xlu0 %v1343, 127
        %v1896 = vpop.permute.xlu0 %1895
        %1897 = vrot.lane.b32.xlu0 %v1344, 127
        %v1898 = vpop.permute.xlu0 %1897
        %v1899 = vsel %vm461, %v1896, %v1898
        %v1903 = vsel %vm461, %v1898, %v1896
        %vm1904 = vmand %vm1816, %vm1804
        %vm1905 = vmand %vm1817, %vm1805
        %v1906 = vsel %vm1904, %v1899, 0.0
        %v1907 = vsel %vm1905, %v1903, 0.0
        %1908 = vst [vmem:[#allocation2 + $0x50] sm:$0xff] %v1906
        %1909 = vst [vmem:[#allocation2 + $0x58] sm:$0xff] %v1907
        %1910 = vrot.lane.b32.xlu0 %v1343, 125
        %v1911 = vpop.permute.xlu0 %1910
        %1912 = vrot.lane.b32.xlu0 %v1344, 125
        %v1913 = vpop.permute.xlu0 %1912
        %vm1914 = vcmask 1022976
        %v1915 = vsel %vm1914, %v1911, %v1913
        %v1919 = vsel %vm1914, %v1913, %v1911
        %vm1920 = vmand %vm1822, %vm1792
        %vm1921 = vmand %vm1823, %vm1793
        %v1922 = vsel %vm1920, %v1915, 0.0
        %v1923 = vsel %vm1921, %v1919, 0.0
        %1924 = vst [vmem:[#allocation2 + $0x60] sm:$0xff] %v1922
        %1925 = vst [vmem:[#allocation2 + $0x68] sm:$0xff] %v1923
        %1926 = vrot.lane.b32.xlu0 %v1343, 124
        %v1927 = vpop.permute.xlu0 %1926
        %1928 = vrot.lane.b32.xlu0 %v1344, 124
        %v1929 = vpop.permute.xlu0 %1928
        %vm1930 = vcmask 1014784
        %v1931 = vsel %vm1930, %v1927, %v1929
        %v1935 = vsel %vm1930, %v1929, %v1927
        %vm1936 = vmand %vm1822, %vm1798
        %vm1937 = vmand %vm1823, %vm1799
        %v1938 = vsel %vm1936, %v1931, 0.0
        %v1939 = vsel %vm1937, %v1935, 0.0
        %1940 = vst [vmem:[#allocation2 + $0x70] sm:$0xff] %v1938
        %1941 = vst [vmem:[#allocation2 + $0x78] sm:$0xff] %v1939
        %1942 = vrot.lane.b32.xlu0 %v1343, 123
        %v1943 = vpop.permute.xlu0 %1942
        %1944 = vrot.lane.b32.xlu0 %v1344, 123
        %v1945 = vpop.permute.xlu0 %1944
        %vm1946 = vcmask 1006592
        %v1947 = vsel %vm1946, %v1943, %v1945
        %v1951 = vsel %vm1946, %v1945, %v1943
        %vm1952 = vmand %vm1822, %vm1804
        %vm1953 = vmand %vm1823, %vm1805
        %v1954 = vsel %vm1952, %v1947, 0.0
        %v1955 = vsel %vm1953, %v1951, 0.0
        %1956 = vst [vmem:[#allocation2 + $0x80] sm:$0xff] %v1954
        %1957 = vst [vmem:[#allocation2 + $0x88] sm:$0xff] %v1955
        %v1958 = vld [vmem:[%s2 + $0x28] sm:$0xff]
        %v1959 = vld [vmem:[#allocation2] sm:$0xff]
        %v1960 = vld [vmem:[#allocation2 + $0x8] sm:$0xff]
        %v1961 = vld [vmem:[#allocation2 + $0x10] sm:$0xff]
        %v1962 = vld [vmem:[#allocation2 + $0x18] sm:$0xff]
        %v1963 = vld [vmem:[#allocation2 + $0x20] sm:$0xff]
        %v1964 = vld [vmem:[#allocation2 + $0x28] sm:$0xff]
        %v1965 = vld [vmem:[#allocation2 + $0x30] sm:$0xff]
        %v1966 = vld [vmem:[#allocation2 + $0x38] sm:$0xff]
        %v1967 = vld [vmem:[#allocation2 + $0x40] sm:$0xff]
        %v1968 = vld [vmem:[#allocation2 + $0x48] sm:$0xff]
        %v1969 = vld [vmem:[#allocation2 + $0x50] sm:$0xff]
        %v1970 = vld [vmem:[#allocation2 + $0x58] sm:$0xff]
        %v1971 = vld [vmem:[#allocation2 + $0x60] sm:$0xff]
        %v1972 = vld [vmem:[#allocation2 + $0x68] sm:$0xff]
        %v1973 = vld [vmem:[#allocation2 + $0x70] sm:$0xff]
        %v1974 = vld [vmem:[#allocation2 + $0x78] sm:$0xff]
        %v1975 = vld [vmem:[#allocation2 + $0x80] sm:$0xff]
        %v1976 = vld [vmem:[#allocation2 + $0x88] sm:$0xff]
        %v1977 = vld [vmem:[%s2 + $0x30] sm:$0xff]
        %1979 = vset.pattern.permute.xlu0 19
        %1980 = vperm.xlu0 %1979, %v1977
        %v1981 = vpop.permute.xlu0 %1980
        %v1984 = vsel %vm701, %v1958, 0
        %1986 = vmatpush.msra.mxu0 0.0
        %1987 = vmatpush.msra.mxu0 0.0
        %1988 = vmatpush.msra.mxu0 0.0
        %1989 = vmatpush.msra.mxu0 0.0
        %1990 = vmatpush.msra.mxu0 0.0
        %1991 = vmatpush.msra.mxu0 0.0
        %1992 = vmatpush.msra.mxu0 0.0
        %1993 = vmatpush.msra.mxu0 %v1975
        %1994 = vmatpush.msra.mxu0 %v1973
        %1995 = vmatpush.msra.mxu0 %v1971
        %1996 = vmatpush.msra.mxu0 %v1969
        %1997 = vmatpush.msra.mxu0 %v1967
        %1998 = vmatpush.msra.mxu0 %v1965
        %1999 = vmatpush.msra.mxu0 %v1963
        %2000 = vmatpush.msra.mxu0 %v1961
        %2001 = vmatpush.msra.mxu0 %v1959
        %2002 = vmatmul.f32.gmra.mxu0 %v1984
        %v2003 = vpop.f32.mrf.mxu0
        %v2004 = vadd.f32 %v1981, %v2003
        %2005 = vdwg.mxu0
        %2006 = vmatpush.msra.mxu0 0.0
        %2007 = vmatpush.msra.mxu0 0.0
        %2008 = vmatpush.msra.mxu0 0.0
        %2009 = vmatpush.msra.mxu0 0.0
        %2010 = vmatpush.msra.mxu0 0.0
        %2011 = vmatpush.msra.mxu0 0.0
        %2012 = vmatpush.msra.mxu0 0.0
        %2013 = vmatpush.msra.mxu0 %v1976
        %2014 = vmatpush.msra.mxu0 %v1974
        %2015 = vmatpush.msra.mxu0 %v1972
        %2016 = vmatpush.msra.mxu0 %v1970
        %2017 = vmatpush.msra.mxu0 %v1968
        %2018 = vmatpush.msra.mxu0 %v1966
        %2019 = vmatpush.msra.mxu0 %v1964
        %2020 = vmatpush.msra.mxu0 %v1962
        %2021 = vmatpush.msra.mxu0 %v1960
        %2022 = vmatmul.f32.gmra.mxu0 %v1984
        %v2023 = vpop.f32.mrf.mxu0
        %v2024 = vadd.f32 %v1981, %v2023
        %2025 = vdwg.mxu0
        %vm2026 = vcmp.gt.f32.partialorder %v2004, 0.0
        %vm2027 = vcmp.gt.f32.partialorder %v2024, 0.0
        %v2028 = vmin.f32 %v2004, 0.0
        %v2029 = vmin.f32 %v2024, 0.0
        %v2030 = vmul.f32 %v2028, 1.442695
        %v2031 = vpow.pop %v2030
        %v2032 = vmul.f32 %v2029, 1.442695
        %v2033 = vpow.pop %v2032
        %v2034 = vsub.f32 %v2031, 1.0
        %v2035 = vsub.f32 %v2033, 1.0
        %v2036 = vsel %vm2026, %v2004, %v2034
        %v2037 = vsel %vm2027, %v2024, %v2035
        %v2038 = vld [vmem:[#allocation3 + $0x400] sm:$0xff]
        %v2039 = vld [vmem:[#allocation3 + $0x408] sm:$0xff]
        %v2040 = vld [vmem:[#allocation3 + $0x410] sm:$0xff]
        %v2041 = vld [vmem:[#allocation3 + $0x418] sm:$0xff]
        %v2042 = vld [vmem:[#allocation3 + $0x420] sm:$0xff]
        %v2043 = vld [vmem:[#allocation3 + $0x428] sm:$0xff]
        %v2044 = vld [vmem:[#allocation3 + $0x430] sm:$0xff]
        %v2045 = vld [vmem:[#allocation3 + $0x438] sm:$0xff]
        %v2046 = vld [vmem:[#allocation3 + $0x440] sm:$0xff]
        %v2047 = vld [vmem:[#allocation3 + $0x448] sm:$0xff]
        %v2048 = vld [vmem:[#allocation3 + $0x450] sm:$0xff]
        %v2049 = vld [vmem:[#allocation3 + $0x458] sm:$0xff]
        %v2050 = vld [vmem:[#allocation3 + $0x460] sm:$0xff]
        %v2051 = vld [vmem:[#allocation3 + $0x468] sm:$0xff]
        %v2052 = vld [vmem:[#allocation3 + $0x470] sm:$0xff]
        %v2053 = vld [vmem:[#allocation3 + $0x478] sm:$0xff]
        %v2054 = vld [vmem:[#allocation3 + $0x480] sm:$0xff]
        %v2055 = vld [vmem:[#allocation3 + $0x488] sm:$0xff]
        %v2056 = vld [vmem:[#allocation3 + $0x490] sm:$0xff]
        %v2057 = vld [vmem:[#allocation3 + $0x498] sm:$0xff]
        %v2058 = vld [vmem:[#allocation3 + $0x4a0] sm:$0xff]
        %v2059 = vld [vmem:[#allocation3 + $0x4a8] sm:$0xff]
        %v2060 = vld [vmem:[#allocation3 + $0x4b0] sm:$0xff]
        %v2061 = vld [vmem:[#allocation3 + $0x4b8] sm:$0xff]
        %v2062 = vld [vmem:[#allocation3 + $0x4c0] sm:$0xff]
        %v2063 = vld [vmem:[#allocation3 + $0x4c8] sm:$0xff]
        %v2064 = vld [vmem:[#allocation3 + $0x4d0] sm:$0xff]
        %v2065 = vld [vmem:[#allocation3 + $0x4d8] sm:$0xff]
        %v2066 = vld [vmem:[#allocation3 + $0x4e0] sm:$0xff]
        %v2067 = vld [vmem:[#allocation3 + $0x4e8] sm:$0xff]
        %v2068 = vld [vmem:[#allocation3 + $0x4f0] sm:$0xff]
        %v2069 = vld [vmem:[#allocation3 + $0x4f8] sm:$0xff]
        %v2070 = vld [vmem:[#allocation3 + $0x500] sm:$0xff]
        %v2071 = vld [vmem:[#allocation3 + $0x508] sm:$0xff]
        %v2072 = vld [vmem:[#allocation3 + $0x510] sm:$0xff]
        %v2073 = vld [vmem:[#allocation3 + $0x518] sm:$0xff]
        %v2074 = vld [vmem:[#allocation3 + $0x520] sm:$0xff]
        %v2075 = vld [vmem:[#allocation3 + $0x528] sm:$0xff]
        %v2076 = vld [vmem:[#allocation3 + $0x530] sm:$0xff]
        %v2077 = vld [vmem:[#allocation3 + $0x538] sm:$0xff]
        %v2078 = vld [vmem:[#allocation3 + $0x540] sm:$0xff]
        %v2079 = vld [vmem:[#allocation3 + $0x548] sm:$0xff]
        %v2080 = vld [vmem:[#allocation3 + $0x550] sm:$0xff]
        %v2081 = vld [vmem:[#allocation3 + $0x558] sm:$0xff]
        %v2082 = vld [vmem:[#allocation3 + $0x560] sm:$0xff]
        %v2083 = vld [vmem:[#allocation3 + $0x568] sm:$0xff]
        %v2084 = vld [vmem:[#allocation3 + $0x570] sm:$0xff]
        %v2085 = vld [vmem:[#allocation3 + $0x578] sm:$0xff]
        %v2086 = vld [vmem:[#allocation3 + $0x580] sm:$0xff]
        %v2087 = vld [vmem:[#allocation3 + $0x588] sm:$0xff]
        %v2088 = vld [vmem:[#allocation3 + $0x590] sm:$0xff]
        %v2089 = vld [vmem:[#allocation3 + $0x598] sm:$0xff]
        %v2090 = vld [vmem:[#allocation3 + $0x5a0] sm:$0xff]
        %v2091 = vld [vmem:[#allocation3 + $0x5a8] sm:$0xff]
        %v2092 = vld [vmem:[#allocation3 + $0x5b0] sm:$0xff]
        %v2093 = vld [vmem:[#allocation3 + $0x5b8] sm:$0xff]
        %v2094 = vld [vmem:[#allocation3 + $0x5c0] sm:$0xff]
        %v2095 = vld [vmem:[#allocation3 + $0x5c8] sm:$0xff]
        %v2096 = vld [vmem:[#allocation3 + $0x5d0] sm:$0xff]
        %v2097 = vld [vmem:[#allocation3 + $0x5d8] sm:$0xff]
        %v2098 = vld [vmem:[#allocation3 + $0x5e0] sm:$0xff]
        %v2099 = vld [vmem:[#allocation3 + $0x5e8] sm:$0xff]
        %v2100 = vld [vmem:[#allocation3 + $0x5f0] sm:$0xff]
        %v2101 = vld [vmem:[#allocation3 + $0x5f8] sm:$0xff]
        %2102 = vmatpush.msra.mxu0 %v2068
        %2103 = vmatpush.msra.mxu0 %v2066
        %2104 = vmatpush.msra.mxu0 %v2064
        %2105 = vmatpush.msra.mxu0 %v2062
        %2106 = vmatpush.msra.mxu0 %v2060
        %2107 = vmatpush.msra.mxu0 %v2058
        %2108 = vmatpush.msra.mxu0 %v2056
        %2109 = vmatpush.msra.mxu0 %v2054
        %2110 = vmatpush.msra.mxu0 %v2052
        %2111 = vmatpush.msra.mxu0 %v2050
        %2112 = vmatpush.msra.mxu0 %v2048
        %2113 = vmatpush.msra.mxu0 %v2046
        %2114 = vmatpush.msra.mxu0 %v2044
        %2115 = vmatpush.msra.mxu0 %v2042
        %2116 = vmatpush.msra.mxu0 %v2040
        %2117 = vmatpush.msra.mxu0 %v2038
        %2118 = vmatmul.f32.gmra.mxu0 %v2036
        %v2119 = vpop.f32.mrf.mxu0
        %v2120 = vadd.f32 0.0, %v2119
        %2121 = vdwg.mxu0
        %2122 = vmatpush.msra.mxu0 %v2100
        %2123 = vmatpush.msra.mxu0 %v2098
        %2124 = vmatpush.msra.mxu0 %v2096
        %2125 = vmatpush.msra.mxu0 %v2094
        %2126 = vmatpush.msra.mxu0 %v2092
        %2127 = vmatpush.msra.mxu0 %v2090
        %2128 = vmatpush.msra.mxu0 %v2088
        %2129 = vmatpush.msra.mxu0 %v2086
        %2130 = vmatpush.msra.mxu0 %v2084
        %2131 = vmatpush.msra.mxu0 %v2082
        %2132 = vmatpush.msra.mxu0 %v2080
        %2133 = vmatpush.msra.mxu0 %v2078
        %2134 = vmatpush.msra.mxu0 %v2076
        %2135 = vmatpush.msra.mxu0 %v2074
        %2136 = vmatpush.msra.mxu0 %v2072
        %2137 = vmatpush.msra.mxu0 %v2070
        %2138 = vmatmul.f32.gmra.mxu0 %v2037
        %v2139 = vpop.f32.mrf.mxu0
        %v2140 = vadd.f32 %v2120, %v2139
        %2141 = vdwg.mxu0
        %2142 = vmatpush.msra.mxu0 %v2069
        %2143 = vmatpush.msra.mxu0 %v2067
        %2144 = vmatpush.msra.mxu0 %v2065
        %2145 = vmatpush.msra.mxu0 %v2063
        %2146 = vmatpush.msra.mxu0 %v2061
        %2147 = vmatpush.msra.mxu0 %v2059
        %2148 = vmatpush.msra.mxu0 %v2057
        %2149 = vmatpush.msra.mxu0 %v2055
        %2150 = vmatpush.msra.mxu0 %v2053
        %2151 = vmatpush.msra.mxu0 %v2051
        %2152 = vmatpush.msra.mxu0 %v2049
        %2153 = vmatpush.msra.mxu0 %v2047
        %2154 = vmatpush.msra.mxu0 %v2045
        %2155 = vmatpush.msra.mxu0 %v2043
        %2156 = vmatpush.msra.mxu0 %v2041
        %2157 = vmatpush.msra.mxu0 %v2039
        %2158 = vmatmul.f32.gmra.mxu0 %v2036
        %v2159 = vpop.f32.mrf.mxu0
        %v2160 = vadd.f32 0.0, %v2159
        %2161 = vdwg.mxu0
        %2162 = vmatpush.msra.mxu0 %v2101
        %2163 = vmatpush.msra.mxu0 %v2099
        %2164 = vmatpush.msra.mxu0 %v2097
        %2165 = vmatpush.msra.mxu0 %v2095
        %2166 = vmatpush.msra.mxu0 %v2093
        %2167 = vmatpush.msra.mxu0 %v2091
        %2168 = vmatpush.msra.mxu0 %v2089
        %2169 = vmatpush.msra.mxu0 %v2087
        %2170 = vmatpush.msra.mxu0 %v2085
        %2171 = vmatpush.msra.mxu0 %v2083
        %2172 = vmatpush.msra.mxu0 %v2081
        %2173 = vmatpush.msra.mxu0 %v2079
        %2174 = vmatpush.msra.mxu0 %v2077
        %2175 = vmatpush.msra.mxu0 %v2075
        %2176 = vmatpush.msra.mxu0 %v2073
        %2177 = vmatpush.msra.mxu0 %v2071
        %2178 = vmatmul.f32.gmra.mxu0 %v2037
        %v2179 = vpop.f32.mrf.mxu0
        %v2180 = vadd.f32 %v2160, %v2179
        %2181 = vdwg.mxu0
        %v2182 = vadd.f32 %v1782, %v2140
        %v2183 = vadd.f32 %v1783, %v2180
        %v2184 = vld [vmem:[#allocation3 + $0x600] sm:$0xff]
        %v2185 = vld [vmem:[#allocation3 + $0x608] sm:$0xff]
        %v2186 = vld [vmem:[#allocation3 + $0x610] sm:$0xff]
        %v2187 = vld [vmem:[#allocation3 + $0x618] sm:$0xff]
        %v2188 = vld [vmem:[#allocation3 + $0x620] sm:$0xff]
        %v2189 = vld [vmem:[#allocation3 + $0x628] sm:$0xff]
        %v2190 = vld [vmem:[#allocation3 + $0x630] sm:$0xff]
        %v2191 = vld [vmem:[#allocation3 + $0x638] sm:$0xff]
        %v2192 = vld [vmem:[#allocation3 + $0x640] sm:$0xff]
        %v2193 = vld [vmem:[#allocation3 + $0x648] sm:$0xff]
        %v2194 = vld [vmem:[#allocation3 + $0x650] sm:$0xff]
        %v2195 = vld [vmem:[#allocation3 + $0x658] sm:$0xff]
        %v2196 = vld [vmem:[#allocation3 + $0x660] sm:$0xff]
        %v2197 = vld [vmem:[#allocation3 + $0x668] sm:$0xff]
        %v2198 = vld [vmem:[#allocation3 + $0x670] sm:$0xff]
        %v2199 = vld [vmem:[#allocation3 + $0x678] sm:$0xff]
        %v2200 = vld [vmem:[#allocation3 + $0x680] sm:$0xff]
        %v2201 = vld [vmem:[#allocation3 + $0x688] sm:$0xff]
        %v2202 = vld [vmem:[#allocation3 + $0x690] sm:$0xff]
        %v2203 = vld [vmem:[#allocation3 + $0x698] sm:$0xff]
        %v2204 = vld [vmem:[#allocation3 + $0x6a0] sm:$0xff]
        %v2205 = vld [vmem:[#allocation3 + $0x6a8] sm:$0xff]
        %v2206 = vld [vmem:[#allocation3 + $0x6b0] sm:$0xff]
        %v2207 = vld [vmem:[#allocation3 + $0x6b8] sm:$0xff]
        %v2208 = vld [vmem:[#allocation3 + $0x6c0] sm:$0xff]
        %v2209 = vld [vmem:[#allocation3 + $0x6c8] sm:$0xff]
        %v2210 = vld [vmem:[#allocation3 + $0x6d0] sm:$0xff]
        %v2211 = vld [vmem:[#allocation3 + $0x6d8] sm:$0xff]
        %v2212 = vld [vmem:[#allocation3 + $0x6e0] sm:$0xff]
        %v2213 = vld [vmem:[#allocation3 + $0x6e8] sm:$0xff]
        %v2214 = vld [vmem:[#allocation3 + $0x6f0] sm:$0xff]
        %v2215 = vld [vmem:[#allocation3 + $0x6f8] sm:$0xff]
        %v2216 = vld [vmem:[#allocation3 + $0x700] sm:$0xff]
        %v2217 = vld [vmem:[#allocation3 + $0x708] sm:$0xff]
        %v2218 = vld [vmem:[#allocation3 + $0x710] sm:$0xff]
        %v2219 = vld [vmem:[#allocation3 + $0x718] sm:$0xff]
        %v2220 = vld [vmem:[#allocation3 + $0x720] sm:$0xff]
        %v2221 = vld [vmem:[#allocation3 + $0x728] sm:$0xff]
        %v2222 = vld [vmem:[#allocation3 + $0x730] sm:$0xff]
        %v2223 = vld [vmem:[#allocation3 + $0x738] sm:$0xff]
        %v2224 = vld [vmem:[#allocation3 + $0x740] sm:$0xff]
        %v2225 = vld [vmem:[#allocation3 + $0x748] sm:$0xff]
        %v2226 = vld [vmem:[#allocation3 + $0x750] sm:$0xff]
        %v2227 = vld [vmem:[#allocation3 + $0x758] sm:$0xff]
        %v2228 = vld [vmem:[#allocation3 + $0x760] sm:$0xff]
        %v2229 = vld [vmem:[#allocation3 + $0x768] sm:$0xff]
        %v2230 = vld [vmem:[#allocation3 + $0x770] sm:$0xff]
        %v2231 = vld [vmem:[#allocation3 + $0x778] sm:$0xff]
        %v2232 = vld [vmem:[#allocation3 + $0x780] sm:$0xff]
        %v2233 = vld [vmem:[#allocation3 + $0x788] sm:$0xff]
        %v2234 = vld [vmem:[#allocation3 + $0x790] sm:$0xff]
        %v2235 = vld [vmem:[#allocation3 + $0x798] sm:$0xff]
        %v2236 = vld [vmem:[#allocation3 + $0x7a0] sm:$0xff]
        %v2237 = vld [vmem:[#allocation3 + $0x7a8] sm:$0xff]
        %v2238 = vld [vmem:[#allocation3 + $0x7b0] sm:$0xff]
        %v2239 = vld [vmem:[#allocation3 + $0x7b8] sm:$0xff]
        %v2240 = vld [vmem:[#allocation3 + $0x7c0] sm:$0xff]
        %v2241 = vld [vmem:[#allocation3 + $0x7c8] sm:$0xff]
        %v2242 = vld [vmem:[#allocation3 + $0x7d0] sm:$0xff]
        %v2243 = vld [vmem:[#allocation3 + $0x7d8] sm:$0xff]
        %v2244 = vld [vmem:[#allocation3 + $0x7e0] sm:$0xff]
        %v2245 = vld [vmem:[#allocation3 + $0x7e8] sm:$0xff]
        %v2246 = vld [vmem:[#allocation3 + $0x7f0] sm:$0xff]
        %v2247 = vld [vmem:[#allocation3 + $0x7f8] sm:$0xff]
        %2248 = vmatpush.msra.mxu0 %v2214
        %2249 = vmatpush.msra.mxu0 %v2212
        %2250 = vmatpush.msra.mxu0 %v2210
        %2251 = vmatpush.msra.mxu0 %v2208
        %2252 = vmatpush.msra.mxu0 %v2206
        %2253 = vmatpush.msra.mxu0 %v2204
        %2254 = vmatpush.msra.mxu0 %v2202
        %2255 = vmatpush.msra.mxu0 %v2200
        %2256 = vmatpush.msra.mxu0 %v2198
        %2257 = vmatpush.msra.mxu0 %v2196
        %2258 = vmatpush.msra.mxu0 %v2194
        %2259 = vmatpush.msra.mxu0 %v2192
        %2260 = vmatpush.msra.mxu0 %v2190
        %2261 = vmatpush.msra.mxu0 %v2188
        %2262 = vmatpush.msra.mxu0 %v2186
        %2263 = vmatpush.msra.mxu0 %v2184
        %2264 = vmatmul.f32.gmra.mxu0 %v2182
        %v2265 = vpop.f32.mrf.mxu0
        %v2266 = vadd.f32 0.0, %v2265
        %2267 = vdwg.mxu0
        %2268 = vmatpush.msra.mxu0 %v2246
        %2269 = vmatpush.msra.mxu0 %v2244
        %2270 = vmatpush.msra.mxu0 %v2242
        %2271 = vmatpush.msra.mxu0 %v2240
        %2272 = vmatpush.msra.mxu0 %v2238
        %2273 = vmatpush.msra.mxu0 %v2236
        %2274 = vmatpush.msra.mxu0 %v2234
        %2275 = vmatpush.msra.mxu0 %v2232
        %2276 = vmatpush.msra.mxu0 %v2230
        %2277 = vmatpush.msra.mxu0 %v2228
        %2278 = vmatpush.msra.mxu0 %v2226
        %2279 = vmatpush.msra.mxu0 %v2224
        %2280 = vmatpush.msra.mxu0 %v2222
        %2281 = vmatpush.msra.mxu0 %v2220
        %2282 = vmatpush.msra.mxu0 %v2218
        %2283 = vmatpush.msra.mxu0 %v2216
        %2284 = vmatmul.f32.gmra.mxu0 %v2183
        %v2285 = vpop.f32.mrf.mxu0
        %v2286 = vadd.f32 %v2266, %v2285
        %2287 = vdwg.mxu0
        %2288 = vmatpush.msra.mxu0 %v2215
        %2289 = vmatpush.msra.mxu0 %v2213
        %2290 = vmatpush.msra.mxu0 %v2211
        %2291 = vmatpush.msra.mxu0 %v2209
        %2292 = vmatpush.msra.mxu0 %v2207
        %2293 = vmatpush.msra.mxu0 %v2205
        %2294 = vmatpush.msra.mxu0 %v2203
        %2295 = vmatpush.msra.mxu0 %v2201
        %2296 = vmatpush.msra.mxu0 %v2199
        %2297 = vmatpush.msra.mxu0 %v2197
        %2298 = vmatpush.msra.mxu0 %v2195
        %2299 = vmatpush.msra.mxu0 %v2193
        %2300 = vmatpush.msra.mxu0 %v2191
        %2301 = vmatpush.msra.mxu0 %v2189
        %2302 = vmatpush.msra.mxu0 %v2187
        %2303 = vmatpush.msra.mxu0 %v2185
        %2304 = vmatmul.f32.gmra.mxu0 %v2182
        %v2305 = vpop.f32.mrf.mxu0
        %v2306 = vadd.f32 0.0, %v2305
        %2307 = vdwg.mxu0
        %2308 = vmatpush.msra.mxu0 %v2247
        %2309 = vmatpush.msra.mxu0 %v2245
        %2310 = vmatpush.msra.mxu0 %v2243
        %2311 = vmatpush.msra.mxu0 %v2241
        %2312 = vmatpush.msra.mxu0 %v2239
        %2313 = vmatpush.msra.mxu0 %v2237
        %2314 = vmatpush.msra.mxu0 %v2235
        %2315 = vmatpush.msra.mxu0 %v2233
        %2316 = vmatpush.msra.mxu0 %v2231
        %2317 = vmatpush.msra.mxu0 %v2229
        %2318 = vmatpush.msra.mxu0 %v2227
        %2319 = vmatpush.msra.mxu0 %v2225
        %2320 = vmatpush.msra.mxu0 %v2223
        %2321 = vmatpush.msra.mxu0 %v2221
        %2322 = vmatpush.msra.mxu0 %v2219
        %2323 = vmatpush.msra.mxu0 %v2217
        %2324 = vmatmul.f32.gmra.mxu0 %v2183
        %v2325 = vpop.f32.mrf.mxu0
        %v2326 = vadd.f32 %v2306, %v2325
        %2327 = vdwg.mxu0
        %2328 = vset.pattern.permute.xlu0 20
        %2329 = vperm.xlu0 %2328, %v1977
        %v2330 = vpop.permute.xlu0 %2329
        %v2332 = vsel %vm1010, %v1977, 0
        %2334 = vmatpush.msra.mxu0 0.0
        %2335 = vmatpush.msra.mxu0 0.0
        %2336 = vmatpush.msra.mxu0 0.0
        %2337 = vmatpush.msra.mxu0 0.0
        %2338 = vmatpush.msra.mxu0 0.0
        %2339 = vmatpush.msra.mxu0 0.0
        %2340 = vmatpush.msra.mxu0 0.0
        %2341 = vmatpush.msra.mxu0 0.0
        %2342 = vmatpush.msra.mxu0 0.0
        %2343 = vmatpush.msra.mxu0 0.0
        %2344 = vmatpush.msra.mxu0 0.0
        %2345 = vmatpush.msra.mxu0 0.0
        %2346 = vmatpush.msra.mxu0 0.0
        %2347 = vmatpush.msra.mxu0 0.0
        %2348 = vmatpush.msra.mxu0 0.0
        %2349 = vmatpush.msra.mxu0 %v188
        %2350 = vmatmul.f32.gmra.mxu0 %v2332
        %v2351 = vpop.f32.mrf.mxu0
        %v2352 = vadd.f32 %v2330, %v2351
        %2353 = vdwg.mxu0
        %2354 = vmatpush.msra.mxu0 0.0
        %2355 = vmatpush.msra.mxu0 0.0
        %2356 = vmatpush.msra.mxu0 0.0
        %2357 = vmatpush.msra.mxu0 0.0
        %2358 = vmatpush.msra.mxu0 0.0
        %2359 = vmatpush.msra.mxu0 0.0
        %2360 = vmatpush.msra.mxu0 0.0
        %2361 = vmatpush.msra.mxu0 0.0
        %2362 = vmatpush.msra.mxu0 0.0
        %2363 = vmatpush.msra.mxu0 0.0
        %2364 = vmatpush.msra.mxu0 0.0
        %2365 = vmatpush.msra.mxu0 0.0
        %2366 = vmatpush.msra.mxu0 0.0
        %2367 = vmatpush.msra.mxu0 0.0
        %2368 = vmatpush.msra.mxu0 0.0
        %2369 = vmatpush.msra.mxu0 %v189
        %2370 = vmatmul.f32.gmra.mxu0 %v2332
        %v2371 = vpop.f32.mrf.mxu0
        %v2372 = vadd.f32 %v2330, %v2371
        %2373 = vdwg.mxu0
        %vm2374 = vcmp.gt.f32.partialorder %v2352, 0.0
        %vm2375 = vcmp.gt.f32.partialorder %v2372, 0.0
        %v2376 = vmin.f32 %v2352, 0.0
        %v2377 = vmin.f32 %v2372, 0.0
        %v2378 = vmul.f32 %v2376, 1.442695
        %v2379 = vpow.pop %v2378
        %v2380 = vmul.f32 %v2377, 1.442695
        %v2381 = vpow.pop %v2380
        %v2382 = vsub.f32 %v2379, 1.0
        %v2383 = vsub.f32 %v2381, 1.0
        %v2384 = vsel %vm2374, %v2352, %v2382
        %v2385 = vsel %vm2375, %v2372, %v2383
        %2386 = vmatpush.msra.mxu0 0.00390625
        %2387 = vmatpush.msra.mxu0 0.00390625
        %2388 = vmatpush.msra.mxu0 0.00390625
        %2389 = vmatpush.msra.mxu0 0.00390625
        %2390 = vmatpush.msra.mxu0 0.00390625
        %2391 = vmatpush.msra.mxu0 0.00390625
        %2392 = vmatpush.msra.mxu0 0.00390625
        %2393 = vmatpush.msra.mxu0 0.00390625
        %2394 = vmatpush.msra.mxu0 0.00390625
        %2395 = vmatpush.msra.mxu0 0.00390625
        %2396 = vmatpush.msra.mxu0 0.00390625
        %2397 = vmatpush.msra.mxu0 0.00390625
        %2398 = vmatpush.msra.mxu0 0.00390625
        %2399 = vmatpush.msra.mxu0 0.00390625
        %2400 = vmatpush.msra.mxu0 0.00390625
        %2401 = vmatpush.msra.mxu0 0.00390625
        %2402 = vmatmul.f32.gmra.mxu0 %v188
        %v2403 = vpop.f32.mrf.mxu0
        %v2404 = vadd.f32 0.0, %v2403
        %2405 = vdwg.mxu0
        %2406 = vmatpush.msra.mxu0 0.00390625
        %2407 = vmatpush.msra.mxu0 0.00390625
        %2408 = vmatpush.msra.mxu0 0.00390625
        %2409 = vmatpush.msra.mxu0 0.00390625
        %2410 = vmatpush.msra.mxu0 0.00390625
        %2411 = vmatpush.msra.mxu0 0.00390625
        %2412 = vmatpush.msra.mxu0 0.00390625
        %2413 = vmatpush.msra.mxu0 0.00390625
        %2414 = vmatpush.msra.mxu0 0.00390625
        %2415 = vmatpush.msra.mxu0 0.00390625
        %2416 = vmatpush.msra.mxu0 0.00390625
        %2417 = vmatpush.msra.mxu0 0.00390625
        %2418 = vmatpush.msra.mxu0 0.00390625
        %2419 = vmatpush.msra.mxu0 0.00390625
        %2420 = vmatpush.msra.mxu0 0.00390625
        %2421 = vmatpush.msra.mxu0 0.00390625
        %2422 = vmatmul.f32.gmra.mxu0 %v189
        %v2423 = vpop.f32.mrf.mxu0
        %v2424 = vadd.f32 %v2404, %v2423
        %2425 = vdwg.mxu0
        %2426 = vrot.lane.b32.xlu0 %v1977, 120
        %v2427 = vpop.permute.xlu0 %2426
        %v2428 = vsel %vm1010, %v2427, 0
        %2430 = vmatpush.msra.mxu0 0.0
        %2431 = vmatpush.msra.mxu0 0.0
        %2432 = vmatpush.msra.mxu0 0.0
        %2433 = vmatpush.msra.mxu0 0.0
        %2434 = vmatpush.msra.mxu0 0.0
        %2435 = vmatpush.msra.mxu0 0.0
        %2436 = vmatpush.msra.mxu0 0.0
        %2437 = vmatpush.msra.mxu0 0.0
        %2438 = vmatpush.msra.mxu0 0.0
        %2439 = vmatpush.msra.mxu0 0.0
        %2440 = vmatpush.msra.mxu0 0.0
        %2441 = vmatpush.msra.mxu0 0.0
        %2442 = vmatpush.msra.mxu0 0.0
        %2443 = vmatpush.msra.mxu0 0.0
        %2444 = vmatpush.msra.mxu0 0.0
        %2445 = vmatpush.msra.mxu0 %v2424
        %2446 = vmatmul.f32.gmra.mxu0 %v2428
        %v2447 = vpop.f32.mrf.mxu0
        %v2448 = vadd.f32 0.0, %v2447
        %2449 = vdwg.mxu0
        %v2450 = vmul.f32 %v2384, %v2286
        %v2451 = vmul.f32 %v2385, %v2326
        %2453 = vset.pattern.permute.xlu0 0
        %2454 = vperm.xlu0 %2453, %v2448
        %v2455 = vpop.permute.xlu0 %2454
        %v2457 = vadd.f32 %v2450, %v2455
        %v2458 = vadd.f32 %v2451, %v2455
        %2459 = vst [vmem:[%s187] sm:$0xff] %v2457
        %2460 = vst [vmem:[%s187 + $0x8] sm:$0xff] %v2458
        %p2461 = scmp.lt.s32.totalorder %s15, 1
        %s2462 = scalar_select %p2461, %s15, 1
        %s2463 = smul.addr %s2462, 2
        %s2464 = smul.addr %s2463, 8
        %s2465 = scalar_lea.vmem %s3, %s2464
        // Predicated region
        $region37: #{fpav2_forward.1} parent=31 // pred_check
          %p2466 = pneg %p101
        $region38: #{fpav2_forward.1} parent=31 // pred_check_branch
          %2468 = sbr.rel (%p2466) target = $region40
        $region39: #{fpav2_forward.1} parent=31 // pred_region
          _
        $region40: #{fpav2_forward.1} parent=31 // pred_fallthru
          _
      $region32: #{fpav2_forward.1} parent=5 // pred_fallthru
        _
      %p2469 = scmp.le.s32.totalorder 2, %s10
      // Predicated region
      $region41: #{fpav2_forward.1} parent=5 // pred_check
        %p2470 = pneg %p2469
      $region42: #{fpav2_forward.1} parent=5 // pred_check_branch
        %2472 = sbr.rel (%p2470) target = $region44
      $region43: #{fpav2_forward.1} parent=5 // pred_region
        %s2473 = ssub.s32 %s10, 2
        // Predicated region
        $region45: #{fpav2_forward.1} parent=43 // pred_check
          %p2474 = pneg %p107
        $region46: #{fpav2_forward.1} parent=43 // pred_check_branch
          %2476 = sbr.rel (%p2474) target = $region48
        $region47: #{fpav2_forward.1} parent=43 // pred_region
          %p2477 = scmp.lt.s32.totalorder %s16, 1
          %s2478 = scalar_select %p2477, %s16, 1
          %s2479 = smul.addr %s2478, 2
          %s2480 = smul.addr %s2479, 8
          %s2481 = scalar_lea.vmem %s3, %s2480
        $region48: #{fpav2_forward.1} parent=43 // pred_fallthru
          _
      $region44: #{fpav2_forward.1} parent=5 // pred_fallthru
        _
    $region6: #{fpav2_forward.1} parent=1 // loop_footer
      %s14 = sadd.s32 1, %s10
    $region7: #{fpav2_forward.1} parent=1 // loop_footer_branch
      %9 = sbr.rel target = $region3
    $region8: #{fpav2_forward.1} parent=1 // loop_exit
      _
    %2482 = vsyncpa [#allocation4], 1
    %s2483 = scalar_lea.sflag [#allocation4], 1
    %2484 = vsyncpa %s2483, 1

</llo_original>
